<compile_context>
chip_gen: v7x
topology: tpu7x:2x2x1
jax: 0.10.0
libtpu: 0.0.40
codegen_flags: <defaults>
</compile_context>

<pallas_src>
import jax
import jax.numpy as jnp
from jax.experimental import pallas as pl
from jax.experimental.pallas import tpu as pltpu

# ---- "Config" (small, synthetic) -------------------------------------------
VOCAB = 50        # rows of pretrained_vec
EMBED = 32        # Config.embeding_size
HIDDEN = 32       # Config.hidden_size
LAYERS = 2        # Config.num_layers
N_CLASS = 2       # Config.n_class
BIDIR = True      # Config.bidirection (this fused kernel assumes True)
BATCH = 2
SEQ = 8
NDIR = 2 if BIDIR else 1
GATES = 8 * HIDDEN          # fused gate width: 2 dirs x 4 gates x H = 256 lanes
BP = 8                      # padded batch rows (one sublane tile)


# ---- Packed-weight slab layout (all row offsets are multiples of 8) ---------
def _slab_layout():
    offs = {}
    r = 0
    for l in range(LAYERS):
        d_in = EMBED if l == 0 else 2 * HIDDEN
        offs[("wih", l)] = (r, d_in);       r += d_in          # (d_in, GATES)
        offs[("whh", l)] = (r, 2 * HIDDEN); r += 2 * HIDDEN    # block-diag (2H, GATES)
        offs[("b", l)] = (r, 1);            r += 8             # bias row (+7 pad rows)
    offs["wdec"] = (r, 4 * HIDDEN);         r += 4 * HIDDEN    # folded w1@w2 (4H, GATES)
    offs["bdec"] = (r, 1);                  r += 8
    return offs, r


SLAB_LAYOUT, SLAB_ROWS = _slab_layout()


def _fuse_dir_cols(w_f, w_b):
    """Interleave per-direction gate column blocks: [i_f i_b f_f f_b g_f g_b o_f o_b]."""
    H = HIDDEN
    blocks = []
    for g in range(4):
        blocks.append(w_f[:, g * H:(g + 1) * H])
        blocks.append(w_b[:, g * H:(g + 1) * H])
    return jnp.concatenate(blocks, axis=1)


def _pad_block(a, rows, cols):
    return jnp.zeros((rows, cols), jnp.float32).at[:a.shape[0], :a.shape[1]].set(a)


def pack_params(params):
    """Pack embedding (padded) and all LSTM/decoder weights into two arrays."""
    H = HIDDEN
    pieces = []
    for l in range(LAYERS):
        wih_f, whh_f, b_f = params["lstm"][(l, 0)]
        wih_b, whh_b, b_b = params["lstm"][(l, 1)]
        pieces.append(_fuse_dir_cols(wih_f, wih_b))                       # (d_in, GATES)
        pieces.append(jnp.concatenate(                                     # block-diag Whh
            [_fuse_dir_cols(whh_f, jnp.zeros_like(whh_b)),
             _fuse_dir_cols(jnp.zeros_like(whh_f), whh_b)], axis=0))       # (2H, GATES)
        pieces.append(_pad_block(_fuse_dir_cols(b_f, b_b), 8, GATES))      # (8, GATES)
    # Folded decoder (no nonlinearity between decoder1 and decoder2).
    wdec = params["w1"] @ params["w2"]                   # (4H, n_class)
    bdec = params["b1"] @ params["w2"] + params["b2"]    # (1, n_class)
    pieces.append(_pad_block(wdec, 4 * H, GATES))
    pieces.append(_pad_block(bdec, 8, GATES))
    slab = jnp.concatenate(pieces, axis=0)
    assert slab.shape == (SLAB_ROWS, GATES)
    vocab_pad = ((VOCAB + 7) // 8) * 8
    emb_pad = _pad_block(params["embedding"], vocab_pad, EMBED)
    return emb_pad, slab


# ---- The single fused Pallas kernel -----------------------------------------
def fused_lstm_kernel(tok_ref, emb_ref, slab_ref, out_ref, x_buf, gx_buf):
    B = out_ref.shape[0]
    T = tok_ref.shape[0] // B
    H = HIDDEN
    G = GATES

    # ---- Prologue: embedding gather + time-major padded layout --------------
    x_buf[...] = jnp.zeros(x_buf.shape, x_buf.dtype)
    for t in range(T):
        for b in range(B):
            tok = tok_ref[b * T + t]                     # SMEM scalar read
            r = t * BP + b
            x_buf[r:r + 1, :] = emb_ref[pl.ds(tok, 1), :]

    # ---- Hoisted loop-invariant lane constants -------------------------------
    lane = jax.lax.broadcasted_iota(jnp.int32, (BP, G), 1)
    is_g = (lane >= 4 * H) & (lane < 6 * H)              # tanh ('g') gate lanes
    s_vec = jnp.where(is_g, 1.0, 0.5).astype(jnp.float32)   # sigmoid(x)=.5+.5*tanh(x/2)
    off_vec = jnp.where(is_g, 0.0, 0.5).astype(jnp.float32)
    fwd_lane = (lane % (2 * H)) < H                      # forward-direction gate lanes
    half = jax.lax.broadcasted_iota(jnp.int32, (BP, 2 * H), 1) < H   # fwd half of h

    def run_layer(x, layer):
        wih_off, d_in = SLAB_LAYOUT[("wih", layer)]
        whh_off, _ = SLAB_LAYOUT[("whh", layer)]
        b_off, _ = SLAB_LAYOUT[("b", layer)]

        # Hoisted input projection (+bias) for both directions at once; staged
        # through VMEM so it is not live in vregs across the recurrence.
        wih = slab_ref[wih_off:wih_off + d_in, :]        # (d_in, G)
        bias = slab_ref[b_off:b_off + 1, :]              # (1, G)
        gx_buf[...] = jnp.dot(x, wih, preferred_element_type=jnp.float32) + bias
        whh = slab_ref[whh_off:whh_off + 2 * H, :]       # block-diag (2H, G)

        h = jnp.zeros((BP, 2 * H), jnp.float32)          # [h_fwd | h_bwd]
        c = jnp.zeros((BP, 2 * H), jnp.float32)
        hc = [None] * T
        for t in range(T):
            tb = T - 1 - t
            # fwd lanes take time t, bwd lanes take time T-1-t (lane select, no rotate)
            gx_sel = jnp.where(fwd_lane,
                               gx_buf[t * BP:(t + 1) * BP, :],
                               gx_buf[tb * BP:(tb + 1) * BP, :])
            # (v7x: accumulate-into form lets Mosaic use MRB accumulation)
            gates = jnp.dot(h, whh, preferred_element_type=jnp.float32) + gx_sel
            act = s_vec * jnp.tanh(s_vec * gates) + off_vec       # single EUP tanh
            i_g = act[:, 0:2 * H]
            f_g = act[:, 2 * H:4 * H]
            g_g = act[:, 4 * H:6 * H]
            o_g = act[:, 6 * H:8 * H]
            c = f_g * c + i_g * g_g
            h = o_g * jnp.tanh(c)
            hc[t] = h                                    # [h_f(t) | h_b(T-1-t)]
        return hc

    x = x_buf[...]
    hc = None
    for layer in range(LAYERS):
        hc = run_layer(x, layer)
        if layer + 1 < LAYERS:
            # Next layer's input at time tau: [h_f(tau) | h_b(tau)] (lane select).
            x = jnp.concatenate(
                [jnp.where(half, hc[tau], hc[T - 1 - tau]) for tau in range(T)],
                axis=0)

    # torch.cat([outputs[0], outputs[-1]], dim=1) on the top layer.
    out0 = jnp.where(half, hc[0], hc[T - 1])             # [h_f(0)   | h_b(0)  ]
    outT = jnp.where(half, hc[T - 1], hc[0])             # [h_f(T-1) | h_b(T-1)]
    feat = jnp.concatenate([out0, outT], axis=1)         # (BP, 4H)

    # Folded decoder: feat @ (w1@w2) + (b1@w2 + b2)
    wdec_off, wdec_rows = SLAB_LAYOUT["wdec"]
    bdec_off, _ = SLAB_LAYOUT["bdec"]
    wdec = slab_ref[wdec_off:wdec_off + wdec_rows, 0:4 * H]   # (4H, 4H); cols >= n_class are zero
    bdec = slab_ref[bdec_off:bdec_off + 1, 0:4 * H]
    logits = jnp.dot(feat, wdec, preferred_element_type=jnp.float32) + bdec
    out_ref[...] = logits[:B, :out_ref.shape[1]]


# ---- Parameters (deterministic, synthetic) ----------------------------------
def init_params(key):
    ks = jax.random.split(key, 3 + 4 * LAYERS * NDIR)
    params = {}
    params["embedding"] = jax.random.normal(ks[0], (VOCAB, EMBED), jnp.float32) * 0.1
    lstm = {}
    ki = 1
    for l in range(LAYERS):
        d_in = EMBED if l == 0 else NDIR * HIDDEN
        for d in range(NDIR):
            wih_t = jax.random.normal(ks[ki], (d_in, 4 * HIDDEN), jnp.float32) * 0.1
            whh_t = jax.random.normal(ks[ki + 1], (HIDDEN, 4 * HIDDEN), jnp.float32) * 0.1
            bias = jax.random.normal(ks[ki + 2], (1, 4 * HIDDEN), jnp.float32) * 0.1
            lstm[(l, d)] = (wih_t, whh_t, bias)
            ki += 3
    params["lstm"] = lstm
    dec_in = HIDDEN * 2 * NDIR   # 4H if bidirectional else 2H
    params["w1"] = jax.random.normal(ks[ki], (dec_in, HIDDEN), jnp.float32) * 0.1
    params["b1"] = jnp.zeros((1, HIDDEN), jnp.float32)
    params["w2"] = jax.random.normal(ks[ki + 1], (HIDDEN, N_CLASS), jnp.float32) * 0.1
    params["b2"] = jnp.zeros((1, N_CLASS), jnp.float32)
    return params


# ---- Full forward: one fused Pallas kernel ----------------------------------
@jax.jit
def model_forward(tokens, emb_pad, slab):
    B, T = tokens.shape
    tok_flat = tokens.reshape(-1)                   # (B*T,), row-major -> index b*T + t
    smem = pl.BlockSpec(memory_space=pltpu.MemorySpace.SMEM)
    vmem = pl.BlockSpec(memory_space=pltpu.MemorySpace.VMEM)
    return pl.pallas_call(
        fused_lstm_kernel,
        out_shape=jax.ShapeDtypeStruct((B, N_CLASS), jnp.float32),
        in_specs=[smem, vmem, vmem],
        out_specs=vmem,
        scratch_shapes=[
            pltpu.VMEM((T * BP, EMBED), jnp.float32),   # gathered time-major x
            pltpu.VMEM((T * BP, GATES), jnp.float32),   # per-layer input projection
        ],
    )(tok_flat, emb_pad, slab)


# ---- Pure-JAX reference (sanity check) --------------------------------------
def lstm_layer_ref(x, wih_t, whh_t, b):
    H = whh_t.shape[0]
    B = x.shape[1]

    def step(carry, xt):
        h, c = carry
        gates = xt @ wih_t + h @ whh_t + b
        i = jax.nn.sigmoid(gates[:, 0 * H:1 * H])
        f = jax.nn.sigmoid(gates[:, 1 * H:2 * H])
        g = jnp.tanh(gates[:, 2 * H:3 * H])
        o = jax.nn.sigmoid(gates[:, 3 * H:4 * H])
        c = f * c + i * g
        h = o * jnp.tanh(c)
        return (h, c), h

    init = (jnp.zeros((B, H), jnp.float32), jnp.zeros((B, H), jnp.float32))
    _, ys = jax.lax.scan(step, init, x)
    return ys


def model_forward_ref(tokens, params):
    emb = jnp.take(params["embedding"], tokens, axis=0)
    x = jnp.transpose(emb, (1, 0, 2)).astype(jnp.float32)
    for l in range(LAYERS):
        outs = []
        for d in range(NDIR):
            wih_t, whh_t, b = params["lstm"][(l, d)]
            xin = x[::-1] if d == 1 else x
            y = lstm_layer_ref(xin, wih_t, whh_t, b)
            if d == 1:
                y = y[::-1]
            outs.append(y)
        x = jnp.concatenate(outs, axis=-1)
    feat = jnp.concatenate([x[0], x[-1]], axis=1)
    h = feat @ params["w1"] + params["b1"]
    return h @ params["w2"] + params["b2"]


if __name__ == "__main__":
    key = jax.random.PRNGKey(0)
    pkey, tkey = jax.random.split(key)
    params = init_params(pkey)
    tokens = jax.random.randint(tkey, (BATCH, SEQ), 0, VOCAB, dtype=jnp.int32)

    emb_pad, slab = pack_params(params)
    out = jax.block_until_ready(model_forward(tokens, emb_pad, slab))
    assert out.shape == (BATCH, N_CLASS)

    ref = jax.block_until_ready(model_forward_ref(tokens, params))
    assert jnp.allclose(out, ref, rtol=2e-3, atol=2e-3), (out, ref)

    print("KERNEL_OK")
</pallas_src>

<mosaic_0001>
module attributes {stable_mosaic.version = 11 : i64} {
  func.func @fused_lstm_kernel(%arg0: memref<16xi32, #tpu.memory_space<smem>>, %arg1: memref<56x32xf32, #tpu.memory_space<vmem>>, %arg2: memref<376x256xf32, #tpu.memory_space<vmem>>, %arg3: memref<2x2xf32, #tpu.memory_space<vmem>>, %arg4: memref<64x32xf32, #tpu.memory_space<vmem>>, %arg5: memref<64x256xf32, #tpu.memory_space<vmem>>) attributes {dimension_semantics = [], scalar_prefetch = 0 : i64, scratch_operands = 2 : i64, tpu.core_type = #tpu.core_type<tc>} {
    %cst = arith.constant 0.000000e+00 : f32
    %0 = vector.broadcast %cst : f32 to vector<64x32xf32>
    %c0 = arith.constant 0 : index
    %c0_0 = arith.constant 0 : index
    %1 = vector.load %arg4[%c0, %c0_0] : memref<64x32xf32, #tpu.memory_space<vmem>>, vector<64x32xf32>
    tpu.vector_store %arg4[%c0, %c0_0], %0 {strides = array<i32>} : memref<64x32xf32, #tpu.memory_space<vmem>>, vector<64x32xf32>,
    %c0_1 = arith.constant 0 : index
    %2 = memref.load %arg0[%c0_1] : memref<16xi32, #tpu.memory_space<smem>>
    %3 = arith.index_cast %2 : i32 to index
    %c0_2 = arith.constant 0 : index
    %4 = vector.load %arg1[%3, %c0_2] : memref<56x32xf32, #tpu.memory_space<vmem>>, vector<1x32xf32>
    %c0_3 = arith.constant 0 : index
    %c0_4 = arith.constant 0 : index
    %5 = vector.load %arg4[%c0_3, %c0_4] : memref<64x32xf32, #tpu.memory_space<vmem>>, vector<1x32xf32>
    tpu.vector_store %arg4[%c0_3, %c0_4], %4 {strides = array<i32>} : memref<64x32xf32, #tpu.memory_space<vmem>>, vector<1x32xf32>,
    %c8 = arith.constant 8 : index
    %6 = memref.load %arg0[%c8] : memref<16xi32, #tpu.memory_space<smem>>
    %7 = arith.index_cast %6 : i32 to index
    %c0_5 = arith.constant 0 : index
    %8 = vector.load %arg1[%7, %c0_5] : memref<56x32xf32, #tpu.memory_space<vmem>>, vector<1x32xf32>
    %c1 = arith.constant 1 : index
    %c0_6 = arith.constant 0 : index
    %9 = vector.load %arg4[%c1, %c0_6] : memref<64x32xf32, #tpu.memory_space<vmem>>, vector<1x32xf32>
    tpu.vector_store %arg4[%c1, %c0_6], %8 {strides = array<i32>} : memref<64x32xf32, #tpu.memory_space<vmem>>, vector<1x32xf32>,
    %c1_7 = arith.constant 1 : index
    %10 = memref.load %arg0[%c1_7] : memref<16xi32, #tpu.memory_space<smem>>
    %11 = arith.index_cast %10 : i32 to index
    %c0_8 = arith.constant 0 : index
    %12 = vector.load %arg1[%11, %c0_8] : memref<56x32xf32, #tpu.memory_space<vmem>>, vector<1x32xf32>
    %c8_9 = arith.constant 8 : index
    %c0_10 = arith.constant 0 : index
    %13 = vector.load %arg4[%c8_9, %c0_10] : memref<64x32xf32, #tpu.memory_space<vmem>>, vector<1x32xf32>
    tpu.vector_store %arg4[%c8_9, %c0_10], %12 {strides = array<i32>} : memref<64x32xf32, #tpu.memory_space<vmem>>, vector<1x32xf32>,
    %c9 = arith.constant 9 : index
    %14 = memref.load %arg0[%c9] : memref<16xi32, #tpu.memory_space<smem>>
    %15 = arith.index_cast %14 : i32 to index
    %c0_11 = arith.constant 0 : index
    %16 = vector.load %arg1[%15, %c0_11] : memref<56x32xf32, #tpu.memory_space<vmem>>, vector<1x32xf32>
    %c9_12 = arith.constant 9 : index
    %c0_13 = arith.constant 0 : index
    %17 = vector.load %arg4[%c9_12, %c0_13] : memref<64x32xf32, #tpu.memory_space<vmem>>, vector<1x32xf32>
    tpu.vector_store %arg4[%c9_12, %c0_13], %16 {strides = array<i32>} : memref<64x32xf32, #tpu.memory_space<vmem>>, vector<1x32xf32>,
    %c2 = arith.constant 2 : index
    %18 = memref.load %arg0[%c2] : memref<16xi32, #tpu.memory_space<smem>>
    %19 = arith.index_cast %18 : i32 to index
    %c0_14 = arith.constant 0 : index
    %20 = vector.load %arg1[%19, %c0_14] : memref<56x32xf32, #tpu.memory_space<vmem>>, vector<1x32xf32>
    %c16 = arith.constant 16 : index
    %c0_15 = arith.constant 0 : index
    %21 = vector.load %arg4[%c16, %c0_15] : memref<64x32xf32, #tpu.memory_space<vmem>>, vector<1x32xf32>
    tpu.vector_store %arg4[%c16, %c0_15], %20 {strides = array<i32>} : memref<64x32xf32, #tpu.memory_space<vmem>>, vector<1x32xf32>,
    %c10 = arith.constant 10 : index
    %22 = memref.load %arg0[%c10] : memref<16xi32, #tpu.memory_space<smem>>
    %23 = arith.index_cast %22 : i32 to index
    %c0_16 = arith.constant 0 : index
    %24 = vector.load %arg1[%23, %c0_16] : memref<56x32xf32, #tpu.memory_space<vmem>>, vector<1x32xf32>
    %c17 = arith.constant 17 : index
    %c0_17 = arith.constant 0 : index
    %25 = vector.load %arg4[%c17, %c0_17] : memref<64x32xf32, #tpu.memory_space<vmem>>, vector<1x32xf32>
    tpu.vector_store %arg4[%c17, %c0_17], %24 {strides = array<i32>} : memref<64x32xf32, #tpu.memory_space<vmem>>, vector<1x32xf32>,
    %c3 = arith.constant 3 : index
    %26 = memref.load %arg0[%c3] : memref<16xi32, #tpu.memory_space<smem>>
    %27 = arith.index_cast %26 : i32 to index
    %c0_18 = arith.constant 0 : index
    %28 = vector.load %arg1[%27, %c0_18] : memref<56x32xf32, #tpu.memory_space<vmem>>, vector<1x32xf32>
    %c24 = arith.constant 24 : index
    %c0_19 = arith.constant 0 : index
    %29 = vector.load %arg4[%c24, %c0_19] : memref<64x32xf32, #tpu.memory_space<vmem>>, vector<1x32xf32>
    tpu.vector_store %arg4[%c24, %c0_19], %28 {strides = array<i32>} : memref<64x32xf32, #tpu.memory_space<vmem>>, vector<1x32xf32>,
    %c11 = arith.constant 11 : index
    %30 = memref.load %arg0[%c11] : memref<16xi32, #tpu.memory_space<smem>>
    %31 = arith.index_cast %30 : i32 to index
    %c0_20 = arith.constant 0 : index
    %32 = vector.load %arg1[%31, %c0_20] : memref<56x32xf32, #tpu.memory_space<vmem>>, vector<1x32xf32>
    %c25 = arith.constant 25 : index
    %c0_21 = arith.constant 0 : index
    %33 = vector.load %arg4[%c25, %c0_21] : memref<64x32xf32, #tpu.memory_space<vmem>>, vector<1x32xf32>
    tpu.vector_store %arg4[%c25, %c0_21], %32 {strides = array<i32>} : memref<64x32xf32, #tpu.memory_space<vmem>>, vector<1x32xf32>,
    %c4 = arith.constant 4 : index
    %34 = memref.load %arg0[%c4] : memref<16xi32, #tpu.memory_space<smem>>
    %35 = arith.index_cast %34 : i32 to index
    %c0_22 = arith.constant 0 : index
    %36 = vector.load %arg1[%35, %c0_22] : memref<56x32xf32, #tpu.memory_space<vmem>>, vector<1x32xf32>
    %c32 = arith.constant 32 : index
    %c0_23 = arith.constant 0 : index
    %37 = vector.load %arg4[%c32, %c0_23] : memref<64x32xf32, #tpu.memory_space<vmem>>, vector<1x32xf32>
    tpu.vector_store %arg4[%c32, %c0_23], %36 {strides = array<i32>} : memref<64x32xf32, #tpu.memory_space<vmem>>, vector<1x32xf32>,
    %c12 = arith.constant 12 : index
    %38 = memref.load %arg0[%c12] : memref<16xi32, #tpu.memory_space<smem>>
    %39 = arith.index_cast %38 : i32 to index
    %c0_24 = arith.constant 0 : index
    %40 = vector.load %arg1[%39, %c0_24] : memref<56x32xf32, #tpu.memory_space<vmem>>, vector<1x32xf32>
    %c33 = arith.constant 33 : index
    %c0_25 = arith.constant 0 : index
    %41 = vector.load %arg4[%c33, %c0_25] : memref<64x32xf32, #tpu.memory_space<vmem>>, vector<1x32xf32>
    tpu.vector_store %arg4[%c33, %c0_25], %40 {strides = array<i32>} : memref<64x32xf32, #tpu.memory_space<vmem>>, vector<1x32xf32>,
    %c5 = arith.constant 5 : index
    %42 = memref.load %arg0[%c5] : memref<16xi32, #tpu.memory_space<smem>>
    %43 = arith.index_cast %42 : i32 to index
    %c0_26 = arith.constant 0 : index
    %44 = vector.load %arg1[%43, %c0_26] : memref<56x32xf32, #tpu.memory_space<vmem>>, vector<1x32xf32>
    %c40 = arith.constant 40 : index
    %c0_27 = arith.constant 0 : index
    %45 = vector.load %arg4[%c40, %c0_27] : memref<64x32xf32, #tpu.memory_space<vmem>>, vector<1x32xf32>
    tpu.vector_store %arg4[%c40, %c0_27], %44 {strides = array<i32>} : memref<64x32xf32, #tpu.memory_space<vmem>>, vector<1x32xf32>,
    %c13 = arith.constant 13 : index
    %46 = memref.load %arg0[%c13] : memref<16xi32, #tpu.memory_space<smem>>
    %47 = arith.index_cast %46 : i32 to index
    %c0_28 = arith.constant 0 : index
    %48 = vector.load %arg1[%47, %c0_28] : memref<56x32xf32, #tpu.memory_space<vmem>>, vector<1x32xf32>
    %c41 = arith.constant 41 : index
    %c0_29 = arith.constant 0 : index
    %49 = vector.load %arg4[%c41, %c0_29] : memref<64x32xf32, #tpu.memory_space<vmem>>, vector<1x32xf32>
    tpu.vector_store %arg4[%c41, %c0_29], %48 {strides = array<i32>} : memref<64x32xf32, #tpu.memory_space<vmem>>, vector<1x32xf32>,
    %c6 = arith.constant 6 : index
    %50 = memref.load %arg0[%c6] : memref<16xi32, #tpu.memory_space<smem>>
    %51 = arith.index_cast %50 : i32 to index
    %c0_30 = arith.constant 0 : index
    %52 = vector.load %arg1[%51, %c0_30] : memref<56x32xf32, #tpu.memory_space<vmem>>, vector<1x32xf32>
    %c48 = arith.constant 48 : index
    %c0_31 = arith.constant 0 : index
    %53 = vector.load %arg4[%c48, %c0_31] : memref<64x32xf32, #tpu.memory_space<vmem>>, vector<1x32xf32>
    tpu.vector_store %arg4[%c48, %c0_31], %52 {strides = array<i32>} : memref<64x32xf32, #tpu.memory_space<vmem>>, vector<1x32xf32>,
    %c14 = arith.constant 14 : index
    %54 = memref.load %arg0[%c14] : memref<16xi32, #tpu.memory_space<smem>>
    %55 = arith.index_cast %54 : i32 to index
    %c0_32 = arith.constant 0 : index
    %56 = vector.load %arg1[%55, %c0_32] : memref<56x32xf32, #tpu.memory_space<vmem>>, vector<1x32xf32>
    %c49 = arith.constant 49 : index
    %c0_33 = arith.constant 0 : index
    %57 = vector.load %arg4[%c49, %c0_33] : memref<64x32xf32, #tpu.memory_space<vmem>>, vector<1x32xf32>
    tpu.vector_store %arg4[%c49, %c0_33], %56 {strides = array<i32>} : memref<64x32xf32, #tpu.memory_space<vmem>>, vector<1x32xf32>,
    %c7 = arith.constant 7 : index
    %58 = memref.load %arg0[%c7] : memref<16xi32, #tpu.memory_space<smem>>
    %59 = arith.index_cast %58 : i32 to index
    %c0_34 = arith.constant 0 : index
    %60 = vector.load %arg1[%59, %c0_34] : memref<56x32xf32, #tpu.memory_space<vmem>>, vector<1x32xf32>
    %c56 = arith.constant 56 : index
    %c0_35 = arith.constant 0 : index
    %61 = vector.load %arg4[%c56, %c0_35] : memref<64x32xf32, #tpu.memory_space<vmem>>, vector<1x32xf32>
    tpu.vector_store %arg4[%c56, %c0_35], %60 {strides = array<i32>} : memref<64x32xf32, #tpu.memory_space<vmem>>, vector<1x32xf32>,
    %c15 = arith.constant 15 : index
    %62 = memref.load %arg0[%c15] : memref<16xi32, #tpu.memory_space<smem>>
    %63 = arith.index_cast %62 : i32 to index
    %c0_36 = arith.constant 0 : index
    %64 = vector.load %arg1[%63, %c0_36] : memref<56x32xf32, #tpu.memory_space<vmem>>, vector<1x32xf32>
    %c57 = arith.constant 57 : index
    %c0_37 = arith.constant 0 : index
    %65 = vector.load %arg4[%c57, %c0_37] : memref<64x32xf32, #tpu.memory_space<vmem>>, vector<1x32xf32>
    tpu.vector_store %arg4[%c57, %c0_37], %64 {strides = array<i32>} : memref<64x32xf32, #tpu.memory_space<vmem>>, vector<1x32xf32>,
    %66 = tpu.iota {dimensions = array<i32: 1>} : vector<8x256xi32>
    %c128_i32 = arith.constant 128 : i32
    %67 = vector.broadcast %c128_i32 : i32 to vector<8x256xi32>
    %68 = arith.cmpi sge, %66, %67 : vector<8x256xi32>
    %c192_i32 = arith.constant 192 : i32
    %69 = vector.broadcast %c192_i32 : i32 to vector<8x256xi32>
    %70 = arith.cmpi slt, %66, %69 : vector<8x256xi32>
    %71 = arith.andi %68, %70 : vector<8x256xi1>
    %cst_38 = arith.constant 1.000000e+00 : f32
    %cst_39 = arith.constant 5.000000e-01 : f32
    %72 = vector.broadcast %cst_38 : f32 to vector<8x256xf32>
    %73 = vector.broadcast %cst_39 : f32 to vector<8x256xf32>
    %74 = arith.select %71, %72, %73 : vector<8x256xi1>, vector<8x256xf32>
    %cst_40 = arith.constant 0.000000e+00 : f32
    %cst_41 = arith.constant 5.000000e-01 : f32
    %75 = vector.broadcast %cst_40 : f32 to vector<8x256xf32>
    %76 = vector.broadcast %cst_41 : f32 to vector<8x256xf32>
    %77 = arith.select %71, %75, %76 : vector<8x256xi1>, vector<8x256xf32>
    %c64_i32 = arith.constant 64 : i32
    %c0_i32 = arith.constant 0 : i32
    %78 = arith.cmpi eq, %c64_i32, %c0_i32 : i32
    %c1_i32 = arith.constant 1 : i32
    %79 = arith.select %78, %c1_i32, %c64_i32 : i32
    %80 = vector.broadcast %79 : i32 to vector<8x256xi32>
    %81 = arith.remsi %66, %80 : vector<8x256xi32>
    %c0_i32_42 = arith.constant 0 : i32
    %82 = vector.broadcast %c0_i32_42 : i32 to vector<8x256xi32>
    %83 = arith.cmpi ne, %81, %82 : vector<8x256xi32>
    %c0_i32_43 = arith.constant 0 : i32
    %84 = vector.broadcast %c0_i32_43 : i32 to vector<8x256xi32>
    %85 = arith.cmpi slt, %81, %84 : vector<8x256xi32>
    %c0_i32_44 = arith.constant 0 : i32
    %86 = arith.cmpi slt, %79, %c0_i32_44 : i32
    %87 = vector.broadcast %86 : i1 to vector<8x256xi1>
    %88 = vector.broadcast %87 : vector<8x256xi1> to vector<8x256xi1>
    %89 = arith.xori %85, %88 : vector<8x256xi1>
    %90 = arith.andi %89, %83 : vector<8x256xi1>
    %91 = vector.broadcast %79 : i32 to vector<8x256xi32>
    %92 = arith.addi %81, %91 : vector<8x256xi32>
    %93 = arith.select %90, %92, %81 : vector<8x256xi1>, vector<8x256xi32>
    %c32_i32 = arith.constant 32 : i32
    %94 = vector.broadcast %c32_i32 : i32 to vector<8x256xi32>
    %95 = arith.cmpi slt, %93, %94 : vector<8x256xi32>
    %96 = tpu.iota {dimensions = array<i32: 1>} : vector<8x64xi32>
    %c32_i32_45 = arith.constant 32 : i32
    %97 = vector.broadcast %c32_i32_45 : i32 to vector<8x64xi32>
    %98 = arith.cmpi slt, %96, %97 : vector<8x64xi32>
    %c0_46 = arith.constant 0 : index
    %c0_47 = arith.constant 0 : index
    %99 = vector.load %arg4[%c0_46, %c0_47] : memref<64x32xf32, #tpu.memory_space<vmem>>, vector<64x32xf32>
    %c0_48 = arith.constant 0 : index
    %c0_49 = arith.constant 0 : index
    %100 = vector.load %arg2[%c0_48, %c0_49] : memref<376x256xf32, #tpu.memory_space<vmem>>, vector<32x256xf32>
    %c96 = arith.constant 96 : index
    %c0_50 = arith.constant 0 : index
    %101 = vector.load %arg2[%c96, %c0_50] : memref<376x256xf32, #tpu.memory_space<vmem>>, vector<1x256xf32>
    %cst_51 = arith.constant dense<0.000000e+00> : vector<64x256xf32>
    %102 = tpu.matmul %99, %100, %cst_51 {dimension_numbers = #tpu.dot_dimension_numbers<[1], [0], [0], [1], [0, 0, 1, 1], [], []>} : vector<64x32xf32>, vector<32x256xf32>, vector<64x256xf32> -> vector<64x256xf32>
    %103 = vector.broadcast %101 : vector<1x256xf32> to vector<64x256xf32>
    %104 = arith.addf %102, %103 : vector<64x256xf32>
    %c0_52 = arith.constant 0 : index
    %c0_53 = arith.constant 0 : index
    %105 = vector.load %arg5[%c0_52, %c0_53] : memref<64x256xf32, #tpu.memory_space<vmem>>, vector<64x256xf32>
    tpu.vector_store %arg5[%c0_52, %c0_53], %104 {strides = array<i32>} : memref<64x256xf32, #tpu.memory_space<vmem>>, vector<64x256xf32>,
    %c32_54 = arith.constant 32 : index
    %c0_55 = arith.constant 0 : index
    %106 = vector.load %arg2[%c32_54, %c0_55] : memref<376x256xf32, #tpu.memory_space<vmem>>, vector<64x256xf32>
    %cst_56 = arith.constant 0.000000e+00 : f32
    %107 = vector.broadcast %cst_56 : f32 to vector<8x64xf32>
    %cst_57 = arith.constant 0.000000e+00 : f32
    %108 = vector.broadcast %cst_57 : f32 to vector<8x64xf32>
    %c0_58 = arith.constant 0 : index
    %c0_59 = arith.constant 0 : index
    %109 = vector.load %arg5[%c0_58, %c0_59] : memref<64x256xf32, #tpu.memory_space<vmem>>, vector<8x256xf32>
    %c56_60 = arith.constant 56 : index
    %c0_61 = arith.constant 0 : index
    %110 = vector.load %arg5[%c56_60, %c0_61] : memref<64x256xf32, #tpu.memory_space<vmem>>, vector<8x256xf32>
    %111 = arith.select %95, %109, %110 : vector<8x256xi1>, vector<8x256xf32>
    %cst_62 = arith.constant dense<0.000000e+00> : vector<8x256xf32>
    %112 = tpu.matmul %107, %106, %cst_62 {dimension_numbers = #tpu.dot_dimension_numbers<[1], [0], [0], [1], [0, 0, 1, 1], [], []>} : vector<8x64xf32>, vector<64x256xf32>, vector<8x256xf32> -> vector<8x256xf32>
    %113 = arith.addf %112, %111 : vector<8x256xf32>
    %114 = arith.mulf %74, %113 : vector<8x256xf32>
    %115 = math.tanh %114 : vector<8x256xf32>
    %116 = arith.mulf %74, %115 : vector<8x256xf32>
    %117 = arith.addf %116, %77 : vector<8x256xf32>
    %118 = vector.extract_strided_slice %117 {offsets = [0, 0], sizes = [8, 64], strides = [1, 1]} : vector<8x256xf32> to vector<8x64xf32>
    %119 = vector.extract_strided_slice %117 {offsets = [0, 64], sizes = [8, 64], strides = [1, 1]} : vector<8x256xf32> to vector<8x64xf32>
    %120 = vector.extract_strided_slice %117 {offsets = [0, 128], sizes = [8, 64], strides = [1, 1]} : vector<8x256xf32> to vector<8x64xf32>
    %121 = vector.extract_strided_slice %117 {offsets = [0, 192], sizes = [8, 64], strides = [1, 1]} : vector<8x256xf32> to vector<8x64xf32>
    %122 = arith.mulf %119, %108 : vector<8x64xf32>
    %123 = arith.mulf %118, %120 : vector<8x64xf32>
    %124 = arith.addf %122, %123 : vector<8x64xf32>
    %125 = math.tanh %124 : vector<8x64xf32>
    %126 = arith.mulf %121, %125 : vector<8x64xf32>
    %c8_63 = arith.constant 8 : index
    %c0_64 = arith.constant 0 : index
    %127 = vector.load %arg5[%c8_63, %c0_64] : memref<64x256xf32, #tpu.memory_space<vmem>>, vector<8x256xf32>
    %c48_65 = arith.constant 48 : index
    %c0_66 = arith.constant 0 : index
    %128 = vector.load %arg5[%c48_65, %c0_66] : memref<64x256xf32, #tpu.memory_space<vmem>>, vector<8x256xf32>
    %129 = arith.select %95, %127, %128 : vector<8x256xi1>, vector<8x256xf32>
    %cst_67 = arith.constant dense<0.000000e+00> : vector<8x256xf32>
    %130 = tpu.matmul %126, %106, %cst_67 {dimension_numbers = #tpu.dot_dimension_numbers<[1], [0], [0], [1], [0, 0, 1, 1], [], []>} : vector<8x64xf32>, vector<64x256xf32>, vector<8x256xf32> -> vector<8x256xf32>
    %131 = arith.addf %130, %129 : vector<8x256xf32>
    %132 = arith.mulf %74, %131 : vector<8x256xf32>
    %133 = math.tanh %132 : vector<8x256xf32>
    %134 = arith.mulf %74, %133 : vector<8x256xf32>
    %135 = arith.addf %134, %77 : vector<8x256xf32>
    %136 = vector.extract_strided_slice %135 {offsets = [0, 0], sizes = [8, 64], strides = [1, 1]} : vector<8x256xf32> to vector<8x64xf32>
    %137 = vector.extract_strided_slice %135 {offsets = [0, 64], sizes = [8, 64], strides = [1, 1]} : vector<8x256xf32> to vector<8x64xf32>
    %138 = vector.extract_strided_slice %135 {offsets = [0, 128], sizes = [8, 64], strides = [1, 1]} : vector<8x256xf32> to vector<8x64xf32>
    %139 = vector.extract_strided_slice %135 {offsets = [0, 192], sizes = [8, 64], strides = [1, 1]} : vector<8x256xf32> to vector<8x64xf32>
    %140 = arith.mulf %137, %124 : vector<8x64xf32>
    %141 = arith.mulf %136, %138 : vector<8x64xf32>
    %142 = arith.addf %140, %141 : vector<8x64xf32>
    %143 = math.tanh %142 : vector<8x64xf32>
    %144 = arith.mulf %139, %143 : vector<8x64xf32>
    %c16_68 = arith.constant 16 : index
    %c0_69 = arith.constant 0 : index
    %145 = vector.load %arg5[%c16_68, %c0_69] : memref<64x256xf32, #tpu.memory_space<vmem>>, vector<8x256xf32>
    %c40_70 = arith.constant 40 : index
    %c0_71 = arith.constant 0 : index
    %146 = vector.load %arg5[%c40_70, %c0_71] : memref<64x256xf32, #tpu.memory_space<vmem>>, vector<8x256xf32>
    %147 = arith.select %95, %145, %146 : vector<8x256xi1>, vector<8x256xf32>
    %cst_72 = arith.constant dense<0.000000e+00> : vector<8x256xf32>
    %148 = tpu.matmul %144, %106, %cst_72 {dimension_numbers = #tpu.dot_dimension_numbers<[1], [0], [0], [1], [0, 0, 1, 1], [], []>} : vector<8x64xf32>, vector<64x256xf32>, vector<8x256xf32> -> vector<8x256xf32>
    %149 = arith.addf %148, %147 : vector<8x256xf32>
    %150 = arith.mulf %74, %149 : vector<8x256xf32>
    %151 = math.tanh %150 : vector<8x256xf32>
    %152 = arith.mulf %74, %151 : vector<8x256xf32>
    %153 = arith.addf %152, %77 : vector<8x256xf32>
    %154 = vector.extract_strided_slice %153 {offsets = [0, 0], sizes = [8, 64], strides = [1, 1]} : vector<8x256xf32> to vector<8x64xf32>
    %155 = vector.extract_strided_slice %153 {offsets = [0, 64], sizes = [8, 64], strides = [1, 1]} : vector<8x256xf32> to vector<8x64xf32>
    %156 = vector.extract_strided_slice %153 {offsets = [0, 128], sizes = [8, 64], strides = [1, 1]} : vector<8x256xf32> to vector<8x64xf32>
    %157 = vector.extract_strided_slice %153 {offsets = [0, 192], sizes = [8, 64], strides = [1, 1]} : vector<8x256xf32> to vector<8x64xf32>
    %158 = arith.mulf %155, %142 : vector<8x64xf32>
    %159 = arith.mulf %154, %156 : vector<8x64xf32>
    %160 = arith.addf %158, %159 : vector<8x64xf32>
    %161 = math.tanh %160 : vector<8x64xf32>
    %162 = arith.mulf %157, %161 : vector<8x64xf32>
    %c24_73 = arith.constant 24 : index
    %c0_74 = arith.constant 0 : index
    %163 = vector.load %arg5[%c24_73, %c0_74] : memref<64x256xf32, #tpu.memory_space<vmem>>, vector<8x256xf32>
    %c32_75 = arith.constant 32 : index
    %c0_76 = arith.constant 0 : index
    %164 = vector.load %arg5[%c32_75, %c0_76] : memref<64x256xf32, #tpu.memory_space<vmem>>, vector<8x256xf32>
    %165 = arith.select %95, %163, %164 : vector<8x256xi1>, vector<8x256xf32>
    %cst_77 = arith.constant dense<0.000000e+00> : vector<8x256xf32>
    %166 = tpu.matmul %162, %106, %cst_77 {dimension_numbers = #tpu.dot_dimension_numbers<[1], [0], [0], [1], [0, 0, 1, 1], [], []>} : vector<8x64xf32>, vector<64x256xf32>, vector<8x256xf32> -> vector<8x256xf32>
    %167 = arith.addf %166, %165 : vector<8x256xf32>
    %168 = arith.mulf %74, %167 : vector<8x256xf32>
    %169 = math.tanh %168 : vector<8x256xf32>
    %170 = arith.mulf %74, %169 : vector<8x256xf32>
    %171 = arith.addf %170, %77 : vector<8x256xf32>
    %172 = vector.extract_strided_slice %171 {offsets = [0, 0], sizes = [8, 64], strides = [1, 1]} : vector<8x256xf32> to vector<8x64xf32>
    %173 = vector.extract_strided_slice %171 {offsets = [0, 64], sizes = [8, 64], strides = [1, 1]} : vector<8x256xf32> to vector<8x64xf32>
    %174 = vector.extract_strided_slice %171 {offsets = [0, 128], sizes = [8, 64], strides = [1, 1]} : vector<8x256xf32> to vector<8x64xf32>
    %175 = vector.extract_strided_slice %171 {offsets = [0, 192], sizes = [8, 64], strides = [1, 1]} : vector<8x256xf32> to vector<8x64xf32>
    %176 = arith.mulf %173, %160 : vector<8x64xf32>
    %177 = arith.mulf %172, %174 : vector<8x64xf32>
    %178 = arith.addf %176, %177 : vector<8x64xf32>
    %179 = math.tanh %178 : vector<8x64xf32>
    %180 = arith.mulf %175, %179 : vector<8x64xf32>
    %c32_78 = arith.constant 32 : index
    %c0_79 = arith.constant 0 : index
    %181 = vector.load %arg5[%c32_78, %c0_79] : memref<64x256xf32, #tpu.memory_space<vmem>>, vector<8x256xf32>
    %c24_80 = arith.constant 24 : index
    %c0_81 = arith.constant 0 : index
    %182 = vector.load %arg5[%c24_80, %c0_81] : memref<64x256xf32, #tpu.memory_space<vmem>>, vector<8x256xf32>
    %183 = arith.select %95, %181, %182 : vector<8x256xi1>, vector<8x256xf32>
    %cst_82 = arith.constant dense<0.000000e+00> : vector<8x256xf32>
    %184 = tpu.matmul %180, %106, %cst_82 {dimension_numbers = #tpu.dot_dimension_numbers<[1], [0], [0], [1], [0, 0, 1, 1], [], []>} : vector<8x64xf32>, vector<64x256xf32>, vector<8x256xf32> -> vector<8x256xf32>
    %185 = arith.addf %184, %183 : vector<8x256xf32>
    %186 = arith.mulf %74, %185 : vector<8x256xf32>
    %187 = math.tanh %186 : vector<8x256xf32>
    %188 = arith.mulf %74, %187 : vector<8x256xf32>
    %189 = arith.addf %188, %77 : vector<8x256xf32>
    %190 = vector.extract_strided_slice %189 {offsets = [0, 0], sizes = [8, 64], strides = [1, 1]} : vector<8x256xf32> to vector<8x64xf32>
    %191 = vector.extract_strided_slice %189 {offsets = [0, 64], sizes = [8, 64], strides = [1, 1]} : vector<8x256xf32> to vector<8x64xf32>
    %192 = vector.extract_strided_slice %189 {offsets = [0, 128], sizes = [8, 64], strides = [1, 1]} : vector<8x256xf32> to vector<8x64xf32>
    %193 = vector.extract_strided_slice %189 {offsets = [0, 192], sizes = [8, 64], strides = [1, 1]} : vector<8x256xf32> to vector<8x64xf32>
    %194 = arith.mulf %191, %178 : vector<8x64xf32>
    %195 = arith.mulf %190, %192 : vector<8x64xf32>
    %196 = arith.addf %194, %195 : vector<8x64xf32>
    %197 = math.tanh %196 : vector<8x64xf32>
    %198 = arith.mulf %193, %197 : vector<8x64xf32>
    %c40_83 = arith.constant 40 : index
    %c0_84 = arith.constant 0 : index
    %199 = vector.load %arg5[%c40_83, %c0_84] : memref<64x256xf32, #tpu.memory_space<vmem>>, vector<8x256xf32>
    %c16_85 = arith.constant 16 : index
    %c0_86 = arith.constant 0 : index
    %200 = vector.load %arg5[%c16_85, %c0_86] : memref<64x256xf32, #tpu.memory_space<vmem>>, vector<8x256xf32>
    %201 = arith.select %95, %199, %200 : vector<8x256xi1>, vector<8x256xf32>
    %cst_87 = arith.constant dense<0.000000e+00> : vector<8x256xf32>
    %202 = tpu.matmul %198, %106, %cst_87 {dimension_numbers = #tpu.dot_dimension_numbers<[1], [0], [0], [1], [0, 0, 1, 1], [], []>} : vector<8x64xf32>, vector<64x256xf32>, vector<8x256xf32> -> vector<8x256xf32>
    %203 = arith.addf %202, %201 : vector<8x256xf32>
    %204 = arith.mulf %74, %203 : vector<8x256xf32>
    %205 = math.tanh %204 : vector<8x256xf32>
    %206 = arith.mulf %74, %205 : vector<8x256xf32>
    %207 = arith.addf %206, %77 : vector<8x256xf32>
    %208 = vector.extract_strided_slice %207 {offsets = [0, 0], sizes = [8, 64], strides = [1, 1]} : vector<8x256xf32> to vector<8x64xf32>
    %209 = vector.extract_strided_slice %207 {offsets = [0, 64], sizes = [8, 64], strides = [1, 1]} : vector<8x256xf32> to vector<8x64xf32>
    %210 = vector.extract_strided_slice %207 {offsets = [0, 128], sizes = [8, 64], strides = [1, 1]} : vector<8x256xf32> to vector<8x64xf32>
    %211 = vector.extract_strided_slice %207 {offsets = [0, 192], sizes = [8, 64], strides = [1, 1]} : vector<8x256xf32> to vector<8x64xf32>
    %212 = arith.mulf %209, %196 : vector<8x64xf32>
    %213 = arith.mulf %208, %210 : vector<8x64xf32>
    %214 = arith.addf %212, %213 : vector<8x64xf32>
    %215 = math.tanh %214 : vector<8x64xf32>
    %216 = arith.mulf %211, %215 : vector<8x64xf32>
    %c48_88 = arith.constant 48 : index
    %c0_89 = arith.constant 0 : index
    %217 = vector.load %arg5[%c48_88, %c0_89] : memref<64x256xf32, #tpu.memory_space<vmem>>, vector<8x256xf32>
    %c8_90 = arith.constant 8 : index
    %c0_91 = arith.constant 0 : index
    %218 = vector.load %arg5[%c8_90, %c0_91] : memref<64x256xf32, #tpu.memory_space<vmem>>, vector<8x256xf32>
    %219 = arith.select %95, %217, %218 : vector<8x256xi1>, vector<8x256xf32>
    %cst_92 = arith.constant dense<0.000000e+00> : vector<8x256xf32>
    %220 = tpu.matmul %216, %106, %cst_92 {dimension_numbers = #tpu.dot_dimension_numbers<[1], [0], [0], [1], [0, 0, 1, 1], [], []>} : vector<8x64xf32>, vector<64x256xf32>, vector<8x256xf32> -> vector<8x256xf32>
    %221 = arith.addf %220, %219 : vector<8x256xf32>
    %222 = arith.mulf %74, %221 : vector<8x256xf32>
    %223 = math.tanh %222 : vector<8x256xf32>
    %224 = arith.mulf %74, %223 : vector<8x256xf32>
    %225 = arith.addf %224, %77 : vector<8x256xf32>
    %226 = vector.extract_strided_slice %225 {offsets = [0, 0], sizes = [8, 64], strides = [1, 1]} : vector<8x256xf32> to vector<8x64xf32>
    %227 = vector.extract_strided_slice %225 {offsets = [0, 64], sizes = [8, 64], strides = [1, 1]} : vector<8x256xf32> to vector<8x64xf32>
    %228 = vector.extract_strided_slice %225 {offsets = [0, 128], sizes = [8, 64], strides = [1, 1]} : vector<8x256xf32> to vector<8x64xf32>
    %229 = vector.extract_strided_slice %225 {offsets = [0, 192], sizes = [8, 64], strides = [1, 1]} : vector<8x256xf32> to vector<8x64xf32>
    %230 = arith.mulf %227, %214 : vector<8x64xf32>
    %231 = arith.mulf %226, %228 : vector<8x64xf32>
    %232 = arith.addf %230, %231 : vector<8x64xf32>
    %233 = math.tanh %232 : vector<8x64xf32>
    %234 = arith.mulf %229, %233 : vector<8x64xf32>
    %c56_93 = arith.constant 56 : index
    %c0_94 = arith.constant 0 : index
    %235 = vector.load %arg5[%c56_93, %c0_94] : memref<64x256xf32, #tpu.memory_space<vmem>>, vector<8x256xf32>
    %c0_95 = arith.constant 0 : index
    %c0_96 = arith.constant 0 : index
    %236 = vector.load %arg5[%c0_95, %c0_96] : memref<64x256xf32, #tpu.memory_space<vmem>>, vector<8x256xf32>
    %237 = arith.select %95, %235, %236 : vector<8x256xi1>, vector<8x256xf32>
    %cst_97 = arith.constant dense<0.000000e+00> : vector<8x256xf32>
    %238 = tpu.matmul %234, %106, %cst_97 {dimension_numbers = #tpu.dot_dimension_numbers<[1], [0], [0], [1], [0, 0, 1, 1], [], []>} : vector<8x64xf32>, vector<64x256xf32>, vector<8x256xf32> -> vector<8x256xf32>
    %239 = arith.addf %238, %237 : vector<8x256xf32>
    %240 = arith.mulf %74, %239 : vector<8x256xf32>
    %241 = math.tanh %240 : vector<8x256xf32>
    %242 = arith.mulf %74, %241 : vector<8x256xf32>
    %243 = arith.addf %242, %77 : vector<8x256xf32>
    %244 = vector.extract_strided_slice %243 {offsets = [0, 0], sizes = [8, 64], strides = [1, 1]} : vector<8x256xf32> to vector<8x64xf32>
    %245 = vector.extract_strided_slice %243 {offsets = [0, 64], sizes = [8, 64], strides = [1, 1]} : vector<8x256xf32> to vector<8x64xf32>
    %246 = vector.extract_strided_slice %243 {offsets = [0, 128], sizes = [8, 64], strides = [1, 1]} : vector<8x256xf32> to vector<8x64xf32>
    %247 = vector.extract_strided_slice %243 {offsets = [0, 192], sizes = [8, 64], strides = [1, 1]} : vector<8x256xf32> to vector<8x64xf32>
    %248 = arith.mulf %245, %232 : vector<8x64xf32>
    %249 = arith.mulf %244, %246 : vector<8x64xf32>
    %250 = arith.addf %248, %249 : vector<8x64xf32>
    %251 = math.tanh %250 : vector<8x64xf32>
    %252 = arith.mulf %247, %251 : vector<8x64xf32>
    %253 = arith.select %98, %126, %252 : vector<8x64xi1>, vector<8x64xf32>
    %254 = arith.select %98, %144, %234 : vector<8x64xi1>, vector<8x64xf32>
    %255 = arith.select %98, %162, %216 : vector<8x64xi1>, vector<8x64xf32>
    %256 = arith.select %98, %180, %198 : vector<8x64xi1>, vector<8x64xf32>
    %257 = arith.select %98, %198, %180 : vector<8x64xi1>, vector<8x64xf32>
    %258 = arith.select %98, %216, %162 : vector<8x64xi1>, vector<8x64xf32>
    %259 = arith.select %98, %234, %144 : vector<8x64xi1>, vector<8x64xf32>
    %260 = arith.select %98, %252, %126 : vector<8x64xi1>, vector<8x64xf32>
    %261 = tpu.concatenate %253, %254, %255, %256, %257, %258, %259, %260 in 0 : vector<8x64xf32>, vector<8x64xf32>, vector<8x64xf32>, vector<8x64xf32>, vector<8x64xf32>, vector<8x64xf32>, vector<8x64xf32>, vector<8x64xf32> -> vector<64x64xf32>
    %c104 = arith.constant 104 : index
    %c0_98 = arith.constant 0 : index
    %262 = vector.load %arg2[%c104, %c0_98] : memref<376x256xf32, #tpu.memory_space<vmem>>, vector<64x256xf32>
    %c232 = arith.constant 232 : index
    %c0_99 = arith.constant 0 : index
    %263 = vector.load %arg2[%c232, %c0_99] : memref<376x256xf32, #tpu.memory_space<vmem>>, vector<1x256xf32>
    %cst_100 = arith.constant dense<0.000000e+00> : vector<64x256xf32>
    %264 = tpu.matmul %261, %262, %cst_100 {dimension_numbers = #tpu.dot_dimension_numbers<[1], [0], [0], [1], [0, 0, 1, 1], [], []>} : vector<64x64xf32>, vector<64x256xf32>, vector<64x256xf32> -> vector<64x256xf32>
    %265 = vector.broadcast %263 : vector<1x256xf32> to vector<64x256xf32>
    %266 = arith.addf %264, %265 : vector<64x256xf32>
    %c0_101 = arith.constant 0 : index
    %c0_102 = arith.constant 0 : index
    %267 = vector.load %arg5[%c0_101, %c0_102] : memref<64x256xf32, #tpu.memory_space<vmem>>, vector<64x256xf32>
    tpu.vector_store %arg5[%c0_101, %c0_102], %266 {strides = array<i32>} : memref<64x256xf32, #tpu.memory_space<vmem>>, vector<64x256xf32>,
    %c168 = arith.constant 168 : index
    %c0_103 = arith.constant 0 : index
    %268 = vector.load %arg2[%c168, %c0_103] : memref<376x256xf32, #tpu.memory_space<vmem>>, vector<64x256xf32>
    %cst_104 = arith.constant 0.000000e+00 : f32
    %269 = vector.broadcast %cst_104 : f32 to vector<8x64xf32>
    %cst_105 = arith.constant 0.000000e+00 : f32
    %270 = vector.broadcast %cst_105 : f32 to vector<8x64xf32>
    %c0_106 = arith.constant 0 : index
    %c0_107 = arith.constant 0 : index
    %271 = vector.load %arg5[%c0_106, %c0_107] : memref<64x256xf32, #tpu.memory_space<vmem>>, vector<8x256xf32>
    %c56_108 = arith.constant 56 : index
    %c0_109 = arith.constant 0 : index
    %272 = vector.load %arg5[%c56_108, %c0_109] : memref<64x256xf32, #tpu.memory_space<vmem>>, vector<8x256xf32>
    %273 = arith.select %95, %271, %272 : vector<8x256xi1>, vector<8x256xf32>
    %cst_110 = arith.constant dense<0.000000e+00> : vector<8x256xf32>
    %274 = tpu.matmul %269, %268, %cst_110 {dimension_numbers = #tpu.dot_dimension_numbers<[1], [0], [0], [1], [0, 0, 1, 1], [], []>} : vector<8x64xf32>, vector<64x256xf32>, vector<8x256xf32> -> vector<8x256xf32>
    %275 = arith.addf %274, %273 : vector<8x256xf32>
    %276 = arith.mulf %74, %275 : vector<8x256xf32>
    %277 = math.tanh %276 : vector<8x256xf32>
    %278 = arith.mulf %74, %277 : vector<8x256xf32>
    %279 = arith.addf %278, %77 : vector<8x256xf32>
    %280 = vector.extract_strided_slice %279 {offsets = [0, 0], sizes = [8, 64], strides = [1, 1]} : vector<8x256xf32> to vector<8x64xf32>
    %281 = vector.extract_strided_slice %279 {offsets = [0, 64], sizes = [8, 64], strides = [1, 1]} : vector<8x256xf32> to vector<8x64xf32>
    %282 = vector.extract_strided_slice %279 {offsets = [0, 128], sizes = [8, 64], strides = [1, 1]} : vector<8x256xf32> to vector<8x64xf32>
    %283 = vector.extract_strided_slice %279 {offsets = [0, 192], sizes = [8, 64], strides = [1, 1]} : vector<8x256xf32> to vector<8x64xf32>
    %284 = arith.mulf %281, %270 : vector<8x64xf32>
    %285 = arith.mulf %280, %282 : vector<8x64xf32>
    %286 = arith.addf %284, %285 : vector<8x64xf32>
    %287 = math.tanh %286 : vector<8x64xf32>
    %288 = arith.mulf %283, %287 : vector<8x64xf32>
    %c8_111 = arith.constant 8 : index
    %c0_112 = arith.constant 0 : index
    %289 = vector.load %arg5[%c8_111, %c0_112] : memref<64x256xf32, #tpu.memory_space<vmem>>, vector<8x256xf32>
    %c48_113 = arith.constant 48 : index
    %c0_114 = arith.constant 0 : index
    %290 = vector.load %arg5[%c48_113, %c0_114] : memref<64x256xf32, #tpu.memory_space<vmem>>, vector<8x256xf32>
    %291 = arith.select %95, %289, %290 : vector<8x256xi1>, vector<8x256xf32>
    %cst_115 = arith.constant dense<0.000000e+00> : vector<8x256xf32>
    %292 = tpu.matmul %288, %268, %cst_115 {dimension_numbers = #tpu.dot_dimension_numbers<[1], [0], [0], [1], [0, 0, 1, 1], [], []>} : vector<8x64xf32>, vector<64x256xf32>, vector<8x256xf32> -> vector<8x256xf32>
    %293 = arith.addf %292, %291 : vector<8x256xf32>
    %294 = arith.mulf %74, %293 : vector<8x256xf32>
    %295 = math.tanh %294 : vector<8x256xf32>
    %296 = arith.mulf %74, %295 : vector<8x256xf32>
    %297 = arith.addf %296, %77 : vector<8x256xf32>
    %298 = vector.extract_strided_slice %297 {offsets = [0, 0], sizes = [8, 64], strides = [1, 1]} : vector<8x256xf32> to vector<8x64xf32>
    %299 = vector.extract_strided_slice %297 {offsets = [0, 64], sizes = [8, 64], strides = [1, 1]} : vector<8x256xf32> to vector<8x64xf32>
    %300 = vector.extract_strided_slice %297 {offsets = [0, 128], sizes = [8, 64], strides = [1, 1]} : vector<8x256xf32> to vector<8x64xf32>
    %301 = vector.extract_strided_slice %297 {offsets = [0, 192], sizes = [8, 64], strides = [1, 1]} : vector<8x256xf32> to vector<8x64xf32>
    %302 = arith.mulf %299, %286 : vector<8x64xf32>
    %303 = arith.mulf %298, %300 : vector<8x64xf32>
    %304 = arith.addf %302, %303 : vector<8x64xf32>
    %305 = math.tanh %304 : vector<8x64xf32>
    %306 = arith.mulf %301, %305 : vector<8x64xf32>
    %c16_116 = arith.constant 16 : index
    %c0_117 = arith.constant 0 : index
    %307 = vector.load %arg5[%c16_116, %c0_117] : memref<64x256xf32, #tpu.memory_space<vmem>>, vector<8x256xf32>
    %c40_118 = arith.constant 40 : index
    %c0_119 = arith.constant 0 : index
    %308 = vector.load %arg5[%c40_118, %c0_119] : memref<64x256xf32, #tpu.memory_space<vmem>>, vector<8x256xf32>
    %309 = arith.select %95, %307, %308 : vector<8x256xi1>, vector<8x256xf32>
    %cst_120 = arith.constant dense<0.000000e+00> : vector<8x256xf32>
    %310 = tpu.matmul %306, %268, %cst_120 {dimension_numbers = #tpu.dot_dimension_numbers<[1], [0], [0], [1], [0, 0, 1, 1], [], []>} : vector<8x64xf32>, vector<64x256xf32>, vector<8x256xf32> -> vector<8x256xf32>
    %311 = arith.addf %310, %309 : vector<8x256xf32>
    %312 = arith.mulf %74, %311 : vector<8x256xf32>
    %313 = math.tanh %312 : vector<8x256xf32>
    %314 = arith.mulf %74, %313 : vector<8x256xf32>
    %315 = arith.addf %314, %77 : vector<8x256xf32>
    %316 = vector.extract_strided_slice %315 {offsets = [0, 0], sizes = [8, 64], strides = [1, 1]} : vector<8x256xf32> to vector<8x64xf32>
    %317 = vector.extract_strided_slice %315 {offsets = [0, 64], sizes = [8, 64], strides = [1, 1]} : vector<8x256xf32> to vector<8x64xf32>
    %318 = vector.extract_strided_slice %315 {offsets = [0, 128], sizes = [8, 64], strides = [1, 1]} : vector<8x256xf32> to vector<8x64xf32>
    %319 = vector.extract_strided_slice %315 {offsets = [0, 192], sizes = [8, 64], strides = [1, 1]} : vector<8x256xf32> to vector<8x64xf32>
    %320 = arith.mulf %317, %304 : vector<8x64xf32>
    %321 = arith.mulf %316, %318 : vector<8x64xf32>
    %322 = arith.addf %320, %321 : vector<8x64xf32>
    %323 = math.tanh %322 : vector<8x64xf32>
    %324 = arith.mulf %319, %323 : vector<8x64xf32>
    %c24_121 = arith.constant 24 : index
    %c0_122 = arith.constant 0 : index
    %325 = vector.load %arg5[%c24_121, %c0_122] : memref<64x256xf32, #tpu.memory_space<vmem>>, vector<8x256xf32>
    %c32_123 = arith.constant 32 : index
    %c0_124 = arith.constant 0 : index
    %326 = vector.load %arg5[%c32_123, %c0_124] : memref<64x256xf32, #tpu.memory_space<vmem>>, vector<8x256xf32>
    %327 = arith.select %95, %325, %326 : vector<8x256xi1>, vector<8x256xf32>
    %cst_125 = arith.constant dense<0.000000e+00> : vector<8x256xf32>
    %328 = tpu.matmul %324, %268, %cst_125 {dimension_numbers = #tpu.dot_dimension_numbers<[1], [0], [0], [1], [0, 0, 1, 1], [], []>} : vector<8x64xf32>, vector<64x256xf32>, vector<8x256xf32> -> vector<8x256xf32>
    %329 = arith.addf %328, %327 : vector<8x256xf32>
    %330 = arith.mulf %74, %329 : vector<8x256xf32>
    %331 = math.tanh %330 : vector<8x256xf32>
    %332 = arith.mulf %74, %331 : vector<8x256xf32>
    %333 = arith.addf %332, %77 : vector<8x256xf32>
    %334 = vector.extract_strided_slice %333 {offsets = [0, 0], sizes = [8, 64], strides = [1, 1]} : vector<8x256xf32> to vector<8x64xf32>
    %335 = vector.extract_strided_slice %333 {offsets = [0, 64], sizes = [8, 64], strides = [1, 1]} : vector<8x256xf32> to vector<8x64xf32>
    %336 = vector.extract_strided_slice %333 {offsets = [0, 128], sizes = [8, 64], strides = [1, 1]} : vector<8x256xf32> to vector<8x64xf32>
    %337 = vector.extract_strided_slice %333 {offsets = [0, 192], sizes = [8, 64], strides = [1, 1]} : vector<8x256xf32> to vector<8x64xf32>
    %338 = arith.mulf %335, %322 : vector<8x64xf32>
    %339 = arith.mulf %334, %336 : vector<8x64xf32>
    %340 = arith.addf %338, %339 : vector<8x64xf32>
    %341 = math.tanh %340 : vector<8x64xf32>
    %342 = arith.mulf %337, %341 : vector<8x64xf32>
    %c32_126 = arith.constant 32 : index
    %c0_127 = arith.constant 0 : index
    %343 = vector.load %arg5[%c32_126, %c0_127] : memref<64x256xf32, #tpu.memory_space<vmem>>, vector<8x256xf32>
    %c24_128 = arith.constant 24 : index
    %c0_129 = arith.constant 0 : index
    %344 = vector.load %arg5[%c24_128, %c0_129] : memref<64x256xf32, #tpu.memory_space<vmem>>, vector<8x256xf32>
    %345 = arith.select %95, %343, %344 : vector<8x256xi1>, vector<8x256xf32>
    %cst_130 = arith.constant dense<0.000000e+00> : vector<8x256xf32>
    %346 = tpu.matmul %342, %268, %cst_130 {dimension_numbers = #tpu.dot_dimension_numbers<[1], [0], [0], [1], [0, 0, 1, 1], [], []>} : vector<8x64xf32>, vector<64x256xf32>, vector<8x256xf32> -> vector<8x256xf32>
    %347 = arith.addf %346, %345 : vector<8x256xf32>
    %348 = arith.mulf %74, %347 : vector<8x256xf32>
    %349 = math.tanh %348 : vector<8x256xf32>
    %350 = arith.mulf %74, %349 : vector<8x256xf32>
    %351 = arith.addf %350, %77 : vector<8x256xf32>
    %352 = vector.extract_strided_slice %351 {offsets = [0, 0], sizes = [8, 64], strides = [1, 1]} : vector<8x256xf32> to vector<8x64xf32>
    %353 = vector.extract_strided_slice %351 {offsets = [0, 64], sizes = [8, 64], strides = [1, 1]} : vector<8x256xf32> to vector<8x64xf32>
    %354 = vector.extract_strided_slice %351 {offsets = [0, 128], sizes = [8, 64], strides = [1, 1]} : vector<8x256xf32> to vector<8x64xf32>
    %355 = vector.extract_strided_slice %351 {offsets = [0, 192], sizes = [8, 64], strides = [1, 1]} : vector<8x256xf32> to vector<8x64xf32>
    %356 = arith.mulf %353, %340 : vector<8x64xf32>
    %357 = arith.mulf %352, %354 : vector<8x64xf32>
    %358 = arith.addf %356, %357 : vector<8x64xf32>
    %359 = math.tanh %358 : vector<8x64xf32>
    %360 = arith.mulf %355, %359 : vector<8x64xf32>
    %c40_131 = arith.constant 40 : index
    %c0_132 = arith.constant 0 : index
    %361 = vector.load %arg5[%c40_131, %c0_132] : memref<64x256xf32, #tpu.memory_space<vmem>>, vector<8x256xf32>
    %c16_133 = arith.constant 16 : index
    %c0_134 = arith.constant 0 : index
    %362 = vector.load %arg5[%c16_133, %c0_134] : memref<64x256xf32, #tpu.memory_space<vmem>>, vector<8x256xf32>
    %363 = arith.select %95, %361, %362 : vector<8x256xi1>, vector<8x256xf32>
    %cst_135 = arith.constant dense<0.000000e+00> : vector<8x256xf32>
    %364 = tpu.matmul %360, %268, %cst_135 {dimension_numbers = #tpu.dot_dimension_numbers<[1], [0], [0], [1], [0, 0, 1, 1], [], []>} : vector<8x64xf32>, vector<64x256xf32>, vector<8x256xf32> -> vector<8x256xf32>
    %365 = arith.addf %364, %363 : vector<8x256xf32>
    %366 = arith.mulf %74, %365 : vector<8x256xf32>
    %367 = math.tanh %366 : vector<8x256xf32>
    %368 = arith.mulf %74, %367 : vector<8x256xf32>
    %369 = arith.addf %368, %77 : vector<8x256xf32>
    %370 = vector.extract_strided_slice %369 {offsets = [0, 0], sizes = [8, 64], strides = [1, 1]} : vector<8x256xf32> to vector<8x64xf32>
    %371 = vector.extract_strided_slice %369 {offsets = [0, 64], sizes = [8, 64], strides = [1, 1]} : vector<8x256xf32> to vector<8x64xf32>
    %372 = vector.extract_strided_slice %369 {offsets = [0, 128], sizes = [8, 64], strides = [1, 1]} : vector<8x256xf32> to vector<8x64xf32>
    %373 = vector.extract_strided_slice %369 {offsets = [0, 192], sizes = [8, 64], strides = [1, 1]} : vector<8x256xf32> to vector<8x64xf32>
    %374 = arith.mulf %371, %358 : vector<8x64xf32>
    %375 = arith.mulf %370, %372 : vector<8x64xf32>
    %376 = arith.addf %374, %375 : vector<8x64xf32>
    %377 = math.tanh %376 : vector<8x64xf32>
    %378 = arith.mulf %373, %377 : vector<8x64xf32>
    %c48_136 = arith.constant 48 : index
    %c0_137 = arith.constant 0 : index
    %379 = vector.load %arg5[%c48_136, %c0_137] : memref<64x256xf32, #tpu.memory_space<vmem>>, vector<8x256xf32>
    %c8_138 = arith.constant 8 : index
    %c0_139 = arith.constant 0 : index
    %380 = vector.load %arg5[%c8_138, %c0_139] : memref<64x256xf32, #tpu.memory_space<vmem>>, vector<8x256xf32>
    %381 = arith.select %95, %379, %380 : vector<8x256xi1>, vector<8x256xf32>
    %cst_140 = arith.constant dense<0.000000e+00> : vector<8x256xf32>
    %382 = tpu.matmul %378, %268, %cst_140 {dimension_numbers = #tpu.dot_dimension_numbers<[1], [0], [0], [1], [0, 0, 1, 1], [], []>} : vector<8x64xf32>, vector<64x256xf32>, vector<8x256xf32> -> vector<8x256xf32>
    %383 = arith.addf %382, %381 : vector<8x256xf32>
    %384 = arith.mulf %74, %383 : vector<8x256xf32>
    %385 = math.tanh %384 : vector<8x256xf32>
    %386 = arith.mulf %74, %385 : vector<8x256xf32>
    %387 = arith.addf %386, %77 : vector<8x256xf32>
    %388 = vector.extract_strided_slice %387 {offsets = [0, 0], sizes = [8, 64], strides = [1, 1]} : vector<8x256xf32> to vector<8x64xf32>
    %389 = vector.extract_strided_slice %387 {offsets = [0, 64], sizes = [8, 64], strides = [1, 1]} : vector<8x256xf32> to vector<8x64xf32>
    %390 = vector.extract_strided_slice %387 {offsets = [0, 128], sizes = [8, 64], strides = [1, 1]} : vector<8x256xf32> to vector<8x64xf32>
    %391 = vector.extract_strided_slice %387 {offsets = [0, 192], sizes = [8, 64], strides = [1, 1]} : vector<8x256xf32> to vector<8x64xf32>
    %392 = arith.mulf %389, %376 : vector<8x64xf32>
    %393 = arith.mulf %388, %390 : vector<8x64xf32>
    %394 = arith.addf %392, %393 : vector<8x64xf32>
    %395 = math.tanh %394 : vector<8x64xf32>
    %396 = arith.mulf %391, %395 : vector<8x64xf32>
    %c56_141 = arith.constant 56 : index
    %c0_142 = arith.constant 0 : index
    %397 = vector.load %arg5[%c56_141, %c0_142] : memref<64x256xf32, #tpu.memory_space<vmem>>, vector<8x256xf32>
    %c0_143 = arith.constant 0 : index
    %c0_144 = arith.constant 0 : index
    %398 = vector.load %arg5[%c0_143, %c0_144] : memref<64x256xf32, #tpu.memory_space<vmem>>, vector<8x256xf32>
    %399 = arith.select %95, %397, %398 : vector<8x256xi1>, vector<8x256xf32>
    %cst_145 = arith.constant dense<0.000000e+00> : vector<8x256xf32>
    %400 = tpu.matmul %396, %268, %cst_145 {dimension_numbers = #tpu.dot_dimension_numbers<[1], [0], [0], [1], [0, 0, 1, 1], [], []>} : vector<8x64xf32>, vector<64x256xf32>, vector<8x256xf32> -> vector<8x256xf32>
    %401 = arith.addf %400, %399 : vector<8x256xf32>
    %402 = arith.mulf %74, %401 : vector<8x256xf32>
    %403 = math.tanh %402 : vector<8x256xf32>
    %404 = arith.mulf %74, %403 : vector<8x256xf32>
    %405 = arith.addf %404, %77 : vector<8x256xf32>
    %406 = vector.extract_strided_slice %405 {offsets = [0, 0], sizes = [8, 64], strides = [1, 1]} : vector<8x256xf32> to vector<8x64xf32>
    %407 = vector.extract_strided_slice %405 {offsets = [0, 64], sizes = [8, 64], strides = [1, 1]} : vector<8x256xf32> to vector<8x64xf32>
    %408 = vector.extract_strided_slice %405 {offsets = [0, 128], sizes = [8, 64], strides = [1, 1]} : vector<8x256xf32> to vector<8x64xf32>
    %409 = vector.extract_strided_slice %405 {offsets = [0, 192], sizes = [8, 64], strides = [1, 1]} : vector<8x256xf32> to vector<8x64xf32>
    %410 = arith.mulf %407, %394 : vector<8x64xf32>
    %411 = arith.mulf %406, %408 : vector<8x64xf32>
    %412 = arith.addf %410, %411 : vector<8x64xf32>
    %413 = math.tanh %412 : vector<8x64xf32>
    %414 = arith.mulf %409, %413 : vector<8x64xf32>
    %415 = arith.select %98, %288, %414 : vector<8x64xi1>, vector<8x64xf32>
    %416 = arith.select %98, %414, %288 : vector<8x64xi1>, vector<8x64xf32>
    %417 = tpu.concatenate %415, %416 in 1 : vector<8x64xf32>, vector<8x64xf32> -> vector<8x128xf32>
    %c240 = arith.constant 240 : index
    %c0_146 = arith.constant 0 : index
    %418 = vector.load %arg2[%c240, %c0_146] : memref<376x256xf32, #tpu.memory_space<vmem>>, vector<128x128xf32>
    %c368 = arith.constant 368 : index
    %c0_147 = arith.constant 0 : index
    %419 = vector.load %arg2[%c368, %c0_147] : memref<376x256xf32, #tpu.memory_space<vmem>>, vector<1x128xf32>
    %cst_148 = arith.constant dense<0.000000e+00> : vector<8x128xf32>
    %420 = tpu.matmul %417, %418, %cst_148 {dimension_numbers = #tpu.dot_dimension_numbers<[1], [0], [0], [1], [0, 0, 1, 1], [], []>} : vector<8x128xf32>, vector<128x128xf32>, vector<8x128xf32> -> vector<8x128xf32>
    %421 = vector.broadcast %419 : vector<1x128xf32> to vector<8x128xf32>
    %422 = arith.addf %420, %421 : vector<8x128xf32>
    %423 = vector.extract_strided_slice %422 {offsets = [0, 0], sizes = [2, 2], strides = [1, 1]} : vector<8x128xf32> to vector<2x2xf32>
    %c0_149 = arith.constant 0 : index
    %c0_150 = arith.constant 0 : index
    %424 = vector.load %arg3[%c0_149, %c0_150] : memref<2x2xf32, #tpu.memory_space<vmem>>, vector<2x2xf32>
    tpu.vector_store %arg3[%c0_149, %c0_150], %423 {strides = array<i32>} : memref<2x2xf32, #tpu.memory_space<vmem>>, vector<2x2xf32>,
    return
  }
}

</mosaic_0001>

<llo_original>
// kernel: model_forward.1
$region0: #{model_forward.1}
  #allocation0 [shape = 'u32[]', space=smem, size = 0x4, offset = 0x4, fixed_abs, tag = 'smem constant byte address 0x4 - core index']
  #allocation1 [shape = 'u32[144,128]{1,0:T(1,128)}', space=vmem, size = 0x12000, scoped, tag = 'internal scratch']
  #allocation2 [shape = 'f32[64,32]{1,0:T(8,128)}', space=vmem, size = 0x8000, scoped, tag = 'scratch operand']
  #allocation3 [shape = 'f32[64,256]{1,0:T(8,128)}', space=vmem, size = 0x10000, scoped, tag = 'scratch operand']
  %s0 = inlined_call_operand.vmem [shape: s32[16], index: 0, kind: input, shape index: {}]
  %s1 = inlined_call_operand.vmem [shape: f32[56,32], index: 1, kind: input, shape index: {}]
  %s2 = inlined_call_operand.hbm [shape: f32[376,256], index: 2, kind: input, shape index: {}]
  %s3 = inlined_call_operand.hbm [shape: f32[2,2], index: 3, kind: output, shape index: {}]
  %s4 = sld [smem:[#allocation0]]
  $region30: #{model_forward.1} parent=0
    _
  %s6 = ssub.s32 1, %s4
  %s7 = scalar_select 0, %s6, %s4
  $region1: #{model_forward.1} parent=0
    #allocation4 [shape = 'u8[512]{0}', space=smem, size = 0x200, scoped, tag = 'input window, operand 0, single buffered']
    #allocation5 [shape = 's32[1]{0}', space=sflag, size = 0x4, scoped, tag = 'scoped memory for model_forward.1']
    #allocation6 [shape = 's32[1]{0}', space=sflag, size = 0x4, scoped, tag = 'scoped memory for model_forward.1']
    #allocation7 [shape = 's32[1]{0}', space=sflag, size = 0x4, scoped, tag = 'scoped memory for model_forward.1']
    #allocation8 [shape = 'u8[385024]{0}', space=vmem, size = 0x5e000, scoped, tag = 'input window, operand 2, single buffered']
    #allocation9 [shape = 'u8[1024]{0}', space=vmem, size = 0x400, scoped, tag = 'output window, operand 0, single buffered']
    %8 = vsyncpa [#allocation7], 0
    %9 = vsyncpa [#allocation5], 0
    %10 = vsyncpa [#allocation6], 0
    // Predicated region
    $region2: #{model_forward.1} parent=1 // pred_check
      _
    $region3: #{model_forward.1} parent=1 // pred_check_branch
      %12 = sbr.rel (0) target = $region5
    $region4: #{model_forward.1} parent=1 // pred_region
      %s14 = ssub.s32 16, 16
      %15 = vsyncadd [#allocation7], %s14
      %s17 = sshll.u32 %s0, 4
      %s18 = int_to_ptr.vmem [resolvable:$true] %s17
      %20 = dma.vmem_to_smem %s18, 16, [#allocation4], [#allocation7]
    $region5: #{model_forward.1} parent=1 // pred_fallthru
      _
    // Predicated region
    $region6: #{model_forward.1} parent=1 // pred_check
      _
    $region7: #{model_forward.1} parent=1 // pred_check_branch
      %22 = sbr.rel (0) target = $region9
    $region8: #{model_forward.1} parent=1 // pred_region
      _
    $region9: #{model_forward.1} parent=1 // pred_fallthru
      _
    // Predicated region
    $region10: #{model_forward.1} parent=1 // pred_check
      _
    $region11: #{model_forward.1} parent=1 // pred_check_branch
      %24 = sbr.rel (0) target = $region13
    $region12: #{model_forward.1} parent=1 // pred_region
      %s26 = ssub.s32 12032, 12032
      %27 = vsyncadd [#allocation5], %s26
      %s28 = sshll.u32 [#allocation8], 4
      %s29 = int_to_ptr.vmem [resolvable:$true] %s28
      %34 = dma.hbm_to_vmem [thread:$0]  %s2, 12032, %s29, [#allocation5], 256, 256, 16
    $region13: #{model_forward.1} parent=1 // pred_fallthru
      _
    // Predicated region
    $region14: #{model_forward.1} parent=1 // pred_check
      _
    $region15: #{model_forward.1} parent=1 // pred_check_branch
      %36 = sbr.rel (0) target = $region17
    $region16: #{model_forward.1} parent=1 // pred_region
      %37 = dma.done [#allocation7], 16
    $region17: #{model_forward.1} parent=1 // pred_fallthru
      _
    // Predicated region
    $region18: #{model_forward.1} parent=1 // pred_check
      _
    $region19: #{model_forward.1} parent=1 // pred_check_branch
      %39 = sbr.rel (0) target = $region21
    $region20: #{model_forward.1} parent=1 // pred_region
      %40 = dma.done [#allocation5], 12032
    $region21: #{model_forward.1} parent=1 // pred_fallthru
      _
    %41 = sfence
    %vm42 = vcmask 261120
    %43 = vst.msk [vmem:[#allocation2] sm:$0xff] %vm42, 0.0
    %44 = vst.msk [vmem:[#allocation2 + $0x8] sm:$0xff] %vm42, 0.0
    %45 = vst.msk [vmem:[#allocation2 + $0x10] sm:$0xff] %vm42, 0.0
    %46 = vst.msk [vmem:[#allocation2 + $0x18] sm:$0xff] %vm42, 0.0
    %47 = vst.msk [vmem:[#allocation2 + $0x20] sm:$0xff] %vm42, 0.0
    %48 = vst.msk [vmem:[#allocation2 + $0x28] sm:$0xff] %vm42, 0.0
    %49 = vst.msk [vmem:[#allocation2 + $0x30] sm:$0xff] %vm42, 0.0
    %50 = vst.msk [vmem:[#allocation2 + $0x38] sm:$0xff] %vm42, 0.0
    %s51 = sld [smem:[#allocation4]]
    %s52 = scalar_lea.vmem %s1, %s51
    %v53 = vld [vmem:[%s52] sm:$0x1]
    %vm54 = vcmask 253952
    %55 = vst.msk [vmem:[#allocation2] sm:$0x1] %vm54, %v53
    %s56 = sld [smem:[#allocation4 + $0x8]]
    %s57 = scalar_lea.vmem %s1, %s56
    %v58 = vld [vmem:[%s57] sm:$0x1]
    %59 = vst.msk [vmem:[#allocation2 + $0x1] sm:$0x1] %vm54, %v58
    %s60 = sld [smem:[#allocation4 + $0x1]]
    %s61 = scalar_lea.vmem %s1, %s60
    %v62 = vld [vmem:[%s61] sm:$0x1]
    %63 = vst.msk [vmem:[#allocation2 + $0x8] sm:$0x1] %vm54, %v62
    %s64 = sld [smem:[#allocation4 + $0x9]]
    %s65 = scalar_lea.vmem %s1, %s64
    %v66 = vld [vmem:[%s65] sm:$0x1]
    %67 = vst.msk [vmem:[#allocation2 + $0x9] sm:$0x1] %vm54, %v66
    %s68 = sld [smem:[#allocation4 + $0x2]]
    %s69 = scalar_lea.vmem %s1, %s68
    %v70 = vld [vmem:[%s69] sm:$0x1]
    %71 = vst.msk [vmem:[#allocation2 + $0x10] sm:$0x1] %vm54, %v70
    %s72 = sld [smem:[#allocation4 + $0xa]]
    %s73 = scalar_lea.vmem %s1, %s72
    %v74 = vld [vmem:[%s73] sm:$0x1]
    %75 = vst.msk [vmem:[#allocation2 + $0x11] sm:$0x1] %vm54, %v74
    %s76 = sld [smem:[#allocation4 + $0x3]]
    %s77 = scalar_lea.vmem %s1, %s76
    %v78 = vld [vmem:[%s77] sm:$0x1]
    %79 = vst.msk [vmem:[#allocation2 + $0x18] sm:$0x1] %vm54, %v78
    %s80 = sld [smem:[#allocation4 + $0xb]]
    %s81 = scalar_lea.vmem %s1, %s80
    %v82 = vld [vmem:[%s81] sm:$0x1]
    %83 = vst.msk [vmem:[#allocation2 + $0x19] sm:$0x1] %vm54, %v82
    %s84 = sld [smem:[#allocation4 + $0x4]]
    %s85 = scalar_lea.vmem %s1, %s84
    %v86 = vld [vmem:[%s85] sm:$0x1]
    %87 = vst.msk [vmem:[#allocation2 + $0x20] sm:$0x1] %vm54, %v86
    %s88 = sld [smem:[#allocation4 + $0xc]]
    %s89 = scalar_lea.vmem %s1, %s88
    %v90 = vld [vmem:[%s89] sm:$0x1]
    %91 = vst.msk [vmem:[#allocation2 + $0x21] sm:$0x1] %vm54, %v90
    %s92 = sld [smem:[#allocation4 + $0x5]]
    %s93 = scalar_lea.vmem %s1, %s92
    %v94 = vld [vmem:[%s93] sm:$0x1]
    %95 = vst.msk [vmem:[#allocation2 + $0x28] sm:$0x1] %vm54, %v94
    %s96 = sld [smem:[#allocation4 + $0xd]]
    %s97 = scalar_lea.vmem %s1, %s96
    %v98 = vld [vmem:[%s97] sm:$0x1]
    %99 = vst.msk [vmem:[#allocation2 + $0x29] sm:$0x1] %vm54, %v98
    %s100 = sld [smem:[#allocation4 + $0x6]]
    %s101 = scalar_lea.vmem %s1, %s100
    %v102 = vld [vmem:[%s101] sm:$0x1]
    %103 = vst.msk [vmem:[#allocation2 + $0x30] sm:$0x1] %vm54, %v102
    %s104 = sld [smem:[#allocation4 + $0xe]]
    %s105 = scalar_lea.vmem %s1, %s104
    %v106 = vld [vmem:[%s105] sm:$0x1]
    %107 = vst.msk [vmem:[#allocation2 + $0x31] sm:$0x1] %vm54, %v106
    %s108 = sld [smem:[#allocation4 + $0x7]]
    %s109 = scalar_lea.vmem %s1, %s108
    %v110 = vld [vmem:[%s109] sm:$0x1]
    %111 = vst.msk [vmem:[#allocation2 + $0x38] sm:$0x1] %vm54, %v110
    %s112 = sld [smem:[#allocation4 + $0xf]]
    %s113 = scalar_lea.vmem %s1, %s112
    %v114 = vld [vmem:[%s113] sm:$0x1]
    %115 = vst.msk [vmem:[#allocation2 + $0x39] sm:$0x1] %vm54, %v114
    %v116 = vlaneseq
    %v117 = vand.u32 %v116, 127
    %v118 = vadd.s32 %v117, 128
    %vm119 = vcmp.ge.s32.totalorder %v117, 128
    %vm120 = vcmp.ge.s32.totalorder %v118, 128
    %vm121 = vcmp.lt.s32.totalorder %v117, 192
    %vm122 = vcmp.lt.s32.totalorder %v118, 192
    %vm123 = vmand %vm119, %vm121
    %vm124 = vmand %vm120, %vm122
    %v125 = vsel %vm123, 1.0, 0.5
    %v126 = vsel %vm124, 1.0, 0.5
    %v127 = vsel %vm123, 0.0, 0.5
    %v128 = vsel %vm124, 0.0, 0.5
    %vm129 = vcmp.lt.s32.totalorder %v117, 0
    %v130 = vsub.s32 0, %v117
    %v131 = vsel %vm129, %v130, %v117
    %v132 = vshrl.u32 %v131, 6
    %v133 = vand.u32 %v131, 63
    %v134 = vsub.s32 0, %v133
    %v135 = vsel %vm129, %v134, %v133
    %vm136 = vcmp.lt.s32.totalorder %v118, 0
    %v137 = vsub.s32 0, %v118
    %v138 = vsel %vm136, %v137, %v118
    %v139 = vshrl.u32 %v138, 6
    %v140 = vand.u32 %v138, 63
    %v141 = vsub.s32 0, %v140
    %v142 = vsel %vm136, %v141, %v140
    %vm143 = vcmp.ne.s32.totalorder %v135, 0
    %vm144 = vcmp.ne.s32.totalorder %v142, 0
    %vm145 = vcmp.lt.s32.totalorder %v135, 0
    %vm146 = vcmp.lt.s32.totalorder %v142, 0
    %vm147 = vmand %vm145, %vm143
    %vm148 = vmand %vm146, %vm144
    %v149 = vadd.s32 %v135, 64
    %v150 = vadd.s32 %v142, 64
    %v151 = vsel %vm147, %v149, %v135
    %v152 = vsel %vm148, %v150, %v142
    %vm153 = vcmp.lt.s32.totalorder %v151, 32
    %vm154 = vcmp.lt.s32.totalorder %v152, 32
    %vm155 = vcmp.lt.s32.totalorder %v117, 32
    %v156 = vld [vmem:[#allocation2] sm:$0xff]
    %v157 = vld [vmem:[#allocation2 + $0x8] sm:$0xff]
    %v158 = vld [vmem:[#allocation2 + $0x10] sm:$0xff]
    %v159 = vld [vmem:[#allocation2 + $0x18] sm:$0xff]
    %v160 = vld [vmem:[#allocation2 + $0x20] sm:$0xff]
    %v161 = vld [vmem:[#allocation2 + $0x28] sm:$0xff]
    %v162 = vld [vmem:[#allocation2 + $0x30] sm:$0xff]
    %v163 = vld [vmem:[#allocation2 + $0x38] sm:$0xff]
    %v164 = vld [vmem:[#allocation8] sm:$0xff]
    %v165 = vld [vmem:[#allocation8 + $0x8] sm:$0xff]
    %v166 = vld [vmem:[#allocation8 + $0x10] sm:$0xff]
    %v167 = vld [vmem:[#allocation8 + $0x18] sm:$0xff]
    %v168 = vld [vmem:[#allocation8 + $0x20] sm:$0xff]
    %v169 = vld [vmem:[#allocation8 + $0x28] sm:$0xff]
    %v170 = vld [vmem:[#allocation8 + $0x30] sm:$0xff]
    %v171 = vld [vmem:[#allocation8 + $0x38] sm:$0xff]
    %s172 = scalar_lea.vmem [#allocation8], 192
    %v173 = vld [vmem:[%s172] ss:$8 sm:$0x3]
    %v175 = vlaneseq
    %v176 = vshrl.u32 %v175, 7
    %v177 = vsub.s32 0, %v176
    %v178 = vrot.slane %v173, %v177
    %v179 = vlaneseq
    %v180 = vshrl.u32 %v179, 7
    %v181 = vsub.s32 1, %v180
    %v182 = vrot.slane %v173, %v181
    %v186 = vsel %vm42, %v156, 0
    %v189 = vsel %vm42, %v157, 0
    %v192 = vsel %vm42, %v158, 0
    %v195 = vsel %vm42, %v159, 0
    %v198 = vsel %vm42, %v160, 0
    %v201 = vsel %vm42, %v161, 0
    %v204 = vsel %vm42, %v162, 0
    %v207 = vsel %vm42, %v163, 0
    %209 = vmatprep.subr.mxu0 %v165
    %210 = vmatpush1.msra.mxu0 %v164
    %211 = vmatprep.subr.mxu0 %v167
    %212 = vmatpush1.msra.mxu0 %v166
    %213 = vmatprep.subr.mxu0 %v169
    %214 = vmatpush1.msra.mxu0 %v168
    %215 = vmatprep.subr.mxu0 %v171
    %216 = vmatpush1.msra.mxu0 %v170
    %217 = vmatprep.subr.mxu0 0.0
    %218 = vmatpush1.msra.mxu0 0.0
    %219 = vmatprep.subr.mxu0 0.0
    %220 = vmatpush1.msra.mxu0 0.0
    %221 = vmatprep.subr.mxu0 0.0
    %222 = vmatpush1.msra.mxu0 0.0
    %223 = vmatprep.subr.mxu0 0.0
    %224 = vmatpush1.msra.mxu0 0.0
    %225 = vmatprep.subr.mxu0 0.0
    %226 = vmatpush1.msra.mxu0 0.0
    %227 = vmatprep.subr.mxu0 0.0
    %228 = vmatpush1.msra.mxu0 0.0
    %229 = vmatprep.subr.mxu0 0.0
    %230 = vmatpush1.msra.mxu0 0.0
    %231 = vmatprep.subr.mxu0 0.0
    %232 = vmatpush1.msra.mxu0 0.0
    %233 = vmatprep.subr.mxu0 0.0
    %234 = vmatpush1.msra.mxu0 0.0
    %235 = vmatprep.subr.mxu0 0.0
    %236 = vmatpush1.msra.mxu0 0.0
    %237 = vmatprep.subr.mxu0 0.0
    %238 = vmatpush1.msra.mxu0 0.0
    %239 = vmatprep.subr.mxu0 0.0
    %240 = vmatpush1.msra.mxu0 0.0
    %241 = vmatprep.subr.mxu0 0.0
    %242 = vmatpush1.msra.mxu0 0.0
    %243 = vmatprep.subr.mxu0 0.0
    %244 = vmatpush1.msra.mxu0 0.0
    %245 = vmatprep.subr.mxu0 0.0
    %246 = vmatpush1.msra.mxu0 0.0
    %247 = vmatprep.subr.mxu0 0.0
    %248 = vmatpush1.msra.mxu0 0.0
    %249 = vmatprep.subr.mxu0 0.0
    %250 = vmatpush1.msra.mxu0 0.0
    %251 = vmatprep.subr.mxu0 0.0
    %252 = vmatpush1.msra.mxu0 0.0
    %253 = vmatprep.subr.mxu0 0.0
    %254 = vmatpush1.msra.mxu0 0.0
    %255 = vmatprep.subr.mxu0 0.0
    %256 = vmatpush1.msra.mxu0 0.0
    %257 = vmatprep.subr.mxu0 0.0
    %258 = vmatpush1.msra.mxu0 0.0
    %259 = vmatprep.subr.mxu0 0.0
    %260 = vmatpush1.msra.mxu0 0.0
    %261 = vmatprep.subr.mxu0 0.0
    %262 = vmatpush1.msra.mxu0 0.0
    %263 = vmatprep.subr.mxu0 0.0
    %264 = vmatpush1.msra.mxu0 0.0
    %265 = vmatprep.subr.mxu0 0.0
    %266 = vmatpush1.msra.mxu0 0.0
    %267 = vmatprep.subr.mxu0 0.0
    %268 = vmatpush1.msra.mxu0 0.0
    %269 = vmatprep.subr.mxu0 0.0
    %270 = vmatpush1.msra.mxu0 0.0
    %271 = vmatprep.subr.mxu0 0.0
    %272 = vmatpush1.msra.mxu0 0.0
    %273 = vmatprep.mubr.f32.mxu0 0.0
    %274 = vmatmul.mubr.f32.gmra.mrb[0].mxu0 %v186
    %v275 = vpop.f32.mrb[0].mxu0
    %v276 = vadd.f32 %v178, %v275
    %v277 = vpop.f32.mrb[0].mxu0
    %v278 = vadd.f32 %v182, %v277
    %279 = vmatprep.mubr.f32.mxu0 0.0
    %280 = vmatmul.mubr.f32.gmra.mrb[0].mxu0 %v189
    %v281 = vpop.f32.mrb[0].mxu0
    %v282 = vadd.f32 %v178, %v281
    %v283 = vpop.f32.mrb[0].mxu0
    %v284 = vadd.f32 %v182, %v283
    %285 = vmatprep.mubr.f32.mxu0 0.0
    %286 = vmatmul.mubr.f32.gmra.mrb[0].mxu0 %v192
    %v287 = vpop.f32.mrb[0].mxu0
    %v288 = vadd.f32 %v178, %v287
    %v289 = vpop.f32.mrb[0].mxu0
    %v290 = vadd.f32 %v182, %v289
    %291 = vmatprep.mubr.f32.mxu0 0.0
    %292 = vmatmul.mubr.f32.gmra.mrb[0].mxu0 %v195
    %v293 = vpop.f32.mrb[0].mxu0
    %v294 = vadd.f32 %v178, %v293
    %v295 = vpop.f32.mrb[0].mxu0
    %v296 = vadd.f32 %v182, %v295
    %297 = vmatprep.mubr.f32.mxu0 0.0
    %298 = vmatmul.mubr.f32.gmra.mrb[0].mxu0 %v198
    %v299 = vpop.f32.mrb[0].mxu0
    %v300 = vadd.f32 %v178, %v299
    %v301 = vpop.f32.mrb[0].mxu0
    %v302 = vadd.f32 %v182, %v301
    %303 = vmatprep.mubr.f32.mxu0 0.0
    %304 = vmatmul.mubr.f32.gmra.mrb[0].mxu0 %v201
    %v305 = vpop.f32.mrb[0].mxu0
    %v306 = vadd.f32 %v178, %v305
    %v307 = vpop.f32.mrb[0].mxu0
    %v308 = vadd.f32 %v182, %v307
    %309 = vmatprep.mubr.f32.mxu0 0.0
    %310 = vmatmul.mubr.f32.gmra.mrb[0].mxu0 %v204
    %v311 = vpop.f32.mrb[0].mxu0
    %v312 = vadd.f32 %v178, %v311
    %v313 = vpop.f32.mrb[0].mxu0
    %v314 = vadd.f32 %v182, %v313
    %315 = vmatprep.mubr.f32.mxu0 0.0
    %316 = vmatmul.mubr.f32.gmra.mrb[0].mxu0 %v207
    %v317 = vpop.f32.mrb[0].mxu0
    %v318 = vadd.f32 %v178, %v317
    %v319 = vpop.f32.mrb[0].mxu0
    %v320 = vadd.f32 %v182, %v319
    %321 = vdwg.mxu0
    %322 = vst [vmem:[#allocation3] sm:$0xff] %v276
    %323 = vst [vmem:[#allocation3 + $0x8] sm:$0xff] %v278
    %324 = vst [vmem:[#allocation3 + $0x10] sm:$0xff] %v282
    %325 = vst [vmem:[#allocation3 + $0x18] sm:$0xff] %v284
    %326 = vst [vmem:[#allocation3 + $0x20] sm:$0xff] %v288
    %327 = vst [vmem:[#allocation3 + $0x28] sm:$0xff] %v290
    %328 = vst [vmem:[#allocation3 + $0x30] sm:$0xff] %v294
    %329 = vst [vmem:[#allocation3 + $0x38] sm:$0xff] %v296
    %330 = vst [vmem:[#allocation3 + $0x40] sm:$0xff] %v300
    %331 = vst [vmem:[#allocation3 + $0x48] sm:$0xff] %v302
    %332 = vst [vmem:[#allocation3 + $0x50] sm:$0xff] %v306
    %333 = vst [vmem:[#allocation3 + $0x58] sm:$0xff] %v308
    %334 = vst [vmem:[#allocation3 + $0x60] sm:$0xff] %v312
    %335 = vst [vmem:[#allocation3 + $0x68] sm:$0xff] %v314
    %336 = vst [vmem:[#allocation3 + $0x70] sm:$0xff] %v318
    %337 = vst [vmem:[#allocation3 + $0x78] sm:$0xff] %v320
    %v338 = vld [vmem:[#allocation8 + $0x40] sm:$0xff]
    %v339 = vld [vmem:[#allocation8 + $0x48] sm:$0xff]
    %v340 = vld [vmem:[#allocation8 + $0x50] sm:$0xff]
    %v341 = vld [vmem:[#allocation8 + $0x58] sm:$0xff]
    %v342 = vld [vmem:[#allocation8 + $0x60] sm:$0xff]
    %v343 = vld [vmem:[#allocation8 + $0x68] sm:$0xff]
    %v344 = vld [vmem:[#allocation8 + $0x70] sm:$0xff]
    %v345 = vld [vmem:[#allocation8 + $0x78] sm:$0xff]
    %v346 = vld [vmem:[#allocation8 + $0x80] sm:$0xff]
    %v347 = vld [vmem:[#allocation8 + $0x88] sm:$0xff]
    %v348 = vld [vmem:[#allocation8 + $0x90] sm:$0xff]
    %v349 = vld [vmem:[#allocation8 + $0x98] sm:$0xff]
    %v350 = vld [vmem:[#allocation8 + $0xa0] sm:$0xff]
    %v351 = vld [vmem:[#allocation8 + $0xa8] sm:$0xff]
    %v352 = vld [vmem:[#allocation8 + $0xb0] sm:$0xff]
    %v353 = vld [vmem:[#allocation8 + $0xb8] sm:$0xff]
    %v354 = vld [vmem:[#allocation3] sm:$0xff]
    %v355 = vld [vmem:[#allocation3 + $0x8] sm:$0xff]
    %v356 = vld [vmem:[#allocation3 + $0x70] sm:$0xff]
    %v357 = vld [vmem:[#allocation3 + $0x78] sm:$0xff]
    %v358 = vsel %vm153, %v354, %v356
    %v359 = vsel %vm154, %v355, %v357
    %vm360 = vcmask 523264
    %v362 = vsel %vm360, 0.0, 0
    %364 = vmatprep.subr.mxu0 %v339
    %365 = vmatpush1.msra.mxu0 %v338
    %366 = vmatprep.subr.mxu0 %v341
    %367 = vmatpush1.msra.mxu0 %v340
    %368 = vmatprep.subr.mxu0 %v343
    %369 = vmatpush1.msra.mxu0 %v342
    %370 = vmatprep.subr.mxu0 %v345
    %371 = vmatpush1.msra.mxu0 %v344
    %372 = vmatprep.subr.mxu0 %v347
    %373 = vmatpush1.msra.mxu0 %v346
    %374 = vmatprep.subr.mxu0 %v349
    %375 = vmatpush1.msra.mxu0 %v348
    %376 = vmatprep.subr.mxu0 %v351
    %377 = vmatpush1.msra.mxu0 %v350
    %378 = vmatprep.subr.mxu0 %v353
    %379 = vmatpush1.msra.mxu0 %v352
    %380 = vmatprep.subr.mxu0 0.0
    %381 = vmatpush1.msra.mxu0 0.0
    %382 = vmatprep.subr.mxu0 0.0
    %383 = vmatpush1.msra.mxu0 0.0
    %384 = vmatprep.subr.mxu0 0.0
    %385 = vmatpush1.msra.mxu0 0.0
    %386 = vmatprep.subr.mxu0 0.0
    %387 = vmatpush1.msra.mxu0 0.0
    %388 = vmatprep.subr.mxu0 0.0
    %389 = vmatpush1.msra.mxu0 0.0
    %390 = vmatprep.subr.mxu0 0.0
    %391 = vmatpush1.msra.mxu0 0.0
    %392 = vmatprep.subr.mxu0 0.0
    %393 = vmatpush1.msra.mxu0 0.0
    %394 = vmatprep.subr.mxu0 0.0
    %395 = vmatpush1.msra.mxu0 0.0
    %396 = vmatprep.subr.mxu0 0.0
    %397 = vmatpush1.msra.mxu0 0.0
    %398 = vmatprep.subr.mxu0 0.0
    %399 = vmatpush1.msra.mxu0 0.0
    %400 = vmatprep.subr.mxu0 0.0
    %401 = vmatpush1.msra.mxu0 0.0
    %402 = vmatprep.subr.mxu0 0.0
    %403 = vmatpush1.msra.mxu0 0.0
    %404 = vmatprep.subr.mxu0 0.0
    %405 = vmatpush1.msra.mxu0 0.0
    %406 = vmatprep.subr.mxu0 0.0
    %407 = vmatpush1.msra.mxu0 0.0
    %408 = vmatprep.subr.mxu0 0.0
    %409 = vmatpush1.msra.mxu0 0.0
    %410 = vmatprep.subr.mxu0 0.0
    %411 = vmatpush1.msra.mxu0 0.0
    %412 = vmatprep.subr.mxu0 0.0
    %413 = vmatpush1.msra.mxu0 0.0
    %414 = vmatprep.subr.mxu0 0.0
    %415 = vmatpush1.msra.mxu0 0.0
    %416 = vmatprep.subr.mxu0 0.0
    %417 = vmatpush1.msra.mxu0 0.0
    %418 = vmatprep.subr.mxu0 0.0
    %419 = vmatpush1.msra.mxu0 0.0
    %420 = vmatprep.subr.mxu0 0.0
    %421 = vmatpush1.msra.mxu0 0.0
    %422 = vmatprep.subr.mxu0 0.0
    %423 = vmatpush1.msra.mxu0 0.0
    %424 = vmatprep.subr.mxu0 0.0
    %425 = vmatpush1.msra.mxu0 0.0
    %426 = vmatprep.subr.mxu0 0.0
    %427 = vmatpush1.msra.mxu0 0.0
    %428 = vmatprep.mubr.f32.mxu0 0.0
    %429 = vmatmul.mubr.f32.gmra.mrb[0].mxu0 %v362
    %v430 = vpop.f32.mrb[0].mxu0
    %v431 = vadd.f32 %v358, %v430
    %v432 = vpop.f32.mrb[0].mxu0
    %v433 = vadd.f32 %v359, %v432
    %434 = vdwg.mxu0
    %v435 = vmul.f32 %v125, %v431
    %v436 = vmul.f32 %v126, %v433
    %v437 = vtanh.pop %v435
    %v438 = vtanh.pop %v436
    %v439 = vmul.f32 %v125, %v437
    %v440 = vmul.f32 %v126, %v438
    %v441 = vadd.f32 %v439, %v127
    %v442 = vadd.f32 %v440, %v128
    %v443 = vmul.f32 %v441, 0.0
    %v444 = vmul.f32 %v441, %v442
    %446 = vrot.lane.b32.xlu0 %v444, 64
    %v447 = vpop.permute.xlu0 %446
    %v449 = vadd.f32 %v443, %v447
    %v450 = vtanh.pop %v449
    %v451 = vmul.f32 %v442, %v450
    %v452 = vld [vmem:[#allocation3 + $0x10] sm:$0xff]
    %v453 = vld [vmem:[#allocation3 + $0x18] sm:$0xff]
    %v454 = vld [vmem:[#allocation3 + $0x60] sm:$0xff]
    %v455 = vld [vmem:[#allocation3 + $0x68] sm:$0xff]
    %v456 = vsel %vm153, %v452, %v454
    %v457 = vsel %vm154, %v453, %v455
    %459 = vrot.lane.b32.xlu0 %v451, 64
    %v460 = vpop.permute.xlu0 %459
    %v461 = vsel %vm360, %v460, 0
    %463 = vmatprep.subr.mxu0 %v339
    %464 = vmatpush1.msra.mxu0 %v338
    %465 = vmatprep.subr.mxu0 %v341
    %466 = vmatpush1.msra.mxu0 %v340
    %467 = vmatprep.subr.mxu0 %v343
    %468 = vmatpush1.msra.mxu0 %v342
    %469 = vmatprep.subr.mxu0 %v345
    %470 = vmatpush1.msra.mxu0 %v344
    %471 = vmatprep.subr.mxu0 %v347
    %472 = vmatpush1.msra.mxu0 %v346
    %473 = vmatprep.subr.mxu0 %v349
    %474 = vmatpush1.msra.mxu0 %v348
    %475 = vmatprep.subr.mxu0 %v351
    %476 = vmatpush1.msra.mxu0 %v350
    %477 = vmatprep.subr.mxu0 %v353
    %478 = vmatpush1.msra.mxu0 %v352
    %479 = vmatprep.subr.mxu0 0.0
    %480 = vmatpush1.msra.mxu0 0.0
    %481 = vmatprep.subr.mxu0 0.0
    %482 = vmatpush1.msra.mxu0 0.0
    %483 = vmatprep.subr.mxu0 0.0
    %484 = vmatpush1.msra.mxu0 0.0
    %485 = vmatprep.subr.mxu0 0.0
    %486 = vmatpush1.msra.mxu0 0.0
    %487 = vmatprep.subr.mxu0 0.0
    %488 = vmatpush1.msra.mxu0 0.0
    %489 = vmatprep.subr.mxu0 0.0
    %490 = vmatpush1.msra.mxu0 0.0
    %491 = vmatprep.subr.mxu0 0.0
    %492 = vmatpush1.msra.mxu0 0.0
    %493 = vmatprep.subr.mxu0 0.0
    %494 = vmatpush1.msra.mxu0 0.0
    %495 = vmatprep.subr.mxu0 0.0
    %496 = vmatpush1.msra.mxu0 0.0
    %497 = vmatprep.subr.mxu0 0.0
    %498 = vmatpush1.msra.mxu0 0.0
    %499 = vmatprep.subr.mxu0 0.0
    %500 = vmatpush1.msra.mxu0 0.0
    %501 = vmatprep.subr.mxu0 0.0
    %502 = vmatpush1.msra.mxu0 0.0
    %503 = vmatprep.subr.mxu0 0.0
    %504 = vmatpush1.msra.mxu0 0.0
    %505 = vmatprep.subr.mxu0 0.0
    %506 = vmatpush1.msra.mxu0 0.0
    %507 = vmatprep.subr.mxu0 0.0
    %508 = vmatpush1.msra.mxu0 0.0
    %509 = vmatprep.subr.mxu0 0.0
    %510 = vmatpush1.msra.mxu0 0.0
    %511 = vmatprep.subr.mxu0 0.0
    %512 = vmatpush1.msra.mxu0 0.0
    %513 = vmatprep.subr.mxu0 0.0
    %514 = vmatpush1.msra.mxu0 0.0
    %515 = vmatprep.subr.mxu0 0.0
    %516 = vmatpush1.msra.mxu0 0.0
    %517 = vmatprep.subr.mxu0 0.0
    %518 = vmatpush1.msra.mxu0 0.0
    %519 = vmatprep.subr.mxu0 0.0
    %520 = vmatpush1.msra.mxu0 0.0
    %521 = vmatprep.subr.mxu0 0.0
    %522 = vmatpush1.msra.mxu0 0.0
    %523 = vmatprep.subr.mxu0 0.0
    %524 = vmatpush1.msra.mxu0 0.0
    %525 = vmatprep.subr.mxu0 0.0
    %526 = vmatpush1.msra.mxu0 0.0
    %527 = vmatprep.mubr.f32.mxu0 0.0
    %528 = vmatmul.mubr.f32.gmra.mrb[0].mxu0 %v461
    %v529 = vpop.f32.mrb[0].mxu0
    %v530 = vadd.f32 %v456, %v529
    %v531 = vpop.f32.mrb[0].mxu0
    %v532 = vadd.f32 %v457, %v531
    %533 = vdwg.mxu0
    %v534 = vmul.f32 %v125, %v530
    %v535 = vmul.f32 %v126, %v532
    %v536 = vtanh.pop %v534
    %v537 = vtanh.pop %v535
    %v538 = vmul.f32 %v125, %v536
    %v539 = vmul.f32 %v126, %v537
    %v540 = vadd.f32 %v538, %v127
    %v541 = vadd.f32 %v539, %v128
    %v542 = vmul.f32 %v540, %v449
    %v543 = vmul.f32 %v540, %v541
    %545 = vrot.lane.b32.xlu0 %v543, 64
    %v546 = vpop.permute.xlu0 %545
    %v548 = vadd.f32 %v542, %v546
    %v549 = vtanh.pop %v548
    %v550 = vmul.f32 %v541, %v549
    %v551 = vld [vmem:[#allocation3 + $0x20] sm:$0xff]
    %v552 = vld [vmem:[#allocation3 + $0x28] sm:$0xff]
    %v553 = vld [vmem:[#allocation3 + $0x50] sm:$0xff]
    %v554 = vld [vmem:[#allocation3 + $0x58] sm:$0xff]
    %v555 = vsel %vm153, %v551, %v553
    %v556 = vsel %vm154, %v552, %v554
    %558 = vrot.lane.b32.xlu0 %v550, 64
    %v559 = vpop.permute.xlu0 %558
    %v560 = vsel %vm360, %v559, 0
    %562 = vmatprep.subr.mxu0 %v339
    %563 = vmatpush1.msra.mxu0 %v338
    %564 = vmatprep.subr.mxu0 %v341
    %565 = vmatpush1.msra.mxu0 %v340
    %566 = vmatprep.subr.mxu0 %v343
    %567 = vmatpush1.msra.mxu0 %v342
    %568 = vmatprep.subr.mxu0 %v345
    %569 = vmatpush1.msra.mxu0 %v344
    %570 = vmatprep.subr.mxu0 %v347
    %571 = vmatpush1.msra.mxu0 %v346
    %572 = vmatprep.subr.mxu0 %v349
    %573 = vmatpush1.msra.mxu0 %v348
    %574 = vmatprep.subr.mxu0 %v351
    %575 = vmatpush1.msra.mxu0 %v350
    %576 = vmatprep.subr.mxu0 %v353
    %577 = vmatpush1.msra.mxu0 %v352
    %578 = vmatprep.subr.mxu0 0.0
    %579 = vmatpush1.msra.mxu0 0.0
    %580 = vmatprep.subr.mxu0 0.0
    %581 = vmatpush1.msra.mxu0 0.0
    %582 = vmatprep.subr.mxu0 0.0
    %583 = vmatpush1.msra.mxu0 0.0
    %584 = vmatprep.subr.mxu0 0.0
    %585 = vmatpush1.msra.mxu0 0.0
    %586 = vmatprep.subr.mxu0 0.0
    %587 = vmatpush1.msra.mxu0 0.0
    %588 = vmatprep.subr.mxu0 0.0
    %589 = vmatpush1.msra.mxu0 0.0
    %590 = vmatprep.subr.mxu0 0.0
    %591 = vmatpush1.msra.mxu0 0.0
    %592 = vmatprep.subr.mxu0 0.0
    %593 = vmatpush1.msra.mxu0 0.0
    %594 = vmatprep.subr.mxu0 0.0
    %595 = vmatpush1.msra.mxu0 0.0
    %596 = vmatprep.subr.mxu0 0.0
    %597 = vmatpush1.msra.mxu0 0.0
    %598 = vmatprep.subr.mxu0 0.0
    %599 = vmatpush1.msra.mxu0 0.0
    %600 = vmatprep.subr.mxu0 0.0
    %601 = vmatpush1.msra.mxu0 0.0
    %602 = vmatprep.subr.mxu0 0.0
    %603 = vmatpush1.msra.mxu0 0.0
    %604 = vmatprep.subr.mxu0 0.0
    %605 = vmatpush1.msra.mxu0 0.0
    %606 = vmatprep.subr.mxu0 0.0
    %607 = vmatpush1.msra.mxu0 0.0
    %608 = vmatprep.subr.mxu0 0.0
    %609 = vmatpush1.msra.mxu0 0.0
    %610 = vmatprep.subr.mxu0 0.0
    %611 = vmatpush1.msra.mxu0 0.0
    %612 = vmatprep.subr.mxu0 0.0
    %613 = vmatpush1.msra.mxu0 0.0
    %614 = vmatprep.subr.mxu0 0.0
    %615 = vmatpush1.msra.mxu0 0.0
    %616 = vmatprep.subr.mxu0 0.0
    %617 = vmatpush1.msra.mxu0 0.0
    %618 = vmatprep.subr.mxu0 0.0
    %619 = vmatpush1.msra.mxu0 0.0
    %620 = vmatprep.subr.mxu0 0.0
    %621 = vmatpush1.msra.mxu0 0.0
    %622 = vmatprep.subr.mxu0 0.0
    %623 = vmatpush1.msra.mxu0 0.0
    %624 = vmatprep.subr.mxu0 0.0
    %625 = vmatpush1.msra.mxu0 0.0
    %626 = vmatprep.mubr.f32.mxu0 0.0
    %627 = vmatmul.mubr.f32.gmra.mrb[0].mxu0 %v560
    %v628 = vpop.f32.mrb[0].mxu0
    %v629 = vadd.f32 %v555, %v628
    %v630 = vpop.f32.mrb[0].mxu0
    %v631 = vadd.f32 %v556, %v630
    %632 = vdwg.mxu0
    %v633 = vmul.f32 %v125, %v629
    %v634 = vmul.f32 %v126, %v631
    %v635 = vtanh.pop %v633
    %v636 = vtanh.pop %v634
    %v637 = vmul.f32 %v125, %v635
    %v638 = vmul.f32 %v126, %v636
    %v639 = vadd.f32 %v637, %v127
    %v640 = vadd.f32 %v638, %v128
    %v641 = vmul.f32 %v639, %v548
    %v642 = vmul.f32 %v639, %v640
    %644 = vrot.lane.b32.xlu0 %v642, 64
    %v645 = vpop.permute.xlu0 %644
    %v647 = vadd.f32 %v641, %v645
    %v648 = vtanh.pop %v647
    %v649 = vmul.f32 %v640, %v648
    %v650 = vld [vmem:[#allocation3 + $0x30] sm:$0xff]
    %v651 = vld [vmem:[#allocation3 + $0x38] sm:$0xff]
    %v652 = vld [vmem:[#allocation3 + $0x40] sm:$0xff]
    %v653 = vld [vmem:[#allocation3 + $0x48] sm:$0xff]
    %v654 = vsel %vm153, %v650, %v652
    %v655 = vsel %vm154, %v651, %v653
    %657 = vrot.lane.b32.xlu0 %v649, 64
    %v658 = vpop.permute.xlu0 %657
    %v659 = vsel %vm360, %v658, 0
    %661 = vmatprep.subr.mxu0 %v339
    %662 = vmatpush1.msra.mxu0 %v338
    %663 = vmatprep.subr.mxu0 %v341
    %664 = vmatpush1.msra.mxu0 %v340
    %665 = vmatprep.subr.mxu0 %v343
    %666 = vmatpush1.msra.mxu0 %v342
    %667 = vmatprep.subr.mxu0 %v345
    %668 = vmatpush1.msra.mxu0 %v344
    %669 = vmatprep.subr.mxu0 %v347
    %670 = vmatpush1.msra.mxu0 %v346
    %671 = vmatprep.subr.mxu0 %v349
    %672 = vmatpush1.msra.mxu0 %v348
    %673 = vmatprep.subr.mxu0 %v351
    %674 = vmatpush1.msra.mxu0 %v350
    %675 = vmatprep.subr.mxu0 %v353
    %676 = vmatpush1.msra.mxu0 %v352
    %677 = vmatprep.subr.mxu0 0.0
    %678 = vmatpush1.msra.mxu0 0.0
    %679 = vmatprep.subr.mxu0 0.0
    %680 = vmatpush1.msra.mxu0 0.0
    %681 = vmatprep.subr.mxu0 0.0
    %682 = vmatpush1.msra.mxu0 0.0
    %683 = vmatprep.subr.mxu0 0.0
    %684 = vmatpush1.msra.mxu0 0.0
    %685 = vmatprep.subr.mxu0 0.0
    %686 = vmatpush1.msra.mxu0 0.0
    %687 = vmatprep.subr.mxu0 0.0
    %688 = vmatpush1.msra.mxu0 0.0
    %689 = vmatprep.subr.mxu0 0.0
    %690 = vmatpush1.msra.mxu0 0.0
    %691 = vmatprep.subr.mxu0 0.0
    %692 = vmatpush1.msra.mxu0 0.0
    %693 = vmatprep.subr.mxu0 0.0
    %694 = vmatpush1.msra.mxu0 0.0
    %695 = vmatprep.subr.mxu0 0.0
    %696 = vmatpush1.msra.mxu0 0.0
    %697 = vmatprep.subr.mxu0 0.0
    %698 = vmatpush1.msra.mxu0 0.0
    %699 = vmatprep.subr.mxu0 0.0
    %700 = vmatpush1.msra.mxu0 0.0
    %701 = vmatprep.subr.mxu0 0.0
    %702 = vmatpush1.msra.mxu0 0.0
    %703 = vmatprep.subr.mxu0 0.0
    %704 = vmatpush1.msra.mxu0 0.0
    %705 = vmatprep.subr.mxu0 0.0
    %706 = vmatpush1.msra.mxu0 0.0
    %707 = vmatprep.subr.mxu0 0.0
    %708 = vmatpush1.msra.mxu0 0.0
    %709 = vmatprep.subr.mxu0 0.0
    %710 = vmatpush1.msra.mxu0 0.0
    %711 = vmatprep.subr.mxu0 0.0
    %712 = vmatpush1.msra.mxu0 0.0
    %713 = vmatprep.subr.mxu0 0.0
    %714 = vmatpush1.msra.mxu0 0.0
    %715 = vmatprep.subr.mxu0 0.0
    %716 = vmatpush1.msra.mxu0 0.0
    %717 = vmatprep.subr.mxu0 0.0
    %718 = vmatpush1.msra.mxu0 0.0
    %719 = vmatprep.subr.mxu0 0.0
    %720 = vmatpush1.msra.mxu0 0.0
    %721 = vmatprep.subr.mxu0 0.0
    %722 = vmatpush1.msra.mxu0 0.0
    %723 = vmatprep.subr.mxu0 0.0
    %724 = vmatpush1.msra.mxu0 0.0
    %725 = vmatprep.mubr.f32.mxu0 0.0
    %726 = vmatmul.mubr.f32.gmra.mrb[0].mxu0 %v659
    %v727 = vpop.f32.mrb[0].mxu0
    %v728 = vadd.f32 %v654, %v727
    %v729 = vpop.f32.mrb[0].mxu0
    %v730 = vadd.f32 %v655, %v729
    %731 = vdwg.mxu0
    %v732 = vmul.f32 %v125, %v728
    %v733 = vmul.f32 %v126, %v730
    %v734 = vtanh.pop %v732
    %v735 = vtanh.pop %v733
    %v736 = vmul.f32 %v125, %v734
    %v737 = vmul.f32 %v126, %v735
    %v738 = vadd.f32 %v736, %v127
    %v739 = vadd.f32 %v737, %v128
    %v740 = vmul.f32 %v738, %v647
    %v741 = vmul.f32 %v738, %v739
    %743 = vrot.lane.b32.xlu0 %v741, 64
    %v744 = vpop.permute.xlu0 %743
    %v746 = vadd.f32 %v740, %v744
    %v747 = vtanh.pop %v746
    %v748 = vmul.f32 %v739, %v747
    %v749 = vsel %vm153, %v652, %v650
    %v750 = vsel %vm154, %v653, %v651
    %752 = vrot.lane.b32.xlu0 %v748, 64
    %v753 = vpop.permute.xlu0 %752
    %v754 = vsel %vm360, %v753, 0
    %756 = vmatprep.subr.mxu0 %v339
    %757 = vmatpush1.msra.mxu0 %v338
    %758 = vmatprep.subr.mxu0 %v341
    %759 = vmatpush1.msra.mxu0 %v340
    %760 = vmatprep.subr.mxu0 %v343
    %761 = vmatpush1.msra.mxu0 %v342
    %762 = vmatprep.subr.mxu0 %v345
    %763 = vmatpush1.msra.mxu0 %v344
    %764 = vmatprep.subr.mxu0 %v347
    %765 = vmatpush1.msra.mxu0 %v346
    %766 = vmatprep.subr.mxu0 %v349
    %767 = vmatpush1.msra.mxu0 %v348
    %768 = vmatprep.subr.mxu0 %v351
    %769 = vmatpush1.msra.mxu0 %v350
    %770 = vmatprep.subr.mxu0 %v353
    %771 = vmatpush1.msra.mxu0 %v352
    %772 = vmatprep.subr.mxu0 0.0
    %773 = vmatpush1.msra.mxu0 0.0
    %774 = vmatprep.subr.mxu0 0.0
    %775 = vmatpush1.msra.mxu0 0.0
    %776 = vmatprep.subr.mxu0 0.0
    %777 = vmatpush1.msra.mxu0 0.0
    %778 = vmatprep.subr.mxu0 0.0
    %779 = vmatpush1.msra.mxu0 0.0
    %780 = vmatprep.subr.mxu0 0.0
    %781 = vmatpush1.msra.mxu0 0.0
    %782 = vmatprep.subr.mxu0 0.0
    %783 = vmatpush1.msra.mxu0 0.0
    %784 = vmatprep.subr.mxu0 0.0
    %785 = vmatpush1.msra.mxu0 0.0
    %786 = vmatprep.subr.mxu0 0.0
    %787 = vmatpush1.msra.mxu0 0.0
    %788 = vmatprep.subr.mxu0 0.0
    %789 = vmatpush1.msra.mxu0 0.0
    %790 = vmatprep.subr.mxu0 0.0
    %791 = vmatpush1.msra.mxu0 0.0
    %792 = vmatprep.subr.mxu0 0.0
    %793 = vmatpush1.msra.mxu0 0.0
    %794 = vmatprep.subr.mxu0 0.0
    %795 = vmatpush1.msra.mxu0 0.0
    %796 = vmatprep.subr.mxu0 0.0
    %797 = vmatpush1.msra.mxu0 0.0
    %798 = vmatprep.subr.mxu0 0.0
    %799 = vmatpush1.msra.mxu0 0.0
    %800 = vmatprep.subr.mxu0 0.0
    %801 = vmatpush1.msra.mxu0 0.0
    %802 = vmatprep.subr.mxu0 0.0
    %803 = vmatpush1.msra.mxu0 0.0
    %804 = vmatprep.subr.mxu0 0.0
    %805 = vmatpush1.msra.mxu0 0.0
    %806 = vmatprep.subr.mxu0 0.0
    %807 = vmatpush1.msra.mxu0 0.0
    %808 = vmatprep.subr.mxu0 0.0
    %809 = vmatpush1.msra.mxu0 0.0
    %810 = vmatprep.subr.mxu0 0.0
    %811 = vmatpush1.msra.mxu0 0.0
    %812 = vmatprep.subr.mxu0 0.0
    %813 = vmatpush1.msra.mxu0 0.0
    %814 = vmatprep.subr.mxu0 0.0
    %815 = vmatpush1.msra.mxu0 0.0
    %816 = vmatprep.subr.mxu0 0.0
    %817 = vmatpush1.msra.mxu0 0.0
    %818 = vmatprep.subr.mxu0 0.0
    %819 = vmatpush1.msra.mxu0 0.0
    %820 = vmatprep.mubr.f32.mxu0 0.0
    %821 = vmatmul.mubr.f32.gmra.mrb[0].mxu0 %v754
    %v822 = vpop.f32.mrb[0].mxu0
    %v823 = vadd.f32 %v749, %v822
    %v824 = vpop.f32.mrb[0].mxu0
    %v825 = vadd.f32 %v750, %v824
    %826 = vdwg.mxu0
    %v827 = vmul.f32 %v125, %v823
    %v828 = vmul.f32 %v126, %v825
    %v829 = vtanh.pop %v827
    %v830 = vtanh.pop %v828
    %v831 = vmul.f32 %v125, %v829
    %v832 = vmul.f32 %v126, %v830
    %v833 = vadd.f32 %v831, %v127
    %v834 = vadd.f32 %v832, %v128
    %v835 = vmul.f32 %v833, %v746
    %v836 = vmul.f32 %v833, %v834
    %838 = vrot.lane.b32.xlu0 %v836, 64
    %v839 = vpop.permute.xlu0 %838
    %v841 = vadd.f32 %v835, %v839
    %v842 = vtanh.pop %v841
    %v843 = vmul.f32 %v834, %v842
    %v844 = vsel %vm153, %v553, %v551
    %v845 = vsel %vm154, %v554, %v552
    %847 = vrot.lane.b32.xlu0 %v843, 64
    %v848 = vpop.permute.xlu0 %847
    %v849 = vsel %vm360, %v848, 0
    %851 = vmatprep.subr.mxu0 %v339
    %852 = vmatpush1.msra.mxu0 %v338
    %853 = vmatprep.subr.mxu0 %v341
    %854 = vmatpush1.msra.mxu0 %v340
    %855 = vmatprep.subr.mxu0 %v343
    %856 = vmatpush1.msra.mxu0 %v342
    %857 = vmatprep.subr.mxu0 %v345
    %858 = vmatpush1.msra.mxu0 %v344
    %859 = vmatprep.subr.mxu0 %v347
    %860 = vmatpush1.msra.mxu0 %v346
    %861 = vmatprep.subr.mxu0 %v349
    %862 = vmatpush1.msra.mxu0 %v348
    %863 = vmatprep.subr.mxu0 %v351
    %864 = vmatpush1.msra.mxu0 %v350
    %865 = vmatprep.subr.mxu0 %v353
    %866 = vmatpush1.msra.mxu0 %v352
    %867 = vmatprep.subr.mxu0 0.0
    %868 = vmatpush1.msra.mxu0 0.0
    %869 = vmatprep.subr.mxu0 0.0
    %870 = vmatpush1.msra.mxu0 0.0
    %871 = vmatprep.subr.mxu0 0.0
    %872 = vmatpush1.msra.mxu0 0.0
    %873 = vmatprep.subr.mxu0 0.0
    %874 = vmatpush1.msra.mxu0 0.0
    %875 = vmatprep.subr.mxu0 0.0
    %876 = vmatpush1.msra.mxu0 0.0
    %877 = vmatprep.subr.mxu0 0.0
    %878 = vmatpush1.msra.mxu0 0.0
    %879 = vmatprep.subr.mxu0 0.0
    %880 = vmatpush1.msra.mxu0 0.0
    %881 = vmatprep.subr.mxu0 0.0
    %882 = vmatpush1.msra.mxu0 0.0
    %883 = vmatprep.subr.mxu0 0.0
    %884 = vmatpush1.msra.mxu0 0.0
    %885 = vmatprep.subr.mxu0 0.0
    %886 = vmatpush1.msra.mxu0 0.0
    %887 = vmatprep.subr.mxu0 0.0
    %888 = vmatpush1.msra.mxu0 0.0
    %889 = vmatprep.subr.mxu0 0.0
    %890 = vmatpush1.msra.mxu0 0.0
    %891 = vmatprep.subr.mxu0 0.0
    %892 = vmatpush1.msra.mxu0 0.0
    %893 = vmatprep.subr.mxu0 0.0
    %894 = vmatpush1.msra.mxu0 0.0
    %895 = vmatprep.subr.mxu0 0.0
    %896 = vmatpush1.msra.mxu0 0.0
    %897 = vmatprep.subr.mxu0 0.0
    %898 = vmatpush1.msra.mxu0 0.0
    %899 = vmatprep.subr.mxu0 0.0
    %900 = vmatpush1.msra.mxu0 0.0
    %901 = vmatprep.subr.mxu0 0.0
    %902 = vmatpush1.msra.mxu0 0.0
    %903 = vmatprep.subr.mxu0 0.0
    %904 = vmatpush1.msra.mxu0 0.0
    %905 = vmatprep.subr.mxu0 0.0
    %906 = vmatpush1.msra.mxu0 0.0
    %907 = vmatprep.subr.mxu0 0.0
    %908 = vmatpush1.msra.mxu0 0.0
    %909 = vmatprep.subr.mxu0 0.0
    %910 = vmatpush1.msra.mxu0 0.0
    %911 = vmatprep.subr.mxu0 0.0
    %912 = vmatpush1.msra.mxu0 0.0
    %913 = vmatprep.subr.mxu0 0.0
    %914 = vmatpush1.msra.mxu0 0.0
    %915 = vmatprep.mubr.f32.mxu0 0.0
    %916 = vmatmul.mubr.f32.gmra.mrb[0].mxu0 %v849
    %v917 = vpop.f32.mrb[0].mxu0
    %v918 = vadd.f32 %v844, %v917
    %v919 = vpop.f32.mrb[0].mxu0
    %v920 = vadd.f32 %v845, %v919
    %921 = vdwg.mxu0
    %v922 = vmul.f32 %v125, %v918
    %v923 = vmul.f32 %v126, %v920
    %v924 = vtanh.pop %v922
    %v925 = vtanh.pop %v923
    %v926 = vmul.f32 %v125, %v924
    %v927 = vmul.f32 %v126, %v925
    %v928 = vadd.f32 %v926, %v127
    %v929 = vadd.f32 %v927, %v128
    %v930 = vmul.f32 %v928, %v841
    %v931 = vmul.f32 %v928, %v929
    %933 = vrot.lane.b32.xlu0 %v931, 64
    %v934 = vpop.permute.xlu0 %933
    %v936 = vadd.f32 %v930, %v934
    %v937 = vtanh.pop %v936
    %v938 = vmul.f32 %v929, %v937
    %v939 = vsel %vm153, %v454, %v452
    %v940 = vsel %vm154, %v455, %v453
    %942 = vrot.lane.b32.xlu0 %v938, 64
    %v943 = vpop.permute.xlu0 %942
    %v944 = vsel %vm360, %v943, 0
    %946 = vmatprep.subr.mxu0 %v339
    %947 = vmatpush1.msra.mxu0 %v338
    %948 = vmatprep.subr.mxu0 %v341
    %949 = vmatpush1.msra.mxu0 %v340
    %950 = vmatprep.subr.mxu0 %v343
    %951 = vmatpush1.msra.mxu0 %v342
    %952 = vmatprep.subr.mxu0 %v345
    %953 = vmatpush1.msra.mxu0 %v344
    %954 = vmatprep.subr.mxu0 %v347
    %955 = vmatpush1.msra.mxu0 %v346
    %956 = vmatprep.subr.mxu0 %v349
    %957 = vmatpush1.msra.mxu0 %v348
    %958 = vmatprep.subr.mxu0 %v351
    %959 = vmatpush1.msra.mxu0 %v350
    %960 = vmatprep.subr.mxu0 %v353
    %961 = vmatpush1.msra.mxu0 %v352
    %962 = vmatprep.subr.mxu0 0.0
    %963 = vmatpush1.msra.mxu0 0.0
    %964 = vmatprep.subr.mxu0 0.0
    %965 = vmatpush1.msra.mxu0 0.0
    %966 = vmatprep.subr.mxu0 0.0
    %967 = vmatpush1.msra.mxu0 0.0
    %968 = vmatprep.subr.mxu0 0.0
    %969 = vmatpush1.msra.mxu0 0.0
    %970 = vmatprep.subr.mxu0 0.0
    %971 = vmatpush1.msra.mxu0 0.0
    %972 = vmatprep.subr.mxu0 0.0
    %973 = vmatpush1.msra.mxu0 0.0
    %974 = vmatprep.subr.mxu0 0.0
    %975 = vmatpush1.msra.mxu0 0.0
    %976 = vmatprep.subr.mxu0 0.0
    %977 = vmatpush1.msra.mxu0 0.0
    %978 = vmatprep.subr.mxu0 0.0
    %979 = vmatpush1.msra.mxu0 0.0
    %980 = vmatprep.subr.mxu0 0.0
    %981 = vmatpush1.msra.mxu0 0.0
    %982 = vmatprep.subr.mxu0 0.0
    %983 = vmatpush1.msra.mxu0 0.0
    %984 = vmatprep.subr.mxu0 0.0
    %985 = vmatpush1.msra.mxu0 0.0
    %986 = vmatprep.subr.mxu0 0.0
    %987 = vmatpush1.msra.mxu0 0.0
    %988 = vmatprep.subr.mxu0 0.0
    %989 = vmatpush1.msra.mxu0 0.0
    %990 = vmatprep.subr.mxu0 0.0
    %991 = vmatpush1.msra.mxu0 0.0
    %992 = vmatprep.subr.mxu0 0.0
    %993 = vmatpush1.msra.mxu0 0.0
    %994 = vmatprep.subr.mxu0 0.0
    %995 = vmatpush1.msra.mxu0 0.0
    %996 = vmatprep.subr.mxu0 0.0
    %997 = vmatpush1.msra.mxu0 0.0
    %998 = vmatprep.subr.mxu0 0.0
    %999 = vmatpush1.msra.mxu0 0.0
    %1000 = vmatprep.subr.mxu0 0.0
    %1001 = vmatpush1.msra.mxu0 0.0
    %1002 = vmatprep.subr.mxu0 0.0
    %1003 = vmatpush1.msra.mxu0 0.0
    %1004 = vmatprep.subr.mxu0 0.0
    %1005 = vmatpush1.msra.mxu0 0.0
    %1006 = vmatprep.subr.mxu0 0.0
    %1007 = vmatpush1.msra.mxu0 0.0
    %1008 = vmatprep.subr.mxu0 0.0
    %1009 = vmatpush1.msra.mxu0 0.0
    %1010 = vmatprep.mubr.f32.mxu0 0.0
    %1011 = vmatmul.mubr.f32.gmra.mrb[0].mxu0 %v944
    %v1012 = vpop.f32.mrb[0].mxu0
    %v1013 = vadd.f32 %v939, %v1012
    %v1014 = vpop.f32.mrb[0].mxu0
    %v1015 = vadd.f32 %v940, %v1014
    %1016 = vdwg.mxu0
    %v1017 = vmul.f32 %v125, %v1013
    %v1018 = vmul.f32 %v126, %v1015
    %v1019 = vtanh.pop %v1017
    %v1020 = vtanh.pop %v1018
    %v1021 = vmul.f32 %v125, %v1019
    %v1022 = vmul.f32 %v126, %v1020
    %v1023 = vadd.f32 %v1021, %v127
    %v1024 = vadd.f32 %v1022, %v128
    %v1025 = vmul.f32 %v1023, %v936
    %v1026 = vmul.f32 %v1023, %v1024
    %1028 = vrot.lane.b32.xlu0 %v1026, 64
    %v1029 = vpop.permute.xlu0 %1028
    %v1031 = vadd.f32 %v1025, %v1029
    %v1032 = vtanh.pop %v1031
    %v1033 = vmul.f32 %v1024, %v1032
    %v1034 = vsel %vm153, %v356, %v354
    %v1035 = vsel %vm154, %v357, %v355
    %1037 = vrot.lane.b32.xlu0 %v1033, 64
    %v1038 = vpop.permute.xlu0 %1037
    %v1039 = vsel %vm360, %v1038, 0
    %1041 = vmatprep.subr.mxu0 %v339
    %1042 = vmatpush1.msra.mxu0 %v338
    %1043 = vmatprep.subr.mxu0 %v341
    %1044 = vmatpush1.msra.mxu0 %v340
    %1045 = vmatprep.subr.mxu0 %v343
    %1046 = vmatpush1.msra.mxu0 %v342
    %1047 = vmatprep.subr.mxu0 %v345
    %1048 = vmatpush1.msra.mxu0 %v344
    %1049 = vmatprep.subr.mxu0 %v347
    %1050 = vmatpush1.msra.mxu0 %v346
    %1051 = vmatprep.subr.mxu0 %v349
    %1052 = vmatpush1.msra.mxu0 %v348
    %1053 = vmatprep.subr.mxu0 %v351
    %1054 = vmatpush1.msra.mxu0 %v350
    %1055 = vmatprep.subr.mxu0 %v353
    %1056 = vmatpush1.msra.mxu0 %v352
    %1057 = vmatprep.subr.mxu0 0.0
    %1058 = vmatpush1.msra.mxu0 0.0
    %1059 = vmatprep.subr.mxu0 0.0
    %1060 = vmatpush1.msra.mxu0 0.0
    %1061 = vmatprep.subr.mxu0 0.0
    %1062 = vmatpush1.msra.mxu0 0.0
    %1063 = vmatprep.subr.mxu0 0.0
    %1064 = vmatpush1.msra.mxu0 0.0
    %1065 = vmatprep.subr.mxu0 0.0
    %1066 = vmatpush1.msra.mxu0 0.0
    %1067 = vmatprep.subr.mxu0 0.0
    %1068 = vmatpush1.msra.mxu0 0.0
    %1069 = vmatprep.subr.mxu0 0.0
    %1070 = vmatpush1.msra.mxu0 0.0
    %1071 = vmatprep.subr.mxu0 0.0
    %1072 = vmatpush1.msra.mxu0 0.0
    %1073 = vmatprep.subr.mxu0 0.0
    %1074 = vmatpush1.msra.mxu0 0.0
    %1075 = vmatprep.subr.mxu0 0.0
    %1076 = vmatpush1.msra.mxu0 0.0
    %1077 = vmatprep.subr.mxu0 0.0
    %1078 = vmatpush1.msra.mxu0 0.0
    %1079 = vmatprep.subr.mxu0 0.0
    %1080 = vmatpush1.msra.mxu0 0.0
    %1081 = vmatprep.subr.mxu0 0.0
    %1082 = vmatpush1.msra.mxu0 0.0
    %1083 = vmatprep.subr.mxu0 0.0
    %1084 = vmatpush1.msra.mxu0 0.0
    %1085 = vmatprep.subr.mxu0 0.0
    %1086 = vmatpush1.msra.mxu0 0.0
    %1087 = vmatprep.subr.mxu0 0.0
    %1088 = vmatpush1.msra.mxu0 0.0
    %1089 = vmatprep.subr.mxu0 0.0
    %1090 = vmatpush1.msra.mxu0 0.0
    %1091 = vmatprep.subr.mxu0 0.0
    %1092 = vmatpush1.msra.mxu0 0.0
    %1093 = vmatprep.subr.mxu0 0.0
    %1094 = vmatpush1.msra.mxu0 0.0
    %1095 = vmatprep.subr.mxu0 0.0
    %1096 = vmatpush1.msra.mxu0 0.0
    %1097 = vmatprep.subr.mxu0 0.0
    %1098 = vmatpush1.msra.mxu0 0.0
    %1099 = vmatprep.subr.mxu0 0.0
    %1100 = vmatpush1.msra.mxu0 0.0
    %1101 = vmatprep.subr.mxu0 0.0
    %1102 = vmatpush1.msra.mxu0 0.0
    %1103 = vmatprep.subr.mxu0 0.0
    %1104 = vmatpush1.msra.mxu0 0.0
    %1105 = vmatprep.mubr.f32.mxu0 0.0
    %1106 = vmatmul.mubr.f32.gmra.mrb[0].mxu0 %v1039
    %v1107 = vpop.f32.mrb[0].mxu0
    %v1108 = vadd.f32 %v1034, %v1107
    %v1109 = vpop.f32.mrb[0].mxu0
    %v1110 = vadd.f32 %v1035, %v1109
    %1111 = vdwg.mxu0
    %v1112 = vmul.f32 %v125, %v1108
    %v1113 = vmul.f32 %v126, %v1110
    %v1114 = vtanh.pop %v1112
    %v1115 = vtanh.pop %v1113
    %v1116 = vmul.f32 %v125, %v1114
    %v1117 = vmul.f32 %v126, %v1115
    %v1118 = vadd.f32 %v1116, %v127
    %v1119 = vadd.f32 %v1117, %v128
    %v1120 = vmul.f32 %v1118, %v1031
    %v1121 = vmul.f32 %v1118, %v1119
    %1123 = vrot.lane.b32.xlu0 %v1121, 64
    %v1124 = vpop.permute.xlu0 %1123
    %v1126 = vadd.f32 %v1120, %v1124
    %v1127 = vtanh.pop %v1126
    %v1128 = vmul.f32 %v1119, %v1127
    %1131 = vrot.lane.b32.xlu0 %v1128, 64
    %v1132 = vpop.permute.xlu0 %1131
    %v1134 = vsel %vm155, %v460, %v1132
    %v1137 = vsel %vm155, %v559, %v1038
    %v1140 = vsel %vm155, %v658, %v943
    %v1143 = vsel %vm155, %v753, %v848
    %v1144 = vsel %vm155, %v848, %v753
    %v1145 = vsel %vm155, %v943, %v658
    %v1146 = vsel %vm155, %v1038, %v559
    %v1147 = vsel %vm155, %v1132, %v460
    %v1148 = vld [vmem:[#allocation8 + $0xd0] sm:$0xff]
    %v1149 = vld [vmem:[#allocation8 + $0xd8] sm:$0xff]
    %v1150 = vld [vmem:[#allocation8 + $0xe0] sm:$0xff]
    %v1151 = vld [vmem:[#allocation8 + $0xe8] sm:$0xff]
    %v1152 = vld [vmem:[#allocation8 + $0xf0] sm:$0xff]
    %v1153 = vld [vmem:[#allocation8 + $0xf8] sm:$0xff]
    %v1154 = vld [vmem:[#allocation8 + $0x100] sm:$0xff]
    %v1155 = vld [vmem:[#allocation8 + $0x108] sm:$0xff]
    %v1156 = vld [vmem:[#allocation8 + $0x110] sm:$0xff]
    %v1157 = vld [vmem:[#allocation8 + $0x118] sm:$0xff]
    %v1158 = vld [vmem:[#allocation8 + $0x120] sm:$0xff]
    %v1159 = vld [vmem:[#allocation8 + $0x128] sm:$0xff]
    %v1160 = vld [vmem:[#allocation8 + $0x130] sm:$0xff]
    %v1161 = vld [vmem:[#allocation8 + $0x138] sm:$0xff]
    %v1162 = vld [vmem:[#allocation8 + $0x140] sm:$0xff]
    %v1163 = vld [vmem:[#allocation8 + $0x148] sm:$0xff]
    %s1164 = scalar_lea.vmem [#allocation8], 464
    %v1165 = vld [vmem:[%s1164] ss:$8 sm:$0x3]
    %v1167 = vlaneseq
    %v1168 = vshrl.u32 %v1167, 7
    %v1169 = vsub.s32 0, %v1168
    %v1170 = vrot.slane %v1165, %v1169
    %v1171 = vlaneseq
    %v1172 = vshrl.u32 %v1171, 7
    %v1173 = vsub.s32 1, %v1172
    %v1174 = vrot.slane %v1165, %v1173
    %v1178 = vsel %vm360, %v1134, 0
    %v1181 = vsel %vm360, %v1137, 0
    %v1184 = vsel %vm360, %v1140, 0
    %v1187 = vsel %vm360, %v1143, 0
    %v1190 = vsel %vm360, %v1144, 0
    %v1193 = vsel %vm360, %v1145, 0
    %v1196 = vsel %vm360, %v1146, 0
    %v1199 = vsel %vm360, %v1147, 0
    %1201 = vmatprep.subr.mxu0 %v1149
    %1202 = vmatpush1.msra.mxu0 %v1148
    %1203 = vmatprep.subr.mxu0 %v1151
    %1204 = vmatpush1.msra.mxu0 %v1150
    %1205 = vmatprep.subr.mxu0 %v1153
    %1206 = vmatpush1.msra.mxu0 %v1152
    %1207 = vmatprep.subr.mxu0 %v1155
    %1208 = vmatpush1.msra.mxu0 %v1154
    %1209 = vmatprep.subr.mxu0 %v1157
    %1210 = vmatpush1.msra.mxu0 %v1156
    %1211 = vmatprep.subr.mxu0 %v1159
    %1212 = vmatpush1.msra.mxu0 %v1158
    %1213 = vmatprep.subr.mxu0 %v1161
    %1214 = vmatpush1.msra.mxu0 %v1160
    %1215 = vmatprep.subr.mxu0 %v1163
    %1216 = vmatpush1.msra.mxu0 %v1162
    %1217 = vmatprep.subr.mxu0 0.0
    %1218 = vmatpush1.msra.mxu0 0.0
    %1219 = vmatprep.subr.mxu0 0.0
    %1220 = vmatpush1.msra.mxu0 0.0
    %1221 = vmatprep.subr.mxu0 0.0
    %1222 = vmatpush1.msra.mxu0 0.0
    %1223 = vmatprep.subr.mxu0 0.0
    %1224 = vmatpush1.msra.mxu0 0.0
    %1225 = vmatprep.subr.mxu0 0.0
    %1226 = vmatpush1.msra.mxu0 0.0
    %1227 = vmatprep.subr.mxu0 0.0
    %1228 = vmatpush1.msra.mxu0 0.0
    %1229 = vmatprep.subr.mxu0 0.0
    %1230 = vmatpush1.msra.mxu0 0.0
    %1231 = vmatprep.subr.mxu0 0.0
    %1232 = vmatpush1.msra.mxu0 0.0
    %1233 = vmatprep.subr.mxu0 0.0
    %1234 = vmatpush1.msra.mxu0 0.0
    %1235 = vmatprep.subr.mxu0 0.0
    %1236 = vmatpush1.msra.mxu0 0.0
    %1237 = vmatprep.subr.mxu0 0.0
    %1238 = vmatpush1.msra.mxu0 0.0
    %1239 = vmatprep.subr.mxu0 0.0
    %1240 = vmatpush1.msra.mxu0 0.0
    %1241 = vmatprep.subr.mxu0 0.0
    %1242 = vmatpush1.msra.mxu0 0.0
    %1243 = vmatprep.subr.mxu0 0.0
    %1244 = vmatpush1.msra.mxu0 0.0
    %1245 = vmatprep.subr.mxu0 0.0
    %1246 = vmatpush1.msra.mxu0 0.0
    %1247 = vmatprep.subr.mxu0 0.0
    %1248 = vmatpush1.msra.mxu0 0.0
    %1249 = vmatprep.subr.mxu0 0.0
    %1250 = vmatpush1.msra.mxu0 0.0
    %1251 = vmatprep.subr.mxu0 0.0
    %1252 = vmatpush1.msra.mxu0 0.0
    %1253 = vmatprep.subr.mxu0 0.0
    %1254 = vmatpush1.msra.mxu0 0.0
    %1255 = vmatprep.subr.mxu0 0.0
    %1256 = vmatpush1.msra.mxu0 0.0
    %1257 = vmatprep.subr.mxu0 0.0
    %1258 = vmatpush1.msra.mxu0 0.0
    %1259 = vmatprep.subr.mxu0 0.0
    %1260 = vmatpush1.msra.mxu0 0.0
    %1261 = vmatprep.subr.mxu0 0.0
    %1262 = vmatpush1.msra.mxu0 0.0
    %1263 = vmatprep.subr.mxu0 0.0
    %1264 = vmatpush1.msra.mxu0 0.0
    %1265 = vmatprep.mubr.f32.mxu0 0.0
    %1266 = vmatmul.mubr.f32.gmra.mrb[0].mxu0 %v1178
    %v1267 = vpop.f32.mrb[0].mxu0
    %v1268 = vadd.f32 %v1170, %v1267
    %v1269 = vpop.f32.mrb[0].mxu0
    %v1270 = vadd.f32 %v1174, %v1269
    %1271 = vmatprep.mubr.f32.mxu0 0.0
    %1272 = vmatmul.mubr.f32.gmra.mrb[0].mxu0 %v1181
    %v1273 = vpop.f32.mrb[0].mxu0
    %v1274 = vadd.f32 %v1170, %v1273
    %v1275 = vpop.f32.mrb[0].mxu0
    %v1276 = vadd.f32 %v1174, %v1275
    %1277 = vmatprep.mubr.f32.mxu0 0.0
    %1278 = vmatmul.mubr.f32.gmra.mrb[0].mxu0 %v1184
    %v1279 = vpop.f32.mrb[0].mxu0
    %v1280 = vadd.f32 %v1170, %v1279
    %v1281 = vpop.f32.mrb[0].mxu0
    %v1282 = vadd.f32 %v1174, %v1281
    %1283 = vmatprep.mubr.f32.mxu0 0.0
    %1284 = vmatmul.mubr.f32.gmra.mrb[0].mxu0 %v1187
    %v1285 = vpop.f32.mrb[0].mxu0
    %v1286 = vadd.f32 %v1170, %v1285
    %v1287 = vpop.f32.mrb[0].mxu0
    %v1288 = vadd.f32 %v1174, %v1287
    %1289 = vmatprep.mubr.f32.mxu0 0.0
    %1290 = vmatmul.mubr.f32.gmra.mrb[0].mxu0 %v1190
    %v1291 = vpop.f32.mrb[0].mxu0
    %v1292 = vadd.f32 %v1170, %v1291
    %v1293 = vpop.f32.mrb[0].mxu0
    %v1294 = vadd.f32 %v1174, %v1293
    %1295 = vmatprep.mubr.f32.mxu0 0.0
    %1296 = vmatmul.mubr.f32.gmra.mrb[0].mxu0 %v1193
    %v1297 = vpop.f32.mrb[0].mxu0
    %v1298 = vadd.f32 %v1170, %v1297
    %v1299 = vpop.f32.mrb[0].mxu0
    %v1300 = vadd.f32 %v1174, %v1299
    %1301 = vmatprep.mubr.f32.mxu0 0.0
    %1302 = vmatmul.mubr.f32.gmra.mrb[0].mxu0 %v1196
    %v1303 = vpop.f32.mrb[0].mxu0
    %v1304 = vadd.f32 %v1170, %v1303
    %v1305 = vpop.f32.mrb[0].mxu0
    %v1306 = vadd.f32 %v1174, %v1305
    %1307 = vmatprep.mubr.f32.mxu0 0.0
    %1308 = vmatmul.mubr.f32.gmra.mrb[0].mxu0 %v1199
    %v1309 = vpop.f32.mrb[0].mxu0
    %v1310 = vadd.f32 %v1170, %v1309
    %v1311 = vpop.f32.mrb[0].mxu0
    %v1312 = vadd.f32 %v1174, %v1311
    %1313 = vdwg.mxu0
    %1314 = vst [vmem:[#allocation3] sm:$0xff] %v1268
    %1315 = vst [vmem:[#allocation3 + $0x8] sm:$0xff] %v1270
    %1316 = vst [vmem:[#allocation3 + $0x10] sm:$0xff] %v1274
    %1317 = vst [vmem:[#allocation3 + $0x18] sm:$0xff] %v1276
    %1318 = vst [vmem:[#allocation3 + $0x20] sm:$0xff] %v1280
    %1319 = vst [vmem:[#allocation3 + $0x28] sm:$0xff] %v1282
    %1320 = vst [vmem:[#allocation3 + $0x30] sm:$0xff] %v1286
    %1321 = vst [vmem:[#allocation3 + $0x38] sm:$0xff] %v1288
    %1322 = vst [vmem:[#allocation3 + $0x40] sm:$0xff] %v1292
    %1323 = vst [vmem:[#allocation3 + $0x48] sm:$0xff] %v1294
    %1324 = vst [vmem:[#allocation3 + $0x50] sm:$0xff] %v1298
    %1325 = vst [vmem:[#allocation3 + $0x58] sm:$0xff] %v1300
    %1326 = vst [vmem:[#allocation3 + $0x60] sm:$0xff] %v1304
    %1327 = vst [vmem:[#allocation3 + $0x68] sm:$0xff] %v1306
    %1328 = vst [vmem:[#allocation3 + $0x70] sm:$0xff] %v1310
    %1329 = vst [vmem:[#allocation3 + $0x78] sm:$0xff] %v1312
    %v1330 = vld [vmem:[#allocation8 + $0x150] sm:$0xff]
    %v1331 = vld [vmem:[#allocation8 + $0x158] sm:$0xff]
    %v1332 = vld [vmem:[#allocation8 + $0x160] sm:$0xff]
    %v1333 = vld [vmem:[#allocation8 + $0x168] sm:$0xff]
    %v1334 = vld [vmem:[#allocation8 + $0x170] sm:$0xff]
    %v1335 = vld [vmem:[#allocation8 + $0x178] sm:$0xff]
    %v1336 = vld [vmem:[#allocation8 + $0x180] sm:$0xff]
    %v1337 = vld [vmem:[#allocation8 + $0x188] sm:$0xff]
    %v1338 = vld [vmem:[#allocation8 + $0x190] sm:$0xff]
    %v1339 = vld [vmem:[#allocation8 + $0x198] sm:$0xff]
    %v1340 = vld [vmem:[#allocation8 + $0x1a0] sm:$0xff]
    %v1341 = vld [vmem:[#allocation8 + $0x1a8] sm:$0xff]
    %v1342 = vld [vmem:[#allocation8 + $0x1b0] sm:$0xff]
    %v1343 = vld [vmem:[#allocation8 + $0x1b8] sm:$0xff]
    %v1344 = vld [vmem:[#allocation8 + $0x1c0] sm:$0xff]
    %v1345 = vld [vmem:[#allocation8 + $0x1c8] sm:$0xff]
    %v1346 = vld [vmem:[#allocation3] sm:$0xff]
    %v1347 = vld [vmem:[#allocation3 + $0x8] sm:$0xff]
    %v1348 = vld [vmem:[#allocation3 + $0x70] sm:$0xff]
    %v1349 = vld [vmem:[#allocation3 + $0x78] sm:$0xff]
    %v1350 = vsel %vm153, %v1346, %v1348
    %v1351 = vsel %vm154, %v1347, %v1349
    %1352 = vmatprep.subr.mxu0 %v1331
    %1353 = vmatpush1.msra.mxu0 %v1330
    %1354 = vmatprep.subr.mxu0 %v1333
    %1355 = vmatpush1.msra.mxu0 %v1332
    %1356 = vmatprep.subr.mxu0 %v1335
    %1357 = vmatpush1.msra.mxu0 %v1334
    %1358 = vmatprep.subr.mxu0 %v1337
    %1359 = vmatpush1.msra.mxu0 %v1336
    %1360 = vmatprep.subr.mxu0 %v1339
    %1361 = vmatpush1.msra.mxu0 %v1338
    %1362 = vmatprep.subr.mxu0 %v1341
    %1363 = vmatpush1.msra.mxu0 %v1340
    %1364 = vmatprep.subr.mxu0 %v1343
    %1365 = vmatpush1.msra.mxu0 %v1342
    %1366 = vmatprep.subr.mxu0 %v1345
    %1367 = vmatpush1.msra.mxu0 %v1344
    %1368 = vmatprep.subr.mxu0 0.0
    %1369 = vmatpush1.msra.mxu0 0.0
    %1370 = vmatprep.subr.mxu0 0.0
    %1371 = vmatpush1.msra.mxu0 0.0
    %1372 = vmatprep.subr.mxu0 0.0
    %1373 = vmatpush1.msra.mxu0 0.0
    %1374 = vmatprep.subr.mxu0 0.0
    %1375 = vmatpush1.msra.mxu0 0.0
    %1376 = vmatprep.subr.mxu0 0.0
    %1377 = vmatpush1.msra.mxu0 0.0
    %1378 = vmatprep.subr.mxu0 0.0
    %1379 = vmatpush1.msra.mxu0 0.0
    %1380 = vmatprep.subr.mxu0 0.0
    %1381 = vmatpush1.msra.mxu0 0.0
    %1382 = vmatprep.subr.mxu0 0.0
    %1383 = vmatpush1.msra.mxu0 0.0
    %1384 = vmatprep.subr.mxu0 0.0
    %1385 = vmatpush1.msra.mxu0 0.0
    %1386 = vmatprep.subr.mxu0 0.0
    %1387 = vmatpush1.msra.mxu0 0.0
    %1388 = vmatprep.subr.mxu0 0.0
    %1389 = vmatpush1.msra.mxu0 0.0
    %1390 = vmatprep.subr.mxu0 0.0
    %1391 = vmatpush1.msra.mxu0 0.0
    %1392 = vmatprep.subr.mxu0 0.0
    %1393 = vmatpush1.msra.mxu0 0.0
    %1394 = vmatprep.subr.mxu0 0.0
    %1395 = vmatpush1.msra.mxu0 0.0
    %1396 = vmatprep.subr.mxu0 0.0
    %1397 = vmatpush1.msra.mxu0 0.0
    %1398 = vmatprep.subr.mxu0 0.0
    %1399 = vmatpush1.msra.mxu0 0.0
    %1400 = vmatprep.subr.mxu0 0.0
    %1401 = vmatpush1.msra.mxu0 0.0
    %1402 = vmatprep.subr.mxu0 0.0
    %1403 = vmatpush1.msra.mxu0 0.0
    %1404 = vmatprep.subr.mxu0 0.0
    %1405 = vmatpush1.msra.mxu0 0.0
    %1406 = vmatprep.subr.mxu0 0.0
    %1407 = vmatpush1.msra.mxu0 0.0
    %1408 = vmatprep.subr.mxu0 0.0
    %1409 = vmatpush1.msra.mxu0 0.0
    %1410 = vmatprep.subr.mxu0 0.0
    %1411 = vmatpush1.msra.mxu0 0.0
    %1412 = vmatprep.subr.mxu0 0.0
    %1413 = vmatpush1.msra.mxu0 0.0
    %1414 = vmatprep.subr.mxu0 0.0
    %1415 = vmatpush1.msra.mxu0 0.0
    %1416 = vmatprep.mubr.f32.mxu0 0.0
    %1417 = vmatmul.mubr.f32.gmra.mrb[0].mxu0 %v362
    %v1418 = vpop.f32.mrb[0].mxu0
    %v1419 = vadd.f32 %v1350, %v1418
    %v1420 = vpop.f32.mrb[0].mxu0
    %v1421 = vadd.f32 %v1351, %v1420
    %1422 = vdwg.mxu0
    %v1423 = vmul.f32 %v125, %v1419
    %v1424 = vmul.f32 %v126, %v1421
    %v1425 = vtanh.pop %v1423
    %v1426 = vtanh.pop %v1424
    %v1427 = vmul.f32 %v125, %v1425
    %v1428 = vmul.f32 %v126, %v1426
    %v1429 = vadd.f32 %v1427, %v127
    %v1430 = vadd.f32 %v1428, %v128
    %v1431 = vmul.f32 %v1429, 0.0
    %v1432 = vmul.f32 %v1429, %v1430
    %1434 = vrot.lane.b32.xlu0 %v1432, 64
    %v1435 = vpop.permute.xlu0 %1434
    %v1437 = vadd.f32 %v1431, %v1435
    %v1438 = vtanh.pop %v1437
    %v1439 = vmul.f32 %v1430, %v1438
    %v1440 = vld [vmem:[#allocation3 + $0x10] sm:$0xff]
    %v1441 = vld [vmem:[#allocation3 + $0x18] sm:$0xff]
    %v1442 = vld [vmem:[#allocation3 + $0x60] sm:$0xff]
    %v1443 = vld [vmem:[#allocation3 + $0x68] sm:$0xff]
    %v1444 = vsel %vm153, %v1440, %v1442
    %v1445 = vsel %vm154, %v1441, %v1443
    %1447 = vrot.lane.b32.xlu0 %v1439, 64
    %v1448 = vpop.permute.xlu0 %1447
    %v1449 = vsel %vm360, %v1448, 0
    %1451 = vmatprep.subr.mxu0 %v1331
    %1452 = vmatpush1.msra.mxu0 %v1330
    %1453 = vmatprep.subr.mxu0 %v1333
    %1454 = vmatpush1.msra.mxu0 %v1332
    %1455 = vmatprep.subr.mxu0 %v1335
    %1456 = vmatpush1.msra.mxu0 %v1334
    %1457 = vmatprep.subr.mxu0 %v1337
    %1458 = vmatpush1.msra.mxu0 %v1336
    %1459 = vmatprep.subr.mxu0 %v1339
    %1460 = vmatpush1.msra.mxu0 %v1338
    %1461 = vmatprep.subr.mxu0 %v1341
    %1462 = vmatpush1.msra.mxu0 %v1340
    %1463 = vmatprep.subr.mxu0 %v1343
    %1464 = vmatpush1.msra.mxu0 %v1342
    %1465 = vmatprep.subr.mxu0 %v1345
    %1466 = vmatpush1.msra.mxu0 %v1344
    %1467 = vmatprep.subr.mxu0 0.0
    %1468 = vmatpush1.msra.mxu0 0.0
    %1469 = vmatprep.subr.mxu0 0.0
    %1470 = vmatpush1.msra.mxu0 0.0
    %1471 = vmatprep.subr.mxu0 0.0
    %1472 = vmatpush1.msra.mxu0 0.0
    %1473 = vmatprep.subr.mxu0 0.0
    %1474 = vmatpush1.msra.mxu0 0.0
    %1475 = vmatprep.subr.mxu0 0.0
    %1476 = vmatpush1.msra.mxu0 0.0
    %1477 = vmatprep.subr.mxu0 0.0
    %1478 = vmatpush1.msra.mxu0 0.0
    %1479 = vmatprep.subr.mxu0 0.0
    %1480 = vmatpush1.msra.mxu0 0.0
    %1481 = vmatprep.subr.mxu0 0.0
    %1482 = vmatpush1.msra.mxu0 0.0
    %1483 = vmatprep.subr.mxu0 0.0
    %1484 = vmatpush1.msra.mxu0 0.0
    %1485 = vmatprep.subr.mxu0 0.0
    %1486 = vmatpush1.msra.mxu0 0.0
    %1487 = vmatprep.subr.mxu0 0.0
    %1488 = vmatpush1.msra.mxu0 0.0
    %1489 = vmatprep.subr.mxu0 0.0
    %1490 = vmatpush1.msra.mxu0 0.0
    %1491 = vmatprep.subr.mxu0 0.0
    %1492 = vmatpush1.msra.mxu0 0.0
    %1493 = vmatprep.subr.mxu0 0.0
    %1494 = vmatpush1.msra.mxu0 0.0
    %1495 = vmatprep.subr.mxu0 0.0
    %1496 = vmatpush1.msra.mxu0 0.0
    %1497 = vmatprep.subr.mxu0 0.0
    %1498 = vmatpush1.msra.mxu0 0.0
    %1499 = vmatprep.subr.mxu0 0.0
    %1500 = vmatpush1.msra.mxu0 0.0
    %1501 = vmatprep.subr.mxu0 0.0
    %1502 = vmatpush1.msra.mxu0 0.0
    %1503 = vmatprep.subr.mxu0 0.0
    %1504 = vmatpush1.msra.mxu0 0.0
    %1505 = vmatprep.subr.mxu0 0.0
    %1506 = vmatpush1.msra.mxu0 0.0
    %1507 = vmatprep.subr.mxu0 0.0
    %1508 = vmatpush1.msra.mxu0 0.0
    %1509 = vmatprep.subr.mxu0 0.0
    %1510 = vmatpush1.msra.mxu0 0.0
    %1511 = vmatprep.subr.mxu0 0.0
    %1512 = vmatpush1.msra.mxu0 0.0
    %1513 = vmatprep.subr.mxu0 0.0
    %1514 = vmatpush1.msra.mxu0 0.0
    %1515 = vmatprep.mubr.f32.mxu0 0.0
    %1516 = vmatmul.mubr.f32.gmra.mrb[0].mxu0 %v1449
    %v1517 = vpop.f32.mrb[0].mxu0
    %v1518 = vadd.f32 %v1444, %v1517
    %v1519 = vpop.f32.mrb[0].mxu0
    %v1520 = vadd.f32 %v1445, %v1519
    %1521 = vdwg.mxu0
    %v1522 = vmul.f32 %v125, %v1518
    %v1523 = vmul.f32 %v126, %v1520
    %v1524 = vtanh.pop %v1522
    %v1525 = vtanh.pop %v1523
    %v1526 = vmul.f32 %v125, %v1524
    %v1527 = vmul.f32 %v126, %v1525
    %v1528 = vadd.f32 %v1526, %v127
    %v1529 = vadd.f32 %v1527, %v128
    %v1530 = vmul.f32 %v1528, %v1437
    %v1531 = vmul.f32 %v1528, %v1529
    %1533 = vrot.lane.b32.xlu0 %v1531, 64
    %v1534 = vpop.permute.xlu0 %1533
    %v1536 = vadd.f32 %v1530, %v1534
    %v1537 = vtanh.pop %v1536
    %v1538 = vmul.f32 %v1529, %v1537
    %v1539 = vld [vmem:[#allocation3 + $0x20] sm:$0xff]
    %v1540 = vld [vmem:[#allocation3 + $0x28] sm:$0xff]
    %v1541 = vld [vmem:[#allocation3 + $0x50] sm:$0xff]
    %v1542 = vld [vmem:[#allocation3 + $0x58] sm:$0xff]
    %v1543 = vsel %vm153, %v1539, %v1541
    %v1544 = vsel %vm154, %v1540, %v1542
    %1546 = vrot.lane.b32.xlu0 %v1538, 64
    %v1547 = vpop.permute.xlu0 %1546
    %v1548 = vsel %vm360, %v1547, 0
    %1550 = vmatprep.subr.mxu0 %v1331
    %1551 = vmatpush1.msra.mxu0 %v1330
    %1552 = vmatprep.subr.mxu0 %v1333
    %1553 = vmatpush1.msra.mxu0 %v1332
    %1554 = vmatprep.subr.mxu0 %v1335
    %1555 = vmatpush1.msra.mxu0 %v1334
    %1556 = vmatprep.subr.mxu0 %v1337
    %1557 = vmatpush1.msra.mxu0 %v1336
    %1558 = vmatprep.subr.mxu0 %v1339
    %1559 = vmatpush1.msra.mxu0 %v1338
    %1560 = vmatprep.subr.mxu0 %v1341
    %1561 = vmatpush1.msra.mxu0 %v1340
    %1562 = vmatprep.subr.mxu0 %v1343
    %1563 = vmatpush1.msra.mxu0 %v1342
    %1564 = vmatprep.subr.mxu0 %v1345
    %1565 = vmatpush1.msra.mxu0 %v1344
    %1566 = vmatprep.subr.mxu0 0.0
    %1567 = vmatpush1.msra.mxu0 0.0
    %1568 = vmatprep.subr.mxu0 0.0
    %1569 = vmatpush1.msra.mxu0 0.0
    %1570 = vmatprep.subr.mxu0 0.0
    %1571 = vmatpush1.msra.mxu0 0.0
    %1572 = vmatprep.subr.mxu0 0.0
    %1573 = vmatpush1.msra.mxu0 0.0
    %1574 = vmatprep.subr.mxu0 0.0
    %1575 = vmatpush1.msra.mxu0 0.0
    %1576 = vmatprep.subr.mxu0 0.0
    %1577 = vmatpush1.msra.mxu0 0.0
    %1578 = vmatprep.subr.mxu0 0.0
    %1579 = vmatpush1.msra.mxu0 0.0
    %1580 = vmatprep.subr.mxu0 0.0
    %1581 = vmatpush1.msra.mxu0 0.0
    %1582 = vmatprep.subr.mxu0 0.0
    %1583 = vmatpush1.msra.mxu0 0.0
    %1584 = vmatprep.subr.mxu0 0.0
    %1585 = vmatpush1.msra.mxu0 0.0
    %1586 = vmatprep.subr.mxu0 0.0
    %1587 = vmatpush1.msra.mxu0 0.0
    %1588 = vmatprep.subr.mxu0 0.0
    %1589 = vmatpush1.msra.mxu0 0.0
    %1590 = vmatprep.subr.mxu0 0.0
    %1591 = vmatpush1.msra.mxu0 0.0
    %1592 = vmatprep.subr.mxu0 0.0
    %1593 = vmatpush1.msra.mxu0 0.0
    %1594 = vmatprep.subr.mxu0 0.0
    %1595 = vmatpush1.msra.mxu0 0.0
    %1596 = vmatprep.subr.mxu0 0.0
    %1597 = vmatpush1.msra.mxu0 0.0
    %1598 = vmatprep.subr.mxu0 0.0
    %1599 = vmatpush1.msra.mxu0 0.0
    %1600 = vmatprep.subr.mxu0 0.0
    %1601 = vmatpush1.msra.mxu0 0.0
    %1602 = vmatprep.subr.mxu0 0.0
    %1603 = vmatpush1.msra.mxu0 0.0
    %1604 = vmatprep.subr.mxu0 0.0
    %1605 = vmatpush1.msra.mxu0 0.0
    %1606 = vmatprep.subr.mxu0 0.0
    %1607 = vmatpush1.msra.mxu0 0.0
    %1608 = vmatprep.subr.mxu0 0.0
    %1609 = vmatpush1.msra.mxu0 0.0
    %1610 = vmatprep.subr.mxu0 0.0
    %1611 = vmatpush1.msra.mxu0 0.0
    %1612 = vmatprep.subr.mxu0 0.0
    %1613 = vmatpush1.msra.mxu0 0.0
    %1614 = vmatprep.mubr.f32.mxu0 0.0
    %1615 = vmatmul.mubr.f32.gmra.mrb[0].mxu0 %v1548
    %v1616 = vpop.f32.mrb[0].mxu0
    %v1617 = vadd.f32 %v1543, %v1616
    %v1618 = vpop.f32.mrb[0].mxu0
    %v1619 = vadd.f32 %v1544, %v1618
    %1620 = vdwg.mxu0
    %v1621 = vmul.f32 %v125, %v1617
    %v1622 = vmul.f32 %v126, %v1619
    %v1623 = vtanh.pop %v1621
    %v1624 = vtanh.pop %v1622
    %v1625 = vmul.f32 %v125, %v1623
    %v1626 = vmul.f32 %v126, %v1624
    %v1627 = vadd.f32 %v1625, %v127
    %v1628 = vadd.f32 %v1626, %v128
    %v1629 = vmul.f32 %v1627, %v1536
    %v1630 = vmul.f32 %v1627, %v1628
    %1632 = vrot.lane.b32.xlu0 %v1630, 64
    %v1633 = vpop.permute.xlu0 %1632
    %v1635 = vadd.f32 %v1629, %v1633
    %v1636 = vtanh.pop %v1635
    %v1637 = vmul.f32 %v1628, %v1636
    %v1638 = vld [vmem:[#allocation3 + $0x30] sm:$0xff]
    %v1639 = vld [vmem:[#allocation3 + $0x38] sm:$0xff]
    %v1640 = vld [vmem:[#allocation3 + $0x40] sm:$0xff]
    %v1641 = vld [vmem:[#allocation3 + $0x48] sm:$0xff]
    %v1642 = vsel %vm153, %v1638, %v1640
    %v1643 = vsel %vm154, %v1639, %v1641
    %1645 = vrot.lane.b32.xlu0 %v1637, 64
    %v1646 = vpop.permute.xlu0 %1645
    %v1647 = vsel %vm360, %v1646, 0
    %1649 = vmatprep.subr.mxu0 %v1331
    %1650 = vmatpush1.msra.mxu0 %v1330
    %1651 = vmatprep.subr.mxu0 %v1333
    %1652 = vmatpush1.msra.mxu0 %v1332
    %1653 = vmatprep.subr.mxu0 %v1335
    %1654 = vmatpush1.msra.mxu0 %v1334
    %1655 = vmatprep.subr.mxu0 %v1337
    %1656 = vmatpush1.msra.mxu0 %v1336
    %1657 = vmatprep.subr.mxu0 %v1339
    %1658 = vmatpush1.msra.mxu0 %v1338
    %1659 = vmatprep.subr.mxu0 %v1341
    %1660 = vmatpush1.msra.mxu0 %v1340
    %1661 = vmatprep.subr.mxu0 %v1343
    %1662 = vmatpush1.msra.mxu0 %v1342
    %1663 = vmatprep.subr.mxu0 %v1345
    %1664 = vmatpush1.msra.mxu0 %v1344
    %1665 = vmatprep.subr.mxu0 0.0
    %1666 = vmatpush1.msra.mxu0 0.0
    %1667 = vmatprep.subr.mxu0 0.0
    %1668 = vmatpush1.msra.mxu0 0.0
    %1669 = vmatprep.subr.mxu0 0.0
    %1670 = vmatpush1.msra.mxu0 0.0
    %1671 = vmatprep.subr.mxu0 0.0
    %1672 = vmatpush1.msra.mxu0 0.0
    %1673 = vmatprep.subr.mxu0 0.0
    %1674 = vmatpush1.msra.mxu0 0.0
    %1675 = vmatprep.subr.mxu0 0.0
    %1676 = vmatpush1.msra.mxu0 0.0
    %1677 = vmatprep.subr.mxu0 0.0
    %1678 = vmatpush1.msra.mxu0 0.0
    %1679 = vmatprep.subr.mxu0 0.0
    %1680 = vmatpush1.msra.mxu0 0.0
    %1681 = vmatprep.subr.mxu0 0.0
    %1682 = vmatpush1.msra.mxu0 0.0
    %1683 = vmatprep.subr.mxu0 0.0
    %1684 = vmatpush1.msra.mxu0 0.0
    %1685 = vmatprep.subr.mxu0 0.0
    %1686 = vmatpush1.msra.mxu0 0.0
    %1687 = vmatprep.subr.mxu0 0.0
    %1688 = vmatpush1.msra.mxu0 0.0
    %1689 = vmatprep.subr.mxu0 0.0
    %1690 = vmatpush1.msra.mxu0 0.0
    %1691 = vmatprep.subr.mxu0 0.0
    %1692 = vmatpush1.msra.mxu0 0.0
    %1693 = vmatprep.subr.mxu0 0.0
    %1694 = vmatpush1.msra.mxu0 0.0
    %1695 = vmatprep.subr.mxu0 0.0
    %1696 = vmatpush1.msra.mxu0 0.0
    %1697 = vmatprep.subr.mxu0 0.0
    %1698 = vmatpush1.msra.mxu0 0.0
    %1699 = vmatprep.subr.mxu0 0.0
    %1700 = vmatpush1.msra.mxu0 0.0
    %1701 = vmatprep.subr.mxu0 0.0
    %1702 = vmatpush1.msra.mxu0 0.0
    %1703 = vmatprep.subr.mxu0 0.0
    %1704 = vmatpush1.msra.mxu0 0.0
    %1705 = vmatprep.subr.mxu0 0.0
    %1706 = vmatpush1.msra.mxu0 0.0
    %1707 = vmatprep.subr.mxu0 0.0
    %1708 = vmatpush1.msra.mxu0 0.0
    %1709 = vmatprep.subr.mxu0 0.0
    %1710 = vmatpush1.msra.mxu0 0.0
    %1711 = vmatprep.subr.mxu0 0.0
    %1712 = vmatpush1.msra.mxu0 0.0
    %1713 = vmatprep.mubr.f32.mxu0 0.0
    %1714 = vmatmul.mubr.f32.gmra.mrb[0].mxu0 %v1647
    %v1715 = vpop.f32.mrb[0].mxu0
    %v1716 = vadd.f32 %v1642, %v1715
    %v1717 = vpop.f32.mrb[0].mxu0
    %v1718 = vadd.f32 %v1643, %v1717
    %1719 = vdwg.mxu0
    %v1720 = vmul.f32 %v125, %v1716
    %v1721 = vmul.f32 %v126, %v1718
    %v1722 = vtanh.pop %v1720
    %v1723 = vtanh.pop %v1721
    %v1724 = vmul.f32 %v125, %v1722
    %v1725 = vmul.f32 %v126, %v1723
    %v1726 = vadd.f32 %v1724, %v127
    %v1727 = vadd.f32 %v1725, %v128
    %v1728 = vmul.f32 %v1726, %v1635
    %v1729 = vmul.f32 %v1726, %v1727
    %1731 = vrot.lane.b32.xlu0 %v1729, 64
    %v1732 = vpop.permute.xlu0 %1731
    %v1734 = vadd.f32 %v1728, %v1732
    %v1735 = vtanh.pop %v1734
    %v1736 = vmul.f32 %v1727, %v1735
    %v1737 = vsel %vm153, %v1640, %v1638
    %v1738 = vsel %vm154, %v1641, %v1639
    %1740 = vrot.lane.b32.xlu0 %v1736, 64
    %v1741 = vpop.permute.xlu0 %1740
    %v1742 = vsel %vm360, %v1741, 0
    %1744 = vmatprep.subr.mxu0 %v1331
    %1745 = vmatpush1.msra.mxu0 %v1330
    %1746 = vmatprep.subr.mxu0 %v1333
    %1747 = vmatpush1.msra.mxu0 %v1332
    %1748 = vmatprep.subr.mxu0 %v1335
    %1749 = vmatpush1.msra.mxu0 %v1334
    %1750 = vmatprep.subr.mxu0 %v1337
    %1751 = vmatpush1.msra.mxu0 %v1336
    %1752 = vmatprep.subr.mxu0 %v1339
    %1753 = vmatpush1.msra.mxu0 %v1338
    %1754 = vmatprep.subr.mxu0 %v1341
    %1755 = vmatpush1.msra.mxu0 %v1340
    %1756 = vmatprep.subr.mxu0 %v1343
    %1757 = vmatpush1.msra.mxu0 %v1342
    %1758 = vmatprep.subr.mxu0 %v1345
    %1759 = vmatpush1.msra.mxu0 %v1344
    %1760 = vmatprep.subr.mxu0 0.0
    %1761 = vmatpush1.msra.mxu0 0.0
    %1762 = vmatprep.subr.mxu0 0.0
    %1763 = vmatpush1.msra.mxu0 0.0
    %1764 = vmatprep.subr.mxu0 0.0
    %1765 = vmatpush1.msra.mxu0 0.0
    %1766 = vmatprep.subr.mxu0 0.0
    %1767 = vmatpush1.msra.mxu0 0.0
    %1768 = vmatprep.subr.mxu0 0.0
    %1769 = vmatpush1.msra.mxu0 0.0
    %1770 = vmatprep.subr.mxu0 0.0
    %1771 = vmatpush1.msra.mxu0 0.0
    %1772 = vmatprep.subr.mxu0 0.0
    %1773 = vmatpush1.msra.mxu0 0.0
    %1774 = vmatprep.subr.mxu0 0.0
    %1775 = vmatpush1.msra.mxu0 0.0
    %1776 = vmatprep.subr.mxu0 0.0
    %1777 = vmatpush1.msra.mxu0 0.0
    %1778 = vmatprep.subr.mxu0 0.0
    %1779 = vmatpush1.msra.mxu0 0.0
    %1780 = vmatprep.subr.mxu0 0.0
    %1781 = vmatpush1.msra.mxu0 0.0
    %1782 = vmatprep.subr.mxu0 0.0
    %1783 = vmatpush1.msra.mxu0 0.0
    %1784 = vmatprep.subr.mxu0 0.0
    %1785 = vmatpush1.msra.mxu0 0.0
    %1786 = vmatprep.subr.mxu0 0.0
    %1787 = vmatpush1.msra.mxu0 0.0
    %1788 = vmatprep.subr.mxu0 0.0
    %1789 = vmatpush1.msra.mxu0 0.0
    %1790 = vmatprep.subr.mxu0 0.0
    %1791 = vmatpush1.msra.mxu0 0.0
    %1792 = vmatprep.subr.mxu0 0.0
    %1793 = vmatpush1.msra.mxu0 0.0
    %1794 = vmatprep.subr.mxu0 0.0
    %1795 = vmatpush1.msra.mxu0 0.0
    %1796 = vmatprep.subr.mxu0 0.0
    %1797 = vmatpush1.msra.mxu0 0.0
    %1798 = vmatprep.subr.mxu0 0.0
    %1799 = vmatpush1.msra.mxu0 0.0
    %1800 = vmatprep.subr.mxu0 0.0
    %1801 = vmatpush1.msra.mxu0 0.0
    %1802 = vmatprep.subr.mxu0 0.0
    %1803 = vmatpush1.msra.mxu0 0.0
    %1804 = vmatprep.subr.mxu0 0.0
    %1805 = vmatpush1.msra.mxu0 0.0
    %1806 = vmatprep.subr.mxu0 0.0
    %1807 = vmatpush1.msra.mxu0 0.0
    %1808 = vmatprep.mubr.f32.mxu0 0.0
    %1809 = vmatmul.mubr.f32.gmra.mrb[0].mxu0 %v1742
    %v1810 = vpop.f32.mrb[0].mxu0
    %v1811 = vadd.f32 %v1737, %v1810
    %v1812 = vpop.f32.mrb[0].mxu0
    %v1813 = vadd.f32 %v1738, %v1812
    %1814 = vdwg.mxu0
    %v1815 = vmul.f32 %v125, %v1811
    %v1816 = vmul.f32 %v126, %v1813
    %v1817 = vtanh.pop %v1815
    %v1818 = vtanh.pop %v1816
    %v1819 = vmul.f32 %v125, %v1817
    %v1820 = vmul.f32 %v126, %v1818
    %v1821 = vadd.f32 %v1819, %v127
    %v1822 = vadd.f32 %v1820, %v128
    %v1823 = vmul.f32 %v1821, %v1734
    %v1824 = vmul.f32 %v1821, %v1822
    %1826 = vrot.lane.b32.xlu0 %v1824, 64
    %v1827 = vpop.permute.xlu0 %1826
    %v1829 = vadd.f32 %v1823, %v1827
    %v1830 = vtanh.pop %v1829
    %v1831 = vmul.f32 %v1822, %v1830
    %v1832 = vsel %vm153, %v1541, %v1539
    %v1833 = vsel %vm154, %v1542, %v1540
    %1835 = vrot.lane.b32.xlu0 %v1831, 64
    %v1836 = vpop.permute.xlu0 %1835
    %v1837 = vsel %vm360, %v1836, 0
    %1839 = vmatprep.subr.mxu0 %v1331
    %1840 = vmatpush1.msra.mxu0 %v1330
    %1841 = vmatprep.subr.mxu0 %v1333
    %1842 = vmatpush1.msra.mxu0 %v1332
    %1843 = vmatprep.subr.mxu0 %v1335
    %1844 = vmatpush1.msra.mxu0 %v1334
    %1845 = vmatprep.subr.mxu0 %v1337
    %1846 = vmatpush1.msra.mxu0 %v1336
    %1847 = vmatprep.subr.mxu0 %v1339
    %1848 = vmatpush1.msra.mxu0 %v1338
    %1849 = vmatprep.subr.mxu0 %v1341
    %1850 = vmatpush1.msra.mxu0 %v1340
    %1851 = vmatprep.subr.mxu0 %v1343
    %1852 = vmatpush1.msra.mxu0 %v1342
    %1853 = vmatprep.subr.mxu0 %v1345
    %1854 = vmatpush1.msra.mxu0 %v1344
    %1855 = vmatprep.subr.mxu0 0.0
    %1856 = vmatpush1.msra.mxu0 0.0
    %1857 = vmatprep.subr.mxu0 0.0
    %1858 = vmatpush1.msra.mxu0 0.0
    %1859 = vmatprep.subr.mxu0 0.0
    %1860 = vmatpush1.msra.mxu0 0.0
    %1861 = vmatprep.subr.mxu0 0.0
    %1862 = vmatpush1.msra.mxu0 0.0
    %1863 = vmatprep.subr.mxu0 0.0
    %1864 = vmatpush1.msra.mxu0 0.0
    %1865 = vmatprep.subr.mxu0 0.0
    %1866 = vmatpush1.msra.mxu0 0.0
    %1867 = vmatprep.subr.mxu0 0.0
    %1868 = vmatpush1.msra.mxu0 0.0
    %1869 = vmatprep.subr.mxu0 0.0
    %1870 = vmatpush1.msra.mxu0 0.0
    %1871 = vmatprep.subr.mxu0 0.0
    %1872 = vmatpush1.msra.mxu0 0.0
    %1873 = vmatprep.subr.mxu0 0.0
    %1874 = vmatpush1.msra.mxu0 0.0
    %1875 = vmatprep.subr.mxu0 0.0
    %1876 = vmatpush1.msra.mxu0 0.0
    %1877 = vmatprep.subr.mxu0 0.0
    %1878 = vmatpush1.msra.mxu0 0.0
    %1879 = vmatprep.subr.mxu0 0.0
    %1880 = vmatpush1.msra.mxu0 0.0
    %1881 = vmatprep.subr.mxu0 0.0
    %1882 = vmatpush1.msra.mxu0 0.0
    %1883 = vmatprep.subr.mxu0 0.0
    %1884 = vmatpush1.msra.mxu0 0.0
    %1885 = vmatprep.subr.mxu0 0.0
    %1886 = vmatpush1.msra.mxu0 0.0
    %1887 = vmatprep.subr.mxu0 0.0
    %1888 = vmatpush1.msra.mxu0 0.0
    %1889 = vmatprep.subr.mxu0 0.0
    %1890 = vmatpush1.msra.mxu0 0.0
    %1891 = vmatprep.subr.mxu0 0.0
    %1892 = vmatpush1.msra.mxu0 0.0
    %1893 = vmatprep.subr.mxu0 0.0
    %1894 = vmatpush1.msra.mxu0 0.0
    %1895 = vmatprep.subr.mxu0 0.0
    %1896 = vmatpush1.msra.mxu0 0.0
    %1897 = vmatprep.subr.mxu0 0.0
    %1898 = vmatpush1.msra.mxu0 0.0
    %1899 = vmatprep.subr.mxu0 0.0
    %1900 = vmatpush1.msra.mxu0 0.0
    %1901 = vmatprep.subr.mxu0 0.0
    %1902 = vmatpush1.msra.mxu0 0.0
    %1903 = vmatprep.mubr.f32.mxu0 0.0
    %1904 = vmatmul.mubr.f32.gmra.mrb[0].mxu0 %v1837
    %v1905 = vpop.f32.mrb[0].mxu0
    %v1906 = vadd.f32 %v1832, %v1905
    %v1907 = vpop.f32.mrb[0].mxu0
    %v1908 = vadd.f32 %v1833, %v1907
    %1909 = vdwg.mxu0
    %v1910 = vmul.f32 %v125, %v1906
    %v1911 = vmul.f32 %v126, %v1908
    %v1912 = vtanh.pop %v1910
    %v1913 = vtanh.pop %v1911
    %v1914 = vmul.f32 %v125, %v1912
    %v1915 = vmul.f32 %v126, %v1913
    %v1916 = vadd.f32 %v1914, %v127
    %v1917 = vadd.f32 %v1915, %v128
    %v1918 = vmul.f32 %v1916, %v1829
    %v1919 = vmul.f32 %v1916, %v1917
    %1921 = vrot.lane.b32.xlu0 %v1919, 64
    %v1922 = vpop.permute.xlu0 %1921
    %v1924 = vadd.f32 %v1918, %v1922
    %v1925 = vtanh.pop %v1924
    %v1926 = vmul.f32 %v1917, %v1925
    %v1927 = vsel %vm153, %v1442, %v1440
    %v1928 = vsel %vm154, %v1443, %v1441
    %1930 = vrot.lane.b32.xlu0 %v1926, 64
    %v1931 = vpop.permute.xlu0 %1930
    %v1932 = vsel %vm360, %v1931, 0
    %1934 = vmatprep.subr.mxu0 %v1331
    %1935 = vmatpush1.msra.mxu0 %v1330
    %1936 = vmatprep.subr.mxu0 %v1333
    %1937 = vmatpush1.msra.mxu0 %v1332
    %1938 = vmatprep.subr.mxu0 %v1335
    %1939 = vmatpush1.msra.mxu0 %v1334
    %1940 = vmatprep.subr.mxu0 %v1337
    %1941 = vmatpush1.msra.mxu0 %v1336
    %1942 = vmatprep.subr.mxu0 %v1339
    %1943 = vmatpush1.msra.mxu0 %v1338
    %1944 = vmatprep.subr.mxu0 %v1341
    %1945 = vmatpush1.msra.mxu0 %v1340
    %1946 = vmatprep.subr.mxu0 %v1343
    %1947 = vmatpush1.msra.mxu0 %v1342
    %1948 = vmatprep.subr.mxu0 %v1345
    %1949 = vmatpush1.msra.mxu0 %v1344
    %1950 = vmatprep.subr.mxu0 0.0
    %1951 = vmatpush1.msra.mxu0 0.0
    %1952 = vmatprep.subr.mxu0 0.0
    %1953 = vmatpush1.msra.mxu0 0.0
    %1954 = vmatprep.subr.mxu0 0.0
    %1955 = vmatpush1.msra.mxu0 0.0
    %1956 = vmatprep.subr.mxu0 0.0
    %1957 = vmatpush1.msra.mxu0 0.0
    %1958 = vmatprep.subr.mxu0 0.0
    %1959 = vmatpush1.msra.mxu0 0.0
    %1960 = vmatprep.subr.mxu0 0.0
    %1961 = vmatpush1.msra.mxu0 0.0
    %1962 = vmatprep.subr.mxu0 0.0
    %1963 = vmatpush1.msra.mxu0 0.0
    %1964 = vmatprep.subr.mxu0 0.0
    %1965 = vmatpush1.msra.mxu0 0.0
    %1966 = vmatprep.subr.mxu0 0.0
    %1967 = vmatpush1.msra.mxu0 0.0
    %1968 = vmatprep.subr.mxu0 0.0
    %1969 = vmatpush1.msra.mxu0 0.0
    %1970 = vmatprep.subr.mxu0 0.0
    %1971 = vmatpush1.msra.mxu0 0.0
    %1972 = vmatprep.subr.mxu0 0.0
    %1973 = vmatpush1.msra.mxu0 0.0
    %1974 = vmatprep.subr.mxu0 0.0
    %1975 = vmatpush1.msra.mxu0 0.0
    %1976 = vmatprep.subr.mxu0 0.0
    %1977 = vmatpush1.msra.mxu0 0.0
    %1978 = vmatprep.subr.mxu0 0.0
    %1979 = vmatpush1.msra.mxu0 0.0
    %1980 = vmatprep.subr.mxu0 0.0
    %1981 = vmatpush1.msra.mxu0 0.0
    %1982 = vmatprep.subr.mxu0 0.0
    %1983 = vmatpush1.msra.mxu0 0.0
    %1984 = vmatprep.subr.mxu0 0.0
    %1985 = vmatpush1.msra.mxu0 0.0
    %1986 = vmatprep.subr.mxu0 0.0
    %1987 = vmatpush1.msra.mxu0 0.0
    %1988 = vmatprep.subr.mxu0 0.0
    %1989 = vmatpush1.msra.mxu0 0.0
    %1990 = vmatprep.subr.mxu0 0.0
    %1991 = vmatpush1.msra.mxu0 0.0
    %1992 = vmatprep.subr.mxu0 0.0
    %1993 = vmatpush1.msra.mxu0 0.0
    %1994 = vmatprep.subr.mxu0 0.0
    %1995 = vmatpush1.msra.mxu0 0.0
    %1996 = vmatprep.subr.mxu0 0.0
    %1997 = vmatpush1.msra.mxu0 0.0
    %1998 = vmatprep.mubr.f32.mxu0 0.0
    %1999 = vmatmul.mubr.f32.gmra.mrb[0].mxu0 %v1932
    %v2000 = vpop.f32.mrb[0].mxu0
    %v2001 = vadd.f32 %v1927, %v2000
    %v2002 = vpop.f32.mrb[0].mxu0
    %v2003 = vadd.f32 %v1928, %v2002
    %2004 = vdwg.mxu0
    %v2005 = vmul.f32 %v125, %v2001
    %v2006 = vmul.f32 %v126, %v2003
    %v2007 = vtanh.pop %v2005
    %v2008 = vtanh.pop %v2006
    %v2009 = vmul.f32 %v125, %v2007
    %v2010 = vmul.f32 %v126, %v2008
    %v2011 = vadd.f32 %v2009, %v127
    %v2012 = vadd.f32 %v2010, %v128
    %v2013 = vmul.f32 %v2011, %v1924
    %v2014 = vmul.f32 %v2011, %v2012
    %2016 = vrot.lane.b32.xlu0 %v2014, 64
    %v2017 = vpop.permute.xlu0 %2016
    %v2019 = vadd.f32 %v2013, %v2017
    %v2020 = vtanh.pop %v2019
    %v2021 = vmul.f32 %v2012, %v2020
    %v2022 = vsel %vm153, %v1348, %v1346
    %v2023 = vsel %vm154, %v1349, %v1347
    %2025 = vrot.lane.b32.xlu0 %v2021, 64
    %v2026 = vpop.permute.xlu0 %2025
    %v2027 = vsel %vm360, %v2026, 0
    %2029 = vmatprep.subr.mxu0 %v1331
    %2030 = vmatpush1.msra.mxu0 %v1330
    %2031 = vmatprep.subr.mxu0 %v1333
    %2032 = vmatpush1.msra.mxu0 %v1332
    %2033 = vmatprep.subr.mxu0 %v1335
    %2034 = vmatpush1.msra.mxu0 %v1334
    %2035 = vmatprep.subr.mxu0 %v1337
    %2036 = vmatpush1.msra.mxu0 %v1336
    %2037 = vmatprep.subr.mxu0 %v1339
    %2038 = vmatpush1.msra.mxu0 %v1338
    %2039 = vmatprep.subr.mxu0 %v1341
    %2040 = vmatpush1.msra.mxu0 %v1340
    %2041 = vmatprep.subr.mxu0 %v1343
    %2042 = vmatpush1.msra.mxu0 %v1342
    %2043 = vmatprep.subr.mxu0 %v1345
    %2044 = vmatpush1.msra.mxu0 %v1344
    %2045 = vmatprep.subr.mxu0 0.0
    %2046 = vmatpush1.msra.mxu0 0.0
    %2047 = vmatprep.subr.mxu0 0.0
    %2048 = vmatpush1.msra.mxu0 0.0
    %2049 = vmatprep.subr.mxu0 0.0
    %2050 = vmatpush1.msra.mxu0 0.0
    %2051 = vmatprep.subr.mxu0 0.0
    %2052 = vmatpush1.msra.mxu0 0.0
    %2053 = vmatprep.subr.mxu0 0.0
    %2054 = vmatpush1.msra.mxu0 0.0
    %2055 = vmatprep.subr.mxu0 0.0
    %2056 = vmatpush1.msra.mxu0 0.0
    %2057 = vmatprep.subr.mxu0 0.0
    %2058 = vmatpush1.msra.mxu0 0.0
    %2059 = vmatprep.subr.mxu0 0.0
    %2060 = vmatpush1.msra.mxu0 0.0
    %2061 = vmatprep.subr.mxu0 0.0
    %2062 = vmatpush1.msra.mxu0 0.0
    %2063 = vmatprep.subr.mxu0 0.0
    %2064 = vmatpush1.msra.mxu0 0.0
    %2065 = vmatprep.subr.mxu0 0.0
    %2066 = vmatpush1.msra.mxu0 0.0
    %2067 = vmatprep.subr.mxu0 0.0
    %2068 = vmatpush1.msra.mxu0 0.0
    %2069 = vmatprep.subr.mxu0 0.0
    %2070 = vmatpush1.msra.mxu0 0.0
    %2071 = vmatprep.subr.mxu0 0.0
    %2072 = vmatpush1.msra.mxu0 0.0
    %2073 = vmatprep.subr.mxu0 0.0
    %2074 = vmatpush1.msra.mxu0 0.0
    %2075 = vmatprep.subr.mxu0 0.0
    %2076 = vmatpush1.msra.mxu0 0.0
    %2077 = vmatprep.subr.mxu0 0.0
    %2078 = vmatpush1.msra.mxu0 0.0
    %2079 = vmatprep.subr.mxu0 0.0
    %2080 = vmatpush1.msra.mxu0 0.0
    %2081 = vmatprep.subr.mxu0 0.0
    %2082 = vmatpush1.msra.mxu0 0.0
    %2083 = vmatprep.subr.mxu0 0.0
    %2084 = vmatpush1.msra.mxu0 0.0
    %2085 = vmatprep.subr.mxu0 0.0
    %2086 = vmatpush1.msra.mxu0 0.0
    %2087 = vmatprep.subr.mxu0 0.0
    %2088 = vmatpush1.msra.mxu0 0.0
    %2089 = vmatprep.subr.mxu0 0.0
    %2090 = vmatpush1.msra.mxu0 0.0
    %2091 = vmatprep.subr.mxu0 0.0
    %2092 = vmatpush1.msra.mxu0 0.0
    %2093 = vmatprep.mubr.f32.mxu0 0.0
    %2094 = vmatmul.mubr.f32.gmra.mrb[0].mxu0 %v2027
    %v2095 = vpop.f32.mrb[0].mxu0
    %v2096 = vadd.f32 %v2022, %v2095
    %v2097 = vpop.f32.mrb[0].mxu0
    %v2098 = vadd.f32 %v2023, %v2097
    %2099 = vdwg.mxu0
    %v2100 = vmul.f32 %v125, %v2096
    %v2101 = vmul.f32 %v126, %v2098
    %v2102 = vtanh.pop %v2100
    %v2103 = vtanh.pop %v2101
    %v2104 = vmul.f32 %v125, %v2102
    %v2105 = vmul.f32 %v126, %v2103
    %v2106 = vadd.f32 %v2104, %v127
    %v2107 = vadd.f32 %v2105, %v128
    %v2108 = vmul.f32 %v2106, %v2019
    %v2109 = vmul.f32 %v2106, %v2107
    %2111 = vrot.lane.b32.xlu0 %v2109, 64
    %v2112 = vpop.permute.xlu0 %2111
    %v2114 = vadd.f32 %v2108, %v2112
    %v2115 = vtanh.pop %v2114
    %v2116 = vmul.f32 %v2107, %v2115
    %2119 = vrot.lane.b32.xlu0 %v2116, 64
    %v2120 = vpop.permute.xlu0 %2119
    %v2122 = vsel %vm155, %v1448, %v2120
    %v2123 = vsel %vm155, %v2120, %v1448
    %2125 = vrot.lane.b32.xlu0 %v2123, 64
    %v2126 = vpop.permute.xlu0 %2125
    %v2128 = vsel %vm360, %v2122, %v2126
    %v2129 = vld [vmem:[#allocation8 + $0x1e0] sm:$0xff]
    %v2130 = vld [vmem:[#allocation8 + $0x1f0] sm:$0xff]
    %v2131 = vld [vmem:[#allocation8 + $0x200] sm:$0xff]
    %v2132 = vld [vmem:[#allocation8 + $0x210] sm:$0xff]
    %v2133 = vld [vmem:[#allocation8 + $0x220] sm:$0xff]
    %v2134 = vld [vmem:[#allocation8 + $0x230] sm:$0xff]
    %v2135 = vld [vmem:[#allocation8 + $0x240] sm:$0xff]
    %v2136 = vld [vmem:[#allocation8 + $0x250] sm:$0xff]
    %v2137 = vld [vmem:[#allocation8 + $0x260] sm:$0xff]
    %v2138 = vld [vmem:[#allocation8 + $0x270] sm:$0xff]
    %v2139 = vld [vmem:[#allocation8 + $0x280] sm:$0xff]
    %v2140 = vld [vmem:[#allocation8 + $0x290] sm:$0xff]
    %v2141 = vld [vmem:[#allocation8 + $0x2a0] sm:$0xff]
    %v2142 = vld [vmem:[#allocation8 + $0x2b0] sm:$0xff]
    %v2143 = vld [vmem:[#allocation8 + $0x2c0] sm:$0xff]
    %v2144 = vld [vmem:[#allocation8 + $0x2d0] sm:$0xff]
    %v2145 = vld [vmem:[#allocation8 + $0x2e0] ss:$0 sm:$0xff]
    %2146 = vmatprep.subr.mxu0 0.0
    %2147 = vmatpush1.msra.mxu0 %v2129
    %2148 = vmatprep.subr.mxu0 0.0
    %2149 = vmatpush1.msra.mxu0 %v2130
    %2150 = vmatprep.subr.mxu0 0.0
    %2151 = vmatpush1.msra.mxu0 %v2131
    %2152 = vmatprep.subr.mxu0 0.0
    %2153 = vmatpush1.msra.mxu0 %v2132
    %2154 = vmatprep.subr.mxu0 0.0
    %2155 = vmatpush1.msra.mxu0 %v2133
    %2156 = vmatprep.subr.mxu0 0.0
    %2157 = vmatpush1.msra.mxu0 %v2134
    %2158 = vmatprep.subr.mxu0 0.0
    %2159 = vmatpush1.msra.mxu0 %v2135
    %2160 = vmatprep.subr.mxu0 0.0
    %2161 = vmatpush1.msra.mxu0 %v2136
    %2162 = vmatprep.subr.mxu0 0.0
    %2163 = vmatpush1.msra.mxu0 %v2137
    %2164 = vmatprep.subr.mxu0 0.0
    %2165 = vmatpush1.msra.mxu0 %v2138
    %2166 = vmatprep.subr.mxu0 0.0
    %2167 = vmatpush1.msra.mxu0 %v2139
    %2168 = vmatprep.subr.mxu0 0.0
    %2169 = vmatpush1.msra.mxu0 %v2140
    %2170 = vmatprep.subr.mxu0 0.0
    %2171 = vmatpush1.msra.mxu0 %v2141
    %2172 = vmatprep.subr.mxu0 0.0
    %2173 = vmatpush1.msra.mxu0 %v2142
    %2174 = vmatprep.subr.mxu0 0.0
    %2175 = vmatpush1.msra.mxu0 %v2143
    %2176 = vmatprep.subr.mxu0 0.0
    %2177 = vmatpush1.msra.mxu0 %v2144
    %2178 = vmatprep.subr.mxu0 0.0
    %2179 = vmatpush1.msra.mxu0 0.0
    %2180 = vmatprep.subr.mxu0 0.0
    %2181 = vmatpush1.msra.mxu0 0.0
    %2182 = vmatprep.subr.mxu0 0.0
    %2183 = vmatpush1.msra.mxu0 0.0
    %2184 = vmatprep.subr.mxu0 0.0
    %2185 = vmatpush1.msra.mxu0 0.0
    %2186 = vmatprep.subr.mxu0 0.0
    %2187 = vmatpush1.msra.mxu0 0.0
    %2188 = vmatprep.subr.mxu0 0.0
    %2189 = vmatpush1.msra.mxu0 0.0
    %2190 = vmatprep.subr.mxu0 0.0
    %2191 = vmatpush1.msra.mxu0 0.0
    %2192 = vmatprep.subr.mxu0 0.0
    %2193 = vmatpush1.msra.mxu0 0.0
    %2194 = vmatprep.subr.mxu0 0.0
    %2195 = vmatpush1.msra.mxu0 0.0
    %2196 = vmatprep.subr.mxu0 0.0
    %2197 = vmatpush1.msra.mxu0 0.0
    %2198 = vmatprep.subr.mxu0 0.0
    %2199 = vmatpush1.msra.mxu0 0.0
    %2200 = vmatprep.subr.mxu0 0.0
    %2201 = vmatpush1.msra.mxu0 0.0
    %2202 = vmatprep.subr.mxu0 0.0
    %2203 = vmatpush1.msra.mxu0 0.0
    %2204 = vmatprep.subr.mxu0 0.0
    %2205 = vmatpush1.msra.mxu0 0.0
    %2206 = vmatprep.subr.mxu0 0.0
    %2207 = vmatpush1.msra.mxu0 0.0
    %2208 = vmatprep.subr.mxu0 0.0
    %2209 = vmatpush1.msra.mxu0 0.0
    %2210 = vmatprep.mubr.f32.mxu0 0.0
    %2211 = vmatmul.mubr.f32.gmra.mrb[0].mxu0 %v2128
    %v2212 = vpop.f32.mrb[0].mxu0
    %v2213 = vadd.f32 %v2145, %v2212
    %v2214 = vpop.f32.mrb[0].mxu0
    %2215 = vdwg.mxu0
    %vm2216 = vcmask 9216
    %2217 = vst.msk [vmem:[#allocation9] sm:$0x3] %vm2216, %v2213
    // Predicated region
    $region22: #{model_forward.1} parent=1 // pred_check
      _
    $region23: #{model_forward.1} parent=1 // pred_check_branch
      %2219 = sbr.rel (0) target = $region25
    $region24: #{model_forward.1} parent=1 // pred_region
      %s2221 = ssub.s32 32, 32
      %2222 = vsyncadd [#allocation6], %s2221
      %s2224 = sshll.u32 [#allocation9], 4
      %s2225 = int_to_ptr.vmem [resolvable:$true] %s2224
      %2227 = dma.vmem_to_hbm [thread:$0]  %s2225, 32, %s3, [#allocation6]
    $region25: #{model_forward.1} parent=1 // pred_fallthru
      _
    // Predicated region
    $region26: #{model_forward.1} parent=1 // pred_check
      _
    $region27: #{model_forward.1} parent=1 // pred_check_branch
      %2229 = sbr.rel (0) target = $region29
    $region28: #{model_forward.1} parent=1 // pred_region
      %2230 = dma.done [#allocation6], 32
    $region29: #{model_forward.1} parent=1 // pred_fallthru
      _
    %2231 = vsyncpa [#allocation5], 1
    %2232 = vsyncpa [#allocation6], 1
    %2233 = vsyncpa [#allocation7], 1

</llo_original>
